<compile_context>
chip_gen: v6e
topology: v6e:2x2x1
jax: 0.10.0
libtpu: 0.0.40
codegen_flags: <defaults>
</compile_context>

<pallas_src>
import functools

import jax
import jax.numpy as jnp
from jax import lax
from jax.experimental import pallas as pl
from jax.experimental.pallas import tpu as pltpu

# ---- module hyperparameters (match the PyTorch source) --------------------
N_EMBD = 384
NUM_HEADS = 6
HEAD_SIZE = N_EMBD // NUM_HEADS      # 64
BLOCK_SIZE = 256                     # max context; we use T <= BLOCK_SIZE


# ---------------------------------------------------------------------------
# Fused kernel (one grid step per batch element):
#   qkv   = x @ Wqkv                       (T, 3C)   one lane-dense matmul,
#                                                    bf16 once (Q pre-scaled)
#   per head h:
#     scores = q_h k_h^T + causal_bias ; wei = softmax(scores)   (f32)
#     head_out_h = wei @ v_h                                     (bf16)
#   y = concat(head_out_*) @ Wp + bp       (T, C)    fused full-K projection
# ---------------------------------------------------------------------------
def _fused_mha_kernel(x_ref, wqkv_ref, wp_ref, bp_ref, o_ref,
                      *, num_heads, head_size):
    T = x_ref.shape[1]
    C = x_ref.shape[2]

    x = x_ref[0]                                              # (T, C) bf16

    # All heads' Q/K/V in one lane-dense matmul (bf16 operands, f32 acc),
    # then a single cast to bf16 so the head loop only touches bf16 data.
    # Q columns were pre-scaled by head_size**-0.5 in the wrapper.
    qkv = jnp.dot(x, wqkv_ref[...],
                  preferred_element_type=jnp.float32
                  ).astype(jnp.bfloat16)                       # (T, 3C) bf16

    # Causal additive bias — computed once per grid step, shared by all heads.
    # Finite (-1e30) so masked rows stay NaN-free; only ever added to f32.
    row = lax.broadcasted_iota(jnp.int32, (T, T), 0)
    col = lax.broadcasted_iota(jnp.int32, (T, T), 1)
    causal_bias = jnp.where(col <= row,
                            jnp.float32(0.0),
                            jnp.float32(-1e30))                # (T, T) f32

    head_outs = []
    for h in range(num_heads):                                 # static unroll (6)
        lo = h * head_size
        hi = lo + head_size
        q = qkv[:, lo:hi]                                      # (T, H) bf16
        k = qkv[:, C + lo:C + hi]                              # (T, H) bf16
        v = qkv[:, 2 * C + lo:2 * C + hi]                      # (T, H) bf16

        # (scaled q) @ k^T, contracting last dims (no materialized transpose).
        scores = lax.dot_general(
            q, k, (((1,), (1,)), ((), ())),
            preferred_element_type=jnp.float32) + causal_bias  # (T, T) f32

        # numerically-stable softmax in f32
        m = jnp.max(scores, axis=-1, keepdims=True)
        p = jnp.exp(scores - m)
        denom = jnp.sum(p, axis=-1, keepdims=True)
        wei = (p * pl.reciprocal(denom, approx=True)).astype(jnp.bfloat16)

        head_outs.append(
            jnp.dot(wei, v,
                    preferred_element_type=jnp.float32).astype(jnp.bfloat16))

    # Concatenate bf16 head outputs directly into the projection matmul —
    # no f32 VMEM scratch round-trip, projection keeps full K=C contraction.
    cat = jnp.concatenate(head_outs, axis=-1)                  # (T, C) bf16
    y = jnp.dot(cat, wp_ref[...],
                preferred_element_type=jnp.float32) + bp_ref[...]
    o_ref[0] = y.astype(o_ref.dtype)


# ---------------------------------------------------------------------------
# Full module forward
# ---------------------------------------------------------------------------
@jax.jit
def multihead_attention_forward(x, params):
    wq, wk, wv, wp, bp = params
    B, T, C = x.shape
    nh, _, H = wq.shape

    # Stack per-head weights lane-dense: (nh, C, H) -> (C, nh*H); fold the
    # attention scale into the Q columns (weight-side constant fold, exact for
    # H=64 since 64**-0.5 == 0.125); then fuse Q|K|V along the output dim.
    scale = jnp.float32(H) ** jnp.float32(-0.5)
    wq_s = (jnp.transpose(wq, (1, 0, 2)) * scale).reshape(C, nh * H)
    wk_s = jnp.transpose(wk, (1, 0, 2)).reshape(C, nh * H)
    wv_s = jnp.transpose(wv, (1, 0, 2)).reshape(C, nh * H)
    wqkv = jnp.concatenate([wq_s, wk_s, wv_s], axis=-1).astype(jnp.bfloat16)

    x_bf = x.astype(jnp.bfloat16)
    wp_bf = wp.astype(jnp.bfloat16)
    bp2 = bp.reshape(1, C).astype(jnp.float32)

    kernel = functools.partial(_fused_mha_kernel, num_heads=nh, head_size=H)

    out = pl.pallas_call(
        kernel,
        out_shape=jax.ShapeDtypeStruct((B, T, C), jnp.float32),
        grid_spec=pltpu.PrefetchScalarGridSpec(
            num_scalar_prefetch=0,
            grid=(B,),
            in_specs=[
                pl.BlockSpec((1, T, C), lambda b: (b, 0, 0)),     # x
                pl.BlockSpec((C, 3 * C), lambda b: (0, 0)),       # Wqkv (const)
                pl.BlockSpec((C, C), lambda b: (0, 0)),           # Wp   (const)
                pl.BlockSpec((1, C), lambda b: (0, 0)),           # bp   (const)
            ],
            out_specs=pl.BlockSpec((1, T, C), lambda b: (b, 0, 0)),
        ),
        compiler_params=pltpu.CompilerParams(
            dimension_semantics=("parallel",),
        ),
    )(x_bf, wqkv, wp_bf, bp2)
    return out


# pure-JAX f32 reference for sanity checking (matches the PyTorch module,
# eval mode / dropout = identity)
def reference_forward(x, params):
    wq, wk, wv, wp, bp = params
    B, T, C = x.shape
    outs = []
    for h in range(NUM_HEADS):
        q = x @ wq[h]
        k = x @ wk[h]
        v = x @ wv[h]
        wei = (q @ jnp.swapaxes(k, -1, -2)) * (HEAD_SIZE ** -0.5)
        mask = jnp.tril(jnp.ones((T, T), dtype=bool))
        wei = jnp.where(mask, wei, -jnp.inf)
        wei = jax.nn.softmax(wei, axis=-1)
        outs.append(wei @ v)
    cat = jnp.concatenate(outs, axis=-1)
    return cat @ wp + bp


def init_params(key):
    ks = jax.random.split(key, 5)
    scale = 0.02
    wq = jax.random.normal(ks[0], (NUM_HEADS, N_EMBD, HEAD_SIZE), jnp.float32) * scale
    wk = jax.random.normal(ks[1], (NUM_HEADS, N_EMBD, HEAD_SIZE), jnp.float32) * scale
    wv = jax.random.normal(ks[2], (NUM_HEADS, N_EMBD, HEAD_SIZE), jnp.float32) * scale
    wp = jax.random.normal(ks[3], (N_EMBD, N_EMBD), jnp.float32) * scale
    bp = jax.random.normal(ks[4], (N_EMBD,), jnp.float32) * scale
    return (wq, wk, wv, wp, bp)


if __name__ == "__main__":
    key = jax.random.PRNGKey(0)
    kx, kp = jax.random.split(key)

    # B=4 so grid=(B,) gives every TensorCore >=2 steps even on 2-TC chips,
    # letting the pipeline hide the constant-weight prologue DMA.
    B, T = 4, 128            # T <= block_size (256)
    x = jax.random.normal(kx, (B, T, N_EMBD), jnp.float32)
    params = init_params(kp)

    y = multihead_attention_forward(x, params)
    y = jax.block_until_ready(y)

    y_ref = reference_forward(x, params)
    assert y.shape == (B, T, N_EMBD)
    # bf16 MXU operands (f32 accumulation) -> compare with a bf16-level tolerance
    assert jnp.allclose(y, y_ref, atol=2e-2, rtol=2e-2), (
        f"mismatch vs reference: max abs err {jnp.max(jnp.abs(y - y_ref))}")

    print("KERNEL_OK")
</pallas_src>

<mosaic_0001>
module attributes {stable_mosaic.version = 11 : i64} {
  func.func @_fused_mha_kernel(%arg0: i32, %arg1: memref<1x128x384xbf16, #tpu.memory_space<vmem>>, %arg2: memref<384x1152xbf16, #tpu.memory_space<vmem>>, %arg3: memref<384x384xbf16, #tpu.memory_space<vmem>>, %arg4: memref<1x384xf32, #tpu.memory_space<vmem>>, %arg5: memref<1x128x384xf32, #tpu.memory_space<vmem>>) attributes {dimension_semantics = [#tpu.dimension_semantics<parallel>], iteration_bounds = array<i64: 4>, scalar_prefetch = 0 : i64, scratch_operands = 0 : i64, tpu.core_type = #tpu.core_type<tc>, window_params = [{transform_indices = @transform_0, window_bounds = array<i64: 1, 128, 384>}, {pipeline_mode = #tpu.pipeline_mode<synchronous>, transform_indices = @transform_1, window_bounds = array<i64: 384, 1152>}, {pipeline_mode = #tpu.pipeline_mode<synchronous>, transform_indices = @transform_2, window_bounds = array<i64: 384, 384>}, {pipeline_mode = #tpu.pipeline_mode<synchronous>, transform_indices = @transform_3, window_bounds = array<i64: 1, 384>}, {transform_indices = @transform_4, window_bounds = array<i64: 1, 128, 384>}]} {
    %c0 = arith.constant 0 : index
    %c0_0 = arith.constant 0 : index
    %c0_1 = arith.constant 0 : index
    %0 = vector.load %arg1[%c0, %c0_0, %c0_1] : memref<1x128x384xbf16, #tpu.memory_space<vmem>>, vector<1x128x384xbf16>
    %1 = vector.shape_cast %0 : vector<1x128x384xbf16> to vector<128x384xbf16>
    %c0_2 = arith.constant 0 : index
    %c0_3 = arith.constant 0 : index
    %2 = vector.load %arg2[%c0_2, %c0_3] : memref<384x1152xbf16, #tpu.memory_space<vmem>>, vector<384x1152xbf16>
    %cst = arith.constant dense<0.000000e+00> : vector<128x1152xf32>
    %3 = tpu.matmul %1, %2, %cst {dimension_numbers = #tpu.dot_dimension_numbers<[1], [0], [0], [1], [0, 0, 1, 1], [], []>} : vector<128x384xbf16>, vector<384x1152xbf16>, vector<128x1152xf32> -> vector<128x1152xf32>
    %4 = arith.truncf %3 : vector<128x1152xf32> to vector<128x1152xbf16>
    %5 = tpu.iota {dimensions = array<i32: 0>} : vector<128x128xi32>
    %6 = tpu.iota {dimensions = array<i32: 1>} : vector<128x128xi32>
    %7 = arith.cmpi sle, %6, %5 : vector<128x128xi32>
    %cst_4 = arith.constant 0.000000e+00 : f32
    %cst_5 = arith.constant -1.000000e+30 : f32
    %8 = vector.broadcast %cst_4 : f32 to vector<128x128xf32>
    %9 = vector.broadcast %cst_5 : f32 to vector<128x128xf32>
    %10 = arith.select %7, %8, %9 : vector<128x128xi1>, vector<128x128xf32>
    %11 = vector.extract_strided_slice %4 {offsets = [0, 0], sizes = [128, 64], strides = [1, 1]} : vector<128x1152xbf16> to vector<128x64xbf16>
    %12 = vector.extract_strided_slice %4 {offsets = [0, 384], sizes = [128, 64], strides = [1, 1]} : vector<128x1152xbf16> to vector<128x64xbf16>
    %13 = vector.extract_strided_slice %4 {offsets = [0, 768], sizes = [128, 64], strides = [1, 1]} : vector<128x1152xbf16> to vector<128x64xbf16>
    %cst_6 = arith.constant dense<0.000000e+00> : vector<128x128xf32>
    %14 = tpu.matmul %11, %12, %cst_6 {dimension_numbers = #tpu.dot_dimension_numbers<[1], [1], [0], [0], [0, 0, 1, 0], [], []>} : vector<128x64xbf16>, vector<128x64xbf16>, vector<128x128xf32> -> vector<128x128xf32>
    %15 = arith.addf %14, %10 : vector<128x128xf32>
    %cst_7 = arith.constant dense<0xFF800000> : vector<128xf32>
    %16 = vector.multi_reduction <maximumf>, %15, %cst_7 [1] : vector<128x128xf32> to vector<128xf32>
    %17 = vector.shape_cast %16 : vector<128xf32> to vector<128x1xf32>
    %18 = vector.broadcast %17 : vector<128x1xf32> to vector<128x128xf32>
    %19 = arith.subf %15, %18 : vector<128x128xf32>
    %20 = math.exp %19 : vector<128x128xf32>
    %cst_8 = arith.constant dense<0.000000e+00> : vector<128xf32>
    %21 = vector.multi_reduction <add>, %20, %cst_8 [1] : vector<128x128xf32> to vector<128xf32>
    %22 = vector.shape_cast %21 : vector<128xf32> to vector<128x1xf32>
    %23 = tpu.reciprocal %22 {approx = true} : vector<128x1xf32> -> vector<128x1xf32>
    %24 = vector.broadcast %23 : vector<128x1xf32> to vector<128x128xf32>
    %25 = arith.mulf %20, %24 : vector<128x128xf32>
    %26 = arith.truncf %25 : vector<128x128xf32> to vector<128x128xbf16>
    %cst_9 = arith.constant dense<0.000000e+00> : vector<128x64xf32>
    %27 = tpu.matmul %26, %13, %cst_9 {dimension_numbers = #tpu.dot_dimension_numbers<[1], [0], [0], [1], [0, 0, 1, 1], [], []>} : vector<128x128xbf16>, vector<128x64xbf16>, vector<128x64xf32> -> vector<128x64xf32>
    %28 = arith.truncf %27 : vector<128x64xf32> to vector<128x64xbf16>
    %29 = vector.extract_strided_slice %4 {offsets = [0, 64], sizes = [128, 64], strides = [1, 1]} : vector<128x1152xbf16> to vector<128x64xbf16>
    %30 = vector.extract_strided_slice %4 {offsets = [0, 448], sizes = [128, 64], strides = [1, 1]} : vector<128x1152xbf16> to vector<128x64xbf16>
    %31 = vector.extract_strided_slice %4 {offsets = [0, 832], sizes = [128, 64], strides = [1, 1]} : vector<128x1152xbf16> to vector<128x64xbf16>
    %cst_10 = arith.constant dense<0.000000e+00> : vector<128x128xf32>
    %32 = tpu.matmul %29, %30, %cst_10 {dimension_numbers = #tpu.dot_dimension_numbers<[1], [1], [0], [0], [0, 0, 1, 0], [], []>} : vector<128x64xbf16>, vector<128x64xbf16>, vector<128x128xf32> -> vector<128x128xf32>
    %33 = arith.addf %32, %10 : vector<128x128xf32>
    %cst_11 = arith.constant dense<0xFF800000> : vector<128xf32>
    %34 = vector.multi_reduction <maximumf>, %33, %cst_11 [1] : vector<128x128xf32> to vector<128xf32>
    %35 = vector.shape_cast %34 : vector<128xf32> to vector<128x1xf32>
    %36 = vector.broadcast %35 : vector<128x1xf32> to vector<128x128xf32>
    %37 = arith.subf %33, %36 : vector<128x128xf32>
    %38 = math.exp %37 : vector<128x128xf32>
    %cst_12 = arith.constant dense<0.000000e+00> : vector<128xf32>
    %39 = vector.multi_reduction <add>, %38, %cst_12 [1] : vector<128x128xf32> to vector<128xf32>
    %40 = vector.shape_cast %39 : vector<128xf32> to vector<128x1xf32>
    %41 = tpu.reciprocal %40 {approx = true} : vector<128x1xf32> -> vector<128x1xf32>
    %42 = vector.broadcast %41 : vector<128x1xf32> to vector<128x128xf32>
    %43 = arith.mulf %38, %42 : vector<128x128xf32>
    %44 = arith.truncf %43 : vector<128x128xf32> to vector<128x128xbf16>
    %cst_13 = arith.constant dense<0.000000e+00> : vector<128x64xf32>
    %45 = tpu.matmul %44, %31, %cst_13 {dimension_numbers = #tpu.dot_dimension_numbers<[1], [0], [0], [1], [0, 0, 1, 1], [], []>} : vector<128x128xbf16>, vector<128x64xbf16>, vector<128x64xf32> -> vector<128x64xf32>
    %46 = arith.truncf %45 : vector<128x64xf32> to vector<128x64xbf16>
    %47 = vector.extract_strided_slice %4 {offsets = [0, 128], sizes = [128, 64], strides = [1, 1]} : vector<128x1152xbf16> to vector<128x64xbf16>
    %48 = vector.extract_strided_slice %4 {offsets = [0, 512], sizes = [128, 64], strides = [1, 1]} : vector<128x1152xbf16> to vector<128x64xbf16>
    %49 = vector.extract_strided_slice %4 {offsets = [0, 896], sizes = [128, 64], strides = [1, 1]} : vector<128x1152xbf16> to vector<128x64xbf16>
    %cst_14 = arith.constant dense<0.000000e+00> : vector<128x128xf32>
    %50 = tpu.matmul %47, %48, %cst_14 {dimension_numbers = #tpu.dot_dimension_numbers<[1], [1], [0], [0], [0, 0, 1, 0], [], []>} : vector<128x64xbf16>, vector<128x64xbf16>, vector<128x128xf32> -> vector<128x128xf32>
    %51 = arith.addf %50, %10 : vector<128x128xf32>
    %cst_15 = arith.constant dense<0xFF800000> : vector<128xf32>
    %52 = vector.multi_reduction <maximumf>, %51, %cst_15 [1] : vector<128x128xf32> to vector<128xf32>
    %53 = vector.shape_cast %52 : vector<128xf32> to vector<128x1xf32>
    %54 = vector.broadcast %53 : vector<128x1xf32> to vector<128x128xf32>
    %55 = arith.subf %51, %54 : vector<128x128xf32>
    %56 = math.exp %55 : vector<128x128xf32>
    %cst_16 = arith.constant dense<0.000000e+00> : vector<128xf32>
    %57 = vector.multi_reduction <add>, %56, %cst_16 [1] : vector<128x128xf32> to vector<128xf32>
    %58 = vector.shape_cast %57 : vector<128xf32> to vector<128x1xf32>
    %59 = tpu.reciprocal %58 {approx = true} : vector<128x1xf32> -> vector<128x1xf32>
    %60 = vector.broadcast %59 : vector<128x1xf32> to vector<128x128xf32>
    %61 = arith.mulf %56, %60 : vector<128x128xf32>
    %62 = arith.truncf %61 : vector<128x128xf32> to vector<128x128xbf16>
    %cst_17 = arith.constant dense<0.000000e+00> : vector<128x64xf32>
    %63 = tpu.matmul %62, %49, %cst_17 {dimension_numbers = #tpu.dot_dimension_numbers<[1], [0], [0], [1], [0, 0, 1, 1], [], []>} : vector<128x128xbf16>, vector<128x64xbf16>, vector<128x64xf32> -> vector<128x64xf32>
    %64 = arith.truncf %63 : vector<128x64xf32> to vector<128x64xbf16>
    %65 = vector.extract_strided_slice %4 {offsets = [0, 192], sizes = [128, 64], strides = [1, 1]} : vector<128x1152xbf16> to vector<128x64xbf16>
    %66 = vector.extract_strided_slice %4 {offsets = [0, 576], sizes = [128, 64], strides = [1, 1]} : vector<128x1152xbf16> to vector<128x64xbf16>
    %67 = vector.extract_strided_slice %4 {offsets = [0, 960], sizes = [128, 64], strides = [1, 1]} : vector<128x1152xbf16> to vector<128x64xbf16>
    %cst_18 = arith.constant dense<0.000000e+00> : vector<128x128xf32>
    %68 = tpu.matmul %65, %66, %cst_18 {dimension_numbers = #tpu.dot_dimension_numbers<[1], [1], [0], [0], [0, 0, 1, 0], [], []>} : vector<128x64xbf16>, vector<128x64xbf16>, vector<128x128xf32> -> vector<128x128xf32>
    %69 = arith.addf %68, %10 : vector<128x128xf32>
    %cst_19 = arith.constant dense<0xFF800000> : vector<128xf32>
    %70 = vector.multi_reduction <maximumf>, %69, %cst_19 [1] : vector<128x128xf32> to vector<128xf32>
    %71 = vector.shape_cast %70 : vector<128xf32> to vector<128x1xf32>
    %72 = vector.broadcast %71 : vector<128x1xf32> to vector<128x128xf32>
    %73 = arith.subf %69, %72 : vector<128x128xf32>
    %74 = math.exp %73 : vector<128x128xf32>
    %cst_20 = arith.constant dense<0.000000e+00> : vector<128xf32>
    %75 = vector.multi_reduction <add>, %74, %cst_20 [1] : vector<128x128xf32> to vector<128xf32>
    %76 = vector.shape_cast %75 : vector<128xf32> to vector<128x1xf32>
    %77 = tpu.reciprocal %76 {approx = true} : vector<128x1xf32> -> vector<128x1xf32>
    %78 = vector.broadcast %77 : vector<128x1xf32> to vector<128x128xf32>
    %79 = arith.mulf %74, %78 : vector<128x128xf32>
    %80 = arith.truncf %79 : vector<128x128xf32> to vector<128x128xbf16>
    %cst_21 = arith.constant dense<0.000000e+00> : vector<128x64xf32>
    %81 = tpu.matmul %80, %67, %cst_21 {dimension_numbers = #tpu.dot_dimension_numbers<[1], [0], [0], [1], [0, 0, 1, 1], [], []>} : vector<128x128xbf16>, vector<128x64xbf16>, vector<128x64xf32> -> vector<128x64xf32>
    %82 = arith.truncf %81 : vector<128x64xf32> to vector<128x64xbf16>
    %83 = vector.extract_strided_slice %4 {offsets = [0, 256], sizes = [128, 64], strides = [1, 1]} : vector<128x1152xbf16> to vector<128x64xbf16>
    %84 = vector.extract_strided_slice %4 {offsets = [0, 640], sizes = [128, 64], strides = [1, 1]} : vector<128x1152xbf16> to vector<128x64xbf16>
    %85 = vector.extract_strided_slice %4 {offsets = [0, 1024], sizes = [128, 64], strides = [1, 1]} : vector<128x1152xbf16> to vector<128x64xbf16>
    %cst_22 = arith.constant dense<0.000000e+00> : vector<128x128xf32>
    %86 = tpu.matmul %83, %84, %cst_22 {dimension_numbers = #tpu.dot_dimension_numbers<[1], [1], [0], [0], [0, 0, 1, 0], [], []>} : vector<128x64xbf16>, vector<128x64xbf16>, vector<128x128xf32> -> vector<128x128xf32>
    %87 = arith.addf %86, %10 : vector<128x128xf32>
    %cst_23 = arith.constant dense<0xFF800000> : vector<128xf32>
    %88 = vector.multi_reduction <maximumf>, %87, %cst_23 [1] : vector<128x128xf32> to vector<128xf32>
    %89 = vector.shape_cast %88 : vector<128xf32> to vector<128x1xf32>
    %90 = vector.broadcast %89 : vector<128x1xf32> to vector<128x128xf32>
    %91 = arith.subf %87, %90 : vector<128x128xf32>
    %92 = math.exp %91 : vector<128x128xf32>
    %cst_24 = arith.constant dense<0.000000e+00> : vector<128xf32>
    %93 = vector.multi_reduction <add>, %92, %cst_24 [1] : vector<128x128xf32> to vector<128xf32>
    %94 = vector.shape_cast %93 : vector<128xf32> to vector<128x1xf32>
    %95 = tpu.reciprocal %94 {approx = true} : vector<128x1xf32> -> vector<128x1xf32>
    %96 = vector.broadcast %95 : vector<128x1xf32> to vector<128x128xf32>
    %97 = arith.mulf %92, %96 : vector<128x128xf32>
    %98 = arith.truncf %97 : vector<128x128xf32> to vector<128x128xbf16>
    %cst_25 = arith.constant dense<0.000000e+00> : vector<128x64xf32>
    %99 = tpu.matmul %98, %85, %cst_25 {dimension_numbers = #tpu.dot_dimension_numbers<[1], [0], [0], [1], [0, 0, 1, 1], [], []>} : vector<128x128xbf16>, vector<128x64xbf16>, vector<128x64xf32> -> vector<128x64xf32>
    %100 = arith.truncf %99 : vector<128x64xf32> to vector<128x64xbf16>
    %101 = vector.extract_strided_slice %4 {offsets = [0, 320], sizes = [128, 64], strides = [1, 1]} : vector<128x1152xbf16> to vector<128x64xbf16>
    %102 = vector.extract_strided_slice %4 {offsets = [0, 704], sizes = [128, 64], strides = [1, 1]} : vector<128x1152xbf16> to vector<128x64xbf16>
    %103 = vector.extract_strided_slice %4 {offsets = [0, 1088], sizes = [128, 64], strides = [1, 1]} : vector<128x1152xbf16> to vector<128x64xbf16>
    %cst_26 = arith.constant dense<0.000000e+00> : vector<128x128xf32>
    %104 = tpu.matmul %101, %102, %cst_26 {dimension_numbers = #tpu.dot_dimension_numbers<[1], [1], [0], [0], [0, 0, 1, 0], [], []>} : vector<128x64xbf16>, vector<128x64xbf16>, vector<128x128xf32> -> vector<128x128xf32>
    %105 = arith.addf %104, %10 : vector<128x128xf32>
    %cst_27 = arith.constant dense<0xFF800000> : vector<128xf32>
    %106 = vector.multi_reduction <maximumf>, %105, %cst_27 [1] : vector<128x128xf32> to vector<128xf32>
    %107 = vector.shape_cast %106 : vector<128xf32> to vector<128x1xf32>
    %108 = vector.broadcast %107 : vector<128x1xf32> to vector<128x128xf32>
    %109 = arith.subf %105, %108 : vector<128x128xf32>
    %110 = math.exp %109 : vector<128x128xf32>
    %cst_28 = arith.constant dense<0.000000e+00> : vector<128xf32>
    %111 = vector.multi_reduction <add>, %110, %cst_28 [1] : vector<128x128xf32> to vector<128xf32>
    %112 = vector.shape_cast %111 : vector<128xf32> to vector<128x1xf32>
    %113 = tpu.reciprocal %112 {approx = true} : vector<128x1xf32> -> vector<128x1xf32>
    %114 = vector.broadcast %113 : vector<128x1xf32> to vector<128x128xf32>
    %115 = arith.mulf %110, %114 : vector<128x128xf32>
    %116 = arith.truncf %115 : vector<128x128xf32> to vector<128x128xbf16>
    %cst_29 = arith.constant dense<0.000000e+00> : vector<128x64xf32>
    %117 = tpu.matmul %116, %103, %cst_29 {dimension_numbers = #tpu.dot_dimension_numbers<[1], [0], [0], [1], [0, 0, 1, 1], [], []>} : vector<128x128xbf16>, vector<128x64xbf16>, vector<128x64xf32> -> vector<128x64xf32>
    %118 = arith.truncf %117 : vector<128x64xf32> to vector<128x64xbf16>
    %119 = tpu.concatenate %28, %46, %64, %82, %100, %118 in 1 : vector<128x64xbf16>, vector<128x64xbf16>, vector<128x64xbf16>, vector<128x64xbf16>, vector<128x64xbf16>, vector<128x64xbf16> -> vector<128x384xbf16>
    %c0_30 = arith.constant 0 : index
    %c0_31 = arith.constant 0 : index
    %120 = vector.load %arg3[%c0_30, %c0_31] : memref<384x384xbf16, #tpu.memory_space<vmem>>, vector<384x384xbf16>
    %cst_32 = arith.constant dense<0.000000e+00> : vector<128x384xf32>
    %121 = tpu.matmul %119, %120, %cst_32 {dimension_numbers = #tpu.dot_dimension_numbers<[1], [0], [0], [1], [0, 0, 1, 1], [], []>} : vector<128x384xbf16>, vector<384x384xbf16>, vector<128x384xf32> -> vector<128x384xf32>
    %c0_33 = arith.constant 0 : index
    %c0_34 = arith.constant 0 : index
    %122 = vector.load %arg4[%c0_33, %c0_34] : memref<1x384xf32, #tpu.memory_space<vmem>>, vector<1x384xf32>
    %123 = vector.broadcast %122 : vector<1x384xf32> to vector<128x384xf32>
    %124 = arith.addf %121, %123 : vector<128x384xf32>
    %c0_35 = arith.constant 0 : index
    %c0_36 = arith.constant 0 : index
    %c0_37 = arith.constant 0 : index
    %125 = vector.load %arg5[%c0_35, %c0_36, %c0_37] : memref<1x128x384xf32, #tpu.memory_space<vmem>>, vector<1x128x384xf32>
    %126 = vector.shape_cast %125 : vector<1x128x384xf32> to vector<128x384xf32>
    %127 = vector.shape_cast %124 : vector<128x384xf32> to vector<1x128x384xf32>
    tpu.vector_store %arg5[%c0_35, %c0_36, %c0_37], %127 {strides = array<i32>} : memref<1x128x384xf32, #tpu.memory_space<vmem>>, vector<1x128x384xf32>,
    return
  }
  func.func @transform_0(%arg0: i32) -> (i32, i32, i32) {
    %c0_i32 = arith.constant 0 : i32
    %c0_i32_0 = arith.constant 0 : i32
    %c0_i32_1 = arith.constant 0 : i32
    return %arg0, %c0_i32, %c0_i32_0 : i32, i32, i32
  }
  func.func @transform_1(%arg0: i32) -> (i32, i32) {
    %c0_i32 = arith.constant 0 : i32
    %c0_i32_0 = arith.constant 0 : i32
    %c0_i32_1 = arith.constant 0 : i32
    return %c0_i32, %c0_i32_0 : i32, i32
  }
  func.func @transform_2(%arg0: i32) -> (i32, i32) {
    %c0_i32 = arith.constant 0 : i32
    %c0_i32_0 = arith.constant 0 : i32
    %c0_i32_1 = arith.constant 0 : i32
    return %c0_i32, %c0_i32_0 : i32, i32
  }
  func.func @transform_3(%arg0: i32) -> (i32, i32) {
    %c0_i32 = arith.constant 0 : i32
    %c0_i32_0 = arith.constant 0 : i32
    %c0_i32_1 = arith.constant 0 : i32
    return %c0_i32, %c0_i32_0 : i32, i32
  }
  func.func @transform_4(%arg0: i32) -> (i32, i32, i32) {
    %c0_i32 = arith.constant 0 : i32
    %c0_i32_0 = arith.constant 0 : i32
    %c0_i32_1 = arith.constant 0 : i32
    return %arg0, %c0_i32, %c0_i32_0 : i32, i32, i32
  }
}

</mosaic_0001>

<llo_original>
// kernel: multihead_attention_forward.1
$region0: #{multihead_attention_forward.1}
  #allocation0 [shape = 'u32[]', space=smem, size = 0x4, offset = 0x4, fixed_abs, tag = 'smem constant byte address 0x4 - core index']
  #allocation1 [shape = 'u32[144,128]{1,0:T(1,128)}', space=vmem, size = 0x12000, scoped, tag = 'internal scratch']
  %s0 = inlined_call_operand.vmem [shape: bf16[4,128,384], index: 0, kind: input, shape index: {}]
  %s1 = inlined_call_operand.vmem [shape: bf16[384,1152], index: 1, kind: input, shape index: {}]
  %s2 = inlined_call_operand.vmem [shape: bf16[384,384], index: 2, kind: input, shape index: {}]
  %s3 = inlined_call_operand.vmem [shape: f32[1,384], index: 3, kind: input, shape index: {}]
  %s4 = inlined_call_operand.hbm [shape: f32[4,128,384], index: 4, kind: output, shape index: {}]
  %s5 = sld [smem:[#allocation0]]
  $region49: #{multihead_attention_forward.1} parent=0
    _
  %s7 = ssub.s32 1, %s5
  %s8 = scalar_select 0, %s7, %s5
  $region1: #{multihead_attention_forward.1} parent=0
    #allocation2 [shape = 'u8[393216]{0}', space=vmem, size = 0x60000, scoped, tag = 'output window, operand 0']
    #allocation3 [shape = 's32[2]{0}', space=sflag, size = 0x8, scoped, tag = 'scoped memory for multihead_attention_forward.1']
    %9 = vsyncpa [#allocation3], 0
    %s10 = scalar_lea.sflag [#allocation3], 1
    %11 = vsyncpa %s10, 0
    loop: start=0, step=1, limit=6
    $region2: #{multihead_attention_forward.1} parent=1 // loop_pre_header
      _
    $region3: #{multihead_attention_forward.1} parent=1 // loop_header
      %s13 = sphi 0, %s17
      %p14 = scmp.ge.s32.totalorder %s13, 6
      %s23 = sphi 0, %s25
      %s26 = sphi 0, %s23
      %s27 = sphi 0, %s26
      %s43 = sphi 0, %s27
      %s47 = sphi 0, %s47
      %s49 = sphi 0, %s47
      %s50 = sphi 0, %s49
      %s64 = sphi 0, %s50
      %s68 = sphi 0, %s68
      %s70 = sphi 0, %s68
      %s71 = sphi 0, %s70
      %s85 = sphi 0, %s71
      %s89 = sphi 0, %s89
      %s91 = sphi 0, %s89
      %s92 = sphi 0, %s91
      %s106 = sphi 0, %s92
      %s112 = sphi 0, %s114
      %s115 = sphi 0, %s112
      %s116 = sphi 0, %s115
      %s132 = sphi 0, %s116
    $region4: #{multihead_attention_forward.1} parent=1 // loop_header_branch
      %16 = sbr.rel (%p14) target = $region8
    $region5: #{multihead_attention_forward.1} parent=1 // loop_body
      %s18 = ssub.s32 %s13, 1
      %s19 = ssub.s32 %s13, 2
      %s20 = sadd.s32 %s13, 1
      %s21 = ssub.s32 %s13, %s20
      %p22 = scmp.eq.s32.totalorder %s21, 0
      %s24 = sadd.s32 %s23, 1
      %s25 = scalar_select %p22, %s23, %s24
      %p28 = pneg %p22
      %p29 = scmp.eq.s32.totalorder %s13, 3
      %p30 = por %p28, %p29
      %p31 = scmp.ne.s32.totalorder %s23, %s26
      %p32 = scmp.eq.s32.totalorder %s13, 0
      %p33 = por %p31, %p32
      %p34 = scmp.ne.s32.totalorder %s23, %s26
      %p35 = scmp.eq.s32.totalorder %s18, 3
      %p36 = por %p34, %p35
      %p37 = scmp.ne.s32.totalorder %s26, %s27
      %p38 = scmp.eq.s32.totalorder %s18, 0
      %p39 = por %p37, %p38
      %p40 = scmp.ne.s32.totalorder %s26, %s27
      %p41 = scmp.eq.s32.totalorder %s19, 3
      %p42 = por %p40, %p41
      %p44 = scmp.ne.s32.totalorder %s27, %s43
      %p45 = scmp.eq.s32.totalorder %s19, 0
      %p46 = por %p44, %p45
      %s48 = sadd.s32 %s47, 1
      %p51 = scmp.eq.s32.totalorder %s13, 3
      %p52 = scmp.ne.s32.totalorder %s47, %s49
      %p53 = scmp.eq.s32.totalorder %s13, 0
      %p54 = por %p52, %p53
      %p55 = scmp.ne.s32.totalorder %s47, %s49
      %p56 = scmp.eq.s32.totalorder %s18, 3
      %p57 = por %p55, %p56
      %p58 = scmp.ne.s32.totalorder %s49, %s50
      %p59 = scmp.eq.s32.totalorder %s18, 0
      %p60 = por %p58, %p59
      %p61 = scmp.ne.s32.totalorder %s49, %s50
      %p62 = scmp.eq.s32.totalorder %s19, 3
      %p63 = por %p61, %p62
      %p65 = scmp.ne.s32.totalorder %s50, %s64
      %p66 = scmp.eq.s32.totalorder %s19, 0
      %p67 = por %p65, %p66
      %s69 = sadd.s32 %s68, 1
      %p72 = scmp.eq.s32.totalorder %s13, 3
      %p73 = scmp.ne.s32.totalorder %s68, %s70
      %p74 = scmp.eq.s32.totalorder %s13, 0
      %p75 = por %p73, %p74
      %p76 = scmp.ne.s32.totalorder %s68, %s70
      %p77 = scmp.eq.s32.totalorder %s18, 3
      %p78 = por %p76, %p77
      %p79 = scmp.ne.s32.totalorder %s70, %s71
      %p80 = scmp.eq.s32.totalorder %s18, 0
      %p81 = por %p79, %p80
      %p82 = scmp.ne.s32.totalorder %s70, %s71
      %p83 = scmp.eq.s32.totalorder %s19, 3
      %p84 = por %p82, %p83
      %p86 = scmp.ne.s32.totalorder %s71, %s85
      %p87 = scmp.eq.s32.totalorder %s19, 0
      %p88 = por %p86, %p87
      %s90 = sadd.s32 %s89, 1
      %p93 = scmp.eq.s32.totalorder %s13, 3
      %p94 = scmp.ne.s32.totalorder %s89, %s91
      %p95 = scmp.eq.s32.totalorder %s13, 0
      %p96 = por %p94, %p95
      %p97 = scmp.ne.s32.totalorder %s89, %s91
      %p98 = scmp.eq.s32.totalorder %s18, 3
      %p99 = por %p97, %p98
      %p100 = scmp.ne.s32.totalorder %s91, %s92
      %p101 = scmp.eq.s32.totalorder %s18, 0
      %p102 = por %p100, %p101
      %p103 = scmp.ne.s32.totalorder %s91, %s92
      %p104 = scmp.eq.s32.totalorder %s19, 3
      %p105 = por %p103, %p104
      %p107 = scmp.ne.s32.totalorder %s92, %s106
      %p108 = scmp.eq.s32.totalorder %s19, 0
      %p109 = por %p107, %p108
      %s110 = ssub.s32 %s13, %s20
      %p111 = scmp.eq.s32.totalorder %s110, 0
      %s113 = sadd.s32 %s112, 1
      %s114 = scalar_select %p111, %s112, %s113
      %p117 = pneg %p111
      %p118 = scmp.eq.s32.totalorder %s13, 3
      %p119 = por %p117, %p118
      %p120 = scmp.ne.s32.totalorder %s112, %s115
      %p121 = scmp.eq.s32.totalorder %s13, 0
      %p122 = por %p120, %p121
      %p123 = scmp.ne.s32.totalorder %s112, %s115
      %p124 = scmp.eq.s32.totalorder %s18, 3
      %p125 = por %p123, %p124
      %p126 = scmp.ne.s32.totalorder %s115, %s116
      %p127 = scmp.eq.s32.totalorder %s18, 0
      %p128 = por %p126, %p127
      %p129 = scmp.ne.s32.totalorder %s115, %s116
      %p130 = scmp.eq.s32.totalorder %s19, 3
      %p131 = por %p129, %p130
      %p133 = scmp.ne.s32.totalorder %s116, %s132
      %p134 = scmp.eq.s32.totalorder %s19, 0
      %p135 = por %p133, %p134
      %p136 = scmp.le.s32.totalorder 1, %s13
      %p137 = scmp.lt.s32.totalorder %s13, 5
      %p138 = pnand %p136, %p137
      %p139 = pneg %p138
      // Predicated region
      $region9: #{multihead_attention_forward.1} parent=5 // pred_check
        _
      $region10: #{multihead_attention_forward.1} parent=5 // pred_check_branch
        %141 = sbr.rel (%p138) target = $region12
      $region11: #{multihead_attention_forward.1} parent=5 // pred_region
        %s142 = ssub.s32 %s13, 1
        // Predicated region
        $region13: #{multihead_attention_forward.1} parent=11 // pred_check
          %p143 = pneg %p60
        $region14: #{multihead_attention_forward.1} parent=11 // pred_check_branch
          %145 = sbr.rel (%p143) target = $region16
        $region15: #{multihead_attention_forward.1} parent=11 // pred_region
          _
        $region16: #{multihead_attention_forward.1} parent=11 // pred_fallthru
          _
        // Predicated region
        $region17: #{multihead_attention_forward.1} parent=11 // pred_check
          %p146 = pneg %p81
        $region18: #{multihead_attention_forward.1} parent=11 // pred_check_branch
          %148 = sbr.rel (%p146) target = $region20
        $region19: #{multihead_attention_forward.1} parent=11 // pred_region
          _
        $region20: #{multihead_attention_forward.1} parent=11 // pred_fallthru
          _
        // Predicated region
        $region21: #{multihead_attention_forward.1} parent=11 // pred_check
          %p149 = pneg %p102
        $region22: #{multihead_attention_forward.1} parent=11 // pred_check_branch
          %151 = sbr.rel (%p149) target = $region24
        $region23: #{multihead_attention_forward.1} parent=11 // pred_region
          _
        $region24: #{multihead_attention_forward.1} parent=11 // pred_fallthru
          _
      $region12: #{multihead_attention_forward.1} parent=5 // pred_fallthru
        _
      %p152 = scmp.lt.s32.totalorder %s13, 4
      // Predicated region
      $region25: #{multihead_attention_forward.1} parent=5 // pred_check
        %p153 = pneg %p152
      $region26: #{multihead_attention_forward.1} parent=5 // pred_check_branch
        %155 = sbr.rel (%p153) target = $region28
      $region27: #{multihead_attention_forward.1} parent=5 // pred_region
        // Predicated region
        $region29: #{multihead_attention_forward.1} parent=27 // pred_check
          %p156 = pneg %p33
        $region30: #{multihead_attention_forward.1} parent=27 // pred_check_branch
          %158 = sbr.rel (%p156) target = $region32
        $region31: #{multihead_attention_forward.1} parent=27 // pred_region
          %p159 = scmp.lt.s32.totalorder %s13, 3
          %s160 = scalar_select %p159, %s13, 3
          %s161 = smul.addr %s160, 48
          %s162 = smul.addr %s161, 4
          %s163 = scalar_lea.vmem %s0, %s162
        $region32: #{multihead_attention_forward.1} parent=27 // pred_fallthru
          _
      $region28: #{multihead_attention_forward.1} parent=5 // pred_fallthru
        _
      %p164 = scmp.le.s32.totalorder 1, %s13
      %p165 = scmp.lt.s32.totalorder %s13, 5
      %p166 = pnand %p164, %p165
      %p167 = pneg %p166
      // Predicated region
      $region33: #{multihead_attention_forward.1} parent=5 // pred_check
        _
      $region34: #{multihead_attention_forward.1} parent=5 // pred_check_branch
        %169 = sbr.rel (%p166) target = $region36
      $region35: #{multihead_attention_forward.1} parent=5 // pred_region
        %s170 = ssub.s32 %s13, 1
        %p171 = scmp.lt.s32.totalorder %s18, 3
        %s172 = scalar_select %p171, %s18, 3
        %s173 = smul.addr %s172, 48
        %s174 = smul.addr %s173, 4
        %s175 = scalar_lea.vmem %s0, %s174
        %p176 = pneg %p39
        %p177 = pneg %p36
        %p178 = pneg %p60
        %p179 = pneg %p57
        %p180 = pneg %p81
        %p181 = pneg %p78
        %p182 = pneg %p102
        %p183 = pneg %p99
        %p184 = pneg %p128
        %p185 = pneg %p125
        %s186 = sand.u32 %s115, 1
        %s187 = scalar_lea.sflag [#allocation3], %s186
        %s188 = sand.u32 %s115, 1
        %s189 = smul.addr %s188, 384
        %s190 = scalar_lea.vmem [#allocation2], %s189
        %p191 = scmp.lt.s32.totalorder %s18, 3
        %s192 = scalar_select %p191, %s18, 3
        %s193 = smul.addr %s192, 48
        %s194 = smul.addr %s193, 4
        %s195 = scalar_lea.vmem %s0, %s194
        %v197 = vld [vmem:[%s195] sm:$0xff]
        %v198 = vld [vmem:[%s195 + $0x8] sm:$0xf]
        %v199 = vld [vmem:[%s195 + $0xc] sm:$0xff]
        %v200 = vld [vmem:[%s195 + $0x14] sm:$0xf]
        %v201 = vld [vmem:[%s195 + $0x18] sm:$0xff]
        %v202 = vld [vmem:[%s195 + $0x20] sm:$0xf]
        %v203 = vld [vmem:[%s195 + $0x24] sm:$0xff]
        %v204 = vld [vmem:[%s195 + $0x2c] sm:$0xf]
        %v205 = vld [vmem:[%s195 + $0x30] sm:$0xff]
        %v206 = vld [vmem:[%s195 + $0x38] sm:$0xf]
        %v207 = vld [vmem:[%s195 + $0x3c] sm:$0xff]
        %v208 = vld [vmem:[%s195 + $0x44] sm:$0xf]
        %v209 = vld [vmem:[%s195 + $0x48] sm:$0xff]
        %v210 = vld [vmem:[%s195 + $0x50] sm:$0xf]
        %v211 = vld [vmem:[%s195 + $0x54] sm:$0xff]
        %v212 = vld [vmem:[%s195 + $0x5c] sm:$0xf]
        %v213 = vld [vmem:[%s195 + $0x60] sm:$0xff]
        %v214 = vld [vmem:[%s195 + $0x68] sm:$0xf]
        %v215 = vld [vmem:[%s195 + $0x6c] sm:$0xff]
        %v216 = vld [vmem:[%s195 + $0x74] sm:$0xf]
        %v217 = vld [vmem:[%s195 + $0x78] sm:$0xff]
        %v218 = vld [vmem:[%s195 + $0x80] sm:$0xf]
        %v219 = vld [vmem:[%s195 + $0x84] sm:$0xff]
        %v220 = vld [vmem:[%s195 + $0x8c] sm:$0xf]
        %v221 = vld [vmem:[%s195 + $0x90] sm:$0xff]
        %v222 = vld [vmem:[%s195 + $0x98] sm:$0xf]
        %v223 = vld [vmem:[%s195 + $0x9c] sm:$0xff]
        %v224 = vld [vmem:[%s195 + $0xa4] sm:$0xf]
        %v225 = vld [vmem:[%s195 + $0xa8] sm:$0xff]
        %v226 = vld [vmem:[%s195 + $0xb0] sm:$0xf]
        %v227 = vld [vmem:[%s195 + $0xb4] sm:$0xff]
        %v228 = vld [vmem:[%s195 + $0xbc] sm:$0xf]
        %v229 = vld [vmem:[%s1] sm:$0xff]
        %v230 = vld [vmem:[%s1 + $0x8] sm:$0xff]
        %v231 = vld [vmem:[%s1 + $0x10] sm:$0xff]
        %v232 = vld [vmem:[%s1 + $0x18] sm:$0xff]
        %v233 = vld [vmem:[%s1 + $0x20] sm:$0xf]
        %v234 = vld [vmem:[%s1 + $0x24] sm:$0xff]
        %v235 = vld [vmem:[%s1 + $0x2c] sm:$0xff]
        %v236 = vld [vmem:[%s1 + $0x34] sm:$0xff]
        %v237 = vld [vmem:[%s1 + $0x3c] sm:$0xff]
        %v238 = vld [vmem:[%s1 + $0x44] sm:$0xf]
        %v239 = vld [vmem:[%s1 + $0x48] sm:$0xff]
        %v240 = vld [vmem:[%s1 + $0x50] sm:$0xff]
        %v241 = vld [vmem:[%s1 + $0x58] sm:$0xff]
        %v242 = vld [vmem:[%s1 + $0x60] sm:$0xff]
        %v243 = vld [vmem:[%s1 + $0x68] sm:$0xf]
        %v244 = vld [vmem:[%s1 + $0x6c] sm:$0xff]
        %v245 = vld [vmem:[%s1 + $0x74] sm:$0xff]
        %v246 = vld [vmem:[%s1 + $0x7c] sm:$0xff]
        %v247 = vld [vmem:[%s1 + $0x84] sm:$0xff]
        %v248 = vld [vmem:[%s1 + $0x8c] sm:$0xf]
        %v249 = vld [vmem:[%s1 + $0x90] sm:$0xff]
        %v250 = vld [vmem:[%s1 + $0x98] sm:$0xff]
        %v251 = vld [vmem:[%s1 + $0xa0] sm:$0xff]
        %v252 = vld [vmem:[%s1 + $0xa8] sm:$0xff]
        %v253 = vld [vmem:[%s1 + $0xb0] sm:$0xf]
        %v254 = vld [vmem:[%s1 + $0xb4] sm:$0xff]
        %v255 = vld [vmem:[%s1 + $0xbc] sm:$0xff]
        %v256 = vld [vmem:[%s1 + $0xc4] sm:$0xff]
        %v257 = vld [vmem:[%s1 + $0xcc] sm:$0xff]
        %v258 = vld [vmem:[%s1 + $0xd4] sm:$0xf]
        %v259 = vld [vmem:[%s1 + $0xd8] sm:$0xff]
        %v260 = vld [vmem:[%s1 + $0xe0] sm:$0xff]
        %v261 = vld [vmem:[%s1 + $0xe8] sm:$0xff]
        %v262 = vld [vmem:[%s1 + $0xf0] sm:$0xff]
        %v263 = vld [vmem:[%s1 + $0xf8] sm:$0xf]
        %v264 = vld [vmem:[%s1 + $0xfc] sm:$0xff]
        %v265 = vld [vmem:[%s1 + $0x104] sm:$0xff]
        %v266 = vld [vmem:[%s1 + $0x10c] sm:$0xff]
        %v267 = vld [vmem:[%s1 + $0x114] sm:$0xff]
        %v268 = vld [vmem:[%s1 + $0x11c] sm:$0xf]
        %v269 = vld [vmem:[%s1 + $0x120] sm:$0xff]
        %v270 = vld [vmem:[%s1 + $0x128] sm:$0xff]
        %v271 = vld [vmem:[%s1 + $0x130] sm:$0xff]
        %v272 = vld [vmem:[%s1 + $0x138] sm:$0xff]
        %v273 = vld [vmem:[%s1 + $0x140] sm:$0xf]
        %v274 = vld [vmem:[%s1 + $0x144] sm:$0xff]
        %v275 = vld [vmem:[%s1 + $0x14c] sm:$0xff]
        %v276 = vld [vmem:[%s1 + $0x154] sm:$0xff]
        %v277 = vld [vmem:[%s1 + $0x15c] sm:$0xff]
        %v278 = vld [vmem:[%s1 + $0x164] sm:$0xf]
        %v279 = vld [vmem:[%s1 + $0x168] sm:$0xff]
        %v280 = vld [vmem:[%s1 + $0x170] sm:$0xff]
        %v281 = vld [vmem:[%s1 + $0x178] sm:$0xff]
        %v282 = vld [vmem:[%s1 + $0x180] sm:$0xff]
        %v283 = vld [vmem:[%s1 + $0x188] sm:$0xf]
        %v284 = vld [vmem:[%s1 + $0x18c] sm:$0xff]
        %v285 = vld [vmem:[%s1 + $0x194] sm:$0xff]
        %v286 = vld [vmem:[%s1 + $0x19c] sm:$0xff]
        %v287 = vld [vmem:[%s1 + $0x1a4] sm:$0xff]
        %v288 = vld [vmem:[%s1 + $0x1ac] sm:$0xf]
        %v289 = vld [vmem:[%s1 + $0x1b0] sm:$0xff]
        %v290 = vld [vmem:[%s1 + $0x1b8] sm:$0xff]
        %v291 = vld [vmem:[%s1 + $0x1c0] sm:$0xff]
        %v292 = vld [vmem:[%s1 + $0x1c8] sm:$0xff]
        %v293 = vld [vmem:[%s1 + $0x1d0] sm:$0xf]
        %v294 = vld [vmem:[%s1 + $0x1d4] sm:$0xff]
        %v295 = vld [vmem:[%s1 + $0x1dc] sm:$0xff]
        %v296 = vld [vmem:[%s1 + $0x1e4] sm:$0xff]
        %v297 = vld [vmem:[%s1 + $0x1ec] sm:$0xff]
        %v298 = vld [vmem:[%s1 + $0x1f4] sm:$0xf]
        %v299 = vld [vmem:[%s1 + $0x1f8] sm:$0xff]
        %v300 = vld [vmem:[%s1 + $0x200] sm:$0xff]
        %v301 = vld [vmem:[%s1 + $0x208] sm:$0xff]
        %v302 = vld [vmem:[%s1 + $0x210] sm:$0xff]
        %v303 = vld [vmem:[%s1 + $0x218] sm:$0xf]
        %v304 = vld [vmem:[%s1 + $0x21c] sm:$0xff]
        %v305 = vld [vmem:[%s1 + $0x224] sm:$0xff]
        %v306 = vld [vmem:[%s1 + $0x22c] sm:$0xff]
        %v307 = vld [vmem:[%s1 + $0x234] sm:$0xff]
        %v308 = vld [vmem:[%s1 + $0x23c] sm:$0xf]
        %v309 = vld [vmem:[%s1 + $0x240] sm:$0xff]
        %v310 = vld [vmem:[%s1 + $0x248] sm:$0xff]
        %v311 = vld [vmem:[%s1 + $0x250] sm:$0xff]
        %v312 = vld [vmem:[%s1 + $0x258] sm:$0xff]
        %v313 = vld [vmem:[%s1 + $0x260] sm:$0xf]
        %v314 = vld [vmem:[%s1 + $0x264] sm:$0xff]
        %v315 = vld [vmem:[%s1 + $0x26c] sm:$0xff]
        %v316 = vld [vmem:[%s1 + $0x274] sm:$0xff]
        %v317 = vld [vmem:[%s1 + $0x27c] sm:$0xff]
        %v318 = vld [vmem:[%s1 + $0x284] sm:$0xf]
        %v319 = vld [vmem:[%s1 + $0x288] sm:$0xff]
        %v320 = vld [vmem:[%s1 + $0x290] sm:$0xff]
        %v321 = vld [vmem:[%s1 + $0x298] sm:$0xff]
        %v322 = vld [vmem:[%s1 + $0x2a0] sm:$0xff]
        %v323 = vld [vmem:[%s1 + $0x2a8] sm:$0xf]
        %v324 = vld [vmem:[%s1 + $0x2ac] sm:$0xff]
        %v325 = vld [vmem:[%s1 + $0x2b4] sm:$0xff]
        %v326 = vld [vmem:[%s1 + $0x2bc] sm:$0xff]
        %v327 = vld [vmem:[%s1 + $0x2c4] sm:$0xff]
        %v328 = vld [vmem:[%s1 + $0x2cc] sm:$0xf]
        %v329 = vld [vmem:[%s1 + $0x2d0] sm:$0xff]
        %v330 = vld [vmem:[%s1 + $0x2d8] sm:$0xff]
        %v331 = vld [vmem:[%s1 + $0x2e0] sm:$0xff]
        %v332 = vld [vmem:[%s1 + $0x2e8] sm:$0xff]
        %v333 = vld [vmem:[%s1 + $0x2f0] sm:$0xf]
        %v334 = vld [vmem:[%s1 + $0x2f4] sm:$0xff]
        %v335 = vld [vmem:[%s1 + $0x2fc] sm:$0xff]
        %v336 = vld [vmem:[%s1 + $0x304] sm:$0xff]
        %v337 = vld [vmem:[%s1 + $0x30c] sm:$0xff]
        %v338 = vld [vmem:[%s1 + $0x314] sm:$0xf]
        %v339 = vld [vmem:[%s1 + $0x318] sm:$0xff]
        %v340 = vld [vmem:[%s1 + $0x320] sm:$0xff]
        %v341 = vld [vmem:[%s1 + $0x328] sm:$0xff]
        %v342 = vld [vmem:[%s1 + $0x330] sm:$0xff]
        %v343 = vld [vmem:[%s1 + $0x338] sm:$0xf]
        %v344 = vld [vmem:[%s1 + $0x33c] sm:$0xff]
        %v345 = vld [vmem:[%s1 + $0x344] sm:$0xff]
        %v346 = vld [vmem:[%s1 + $0x34c] sm:$0xff]
        %v347 = vld [vmem:[%s1 + $0x354] sm:$0xff]
        %v348 = vld [vmem:[%s1 + $0x35c] sm:$0xf]
        %v349 = vld [vmem:[%s1 + $0x360] sm:$0xff]
        %v350 = vld [vmem:[%s1 + $0x368] sm:$0xff]
        %v351 = vld [vmem:[%s1 + $0x370] sm:$0xff]
        %v352 = vld [vmem:[%s1 + $0x378] sm:$0xff]
        %v353 = vld [vmem:[%s1 + $0x380] sm:$0xf]
        %v354 = vld [vmem:[%s1 + $0x384] sm:$0xff]
        %v355 = vld [vmem:[%s1 + $0x38c] sm:$0xff]
        %v356 = vld [vmem:[%s1 + $0x394] sm:$0xff]
        %v357 = vld [vmem:[%s1 + $0x39c] sm:$0xff]
        %v358 = vld [vmem:[%s1 + $0x3a4] sm:$0xf]
        %v359 = vld [vmem:[%s1 + $0x3a8] sm:$0xff]
        %v360 = vld [vmem:[%s1 + $0x3b0] sm:$0xff]
        %v361 = vld [vmem:[%s1 + $0x3b8] sm:$0xff]
        %v362 = vld [vmem:[%s1 + $0x3c0] sm:$0xff]
        %v363 = vld [vmem:[%s1 + $0x3c8] sm:$0xf]
        %v364 = vld [vmem:[%s1 + $0x3cc] sm:$0xff]
        %v365 = vld [vmem:[%s1 + $0x3d4] sm:$0xff]
        %v366 = vld [vmem:[%s1 + $0x3dc] sm:$0xff]
        %v367 = vld [vmem:[%s1 + $0x3e4] sm:$0xff]
        %v368 = vld [vmem:[%s1 + $0x3ec] sm:$0xf]
        %v369 = vld [vmem:[%s1 + $0x3f0] sm:$0xff]
        %v370 = vld [vmem:[%s1 + $0x3f8] sm:$0xff]
        %v371 = vld [vmem:[%s1 + $0x400] sm:$0xff]
        %v372 = vld [vmem:[%s1 + $0x408] sm:$0xff]
        %v373 = vld [vmem:[%s1 + $0x410] sm:$0xf]
        %v374 = vld [vmem:[%s1 + $0x414] sm:$0xff]
        %v375 = vld [vmem:[%s1 + $0x41c] sm:$0xff]
        %v376 = vld [vmem:[%s1 + $0x424] sm:$0xff]
        %v377 = vld [vmem:[%s1 + $0x42c] sm:$0xff]
        %v378 = vld [vmem:[%s1 + $0x434] sm:$0xf]
        %v379 = vld [vmem:[%s1 + $0x438] sm:$0xff]
        %v380 = vld [vmem:[%s1 + $0x440] sm:$0xff]
        %v381 = vld [vmem:[%s1 + $0x448] sm:$0xff]
        %v382 = vld [vmem:[%s1 + $0x450] sm:$0xff]
        %v383 = vld [vmem:[%s1 + $0x458] sm:$0xf]
        %v384 = vld [vmem:[%s1 + $0x45c] sm:$0xff]
        %v385 = vld [vmem:[%s1 + $0x464] sm:$0xff]
        %v386 = vld [vmem:[%s1 + $0x46c] sm:$0xff]
        %v387 = vld [vmem:[%s1 + $0x474] sm:$0xff]
        %v388 = vld [vmem:[%s1 + $0x47c] sm:$0xf]
        %v389 = vld [vmem:[%s1 + $0x480] sm:$0xff]
        %v390 = vld [vmem:[%s1 + $0x488] sm:$0xff]
        %v391 = vld [vmem:[%s1 + $0x490] sm:$0xff]
        %v392 = vld [vmem:[%s1 + $0x498] sm:$0xff]
        %v393 = vld [vmem:[%s1 + $0x4a0] sm:$0xf]
        %v394 = vld [vmem:[%s1 + $0x4a4] sm:$0xff]
        %v395 = vld [vmem:[%s1 + $0x4ac] sm:$0xff]
        %v396 = vld [vmem:[%s1 + $0x4b4] sm:$0xff]
        %v397 = vld [vmem:[%s1 + $0x4bc] sm:$0xff]
        %v398 = vld [vmem:[%s1 + $0x4c4] sm:$0xf]
        %v399 = vld [vmem:[%s1 + $0x4c8] sm:$0xff]
        %v400 = vld [vmem:[%s1 + $0x4d0] sm:$0xff]
        %v401 = vld [vmem:[%s1 + $0x4d8] sm:$0xff]
        %v402 = vld [vmem:[%s1 + $0x4e0] sm:$0xff]
        %v403 = vld [vmem:[%s1 + $0x4e8] sm:$0xf]
        %v404 = vld [vmem:[%s1 + $0x4ec] sm:$0xff]
        %v405 = vld [vmem:[%s1 + $0x4f4] sm:$0xff]
        %v406 = vld [vmem:[%s1 + $0x4fc] sm:$0xff]
        %v407 = vld [vmem:[%s1 + $0x504] sm:$0xff]
        %v408 = vld [vmem:[%s1 + $0x50c] sm:$0xf]
        %v409 = vld [vmem:[%s1 + $0x510] sm:$0xff]
        %v410 = vld [vmem:[%s1 + $0x518] sm:$0xff]
        %v411 = vld [vmem:[%s1 + $0x520] sm:$0xff]
        %v412 = vld [vmem:[%s1 + $0x528] sm:$0xff]
        %v413 = vld [vmem:[%s1 + $0x530] sm:$0xf]
        %v414 = vld [vmem:[%s1 + $0x534] sm:$0xff]
        %v415 = vld [vmem:[%s1 + $0x53c] sm:$0xff]
        %v416 = vld [vmem:[%s1 + $0x544] sm:$0xff]
        %v417 = vld [vmem:[%s1 + $0x54c] sm:$0xff]
        %v418 = vld [vmem:[%s1 + $0x554] sm:$0xf]
        %v419 = vld [vmem:[%s1 + $0x558] sm:$0xff]
        %v420 = vld [vmem:[%s1 + $0x560] sm:$0xff]
        %v421 = vld [vmem:[%s1 + $0x568] sm:$0xff]
        %v422 = vld [vmem:[%s1 + $0x570] sm:$0xff]
        %v423 = vld [vmem:[%s1 + $0x578] sm:$0xf]
        %v424 = vld [vmem:[%s1 + $0x57c] sm:$0xff]
        %v425 = vld [vmem:[%s1 + $0x584] sm:$0xff]
        %v426 = vld [vmem:[%s1 + $0x58c] sm:$0xff]
        %v427 = vld [vmem:[%s1 + $0x594] sm:$0xff]
        %v428 = vld [vmem:[%s1 + $0x59c] sm:$0xf]
        %v429 = vld [vmem:[%s1 + $0x5a0] sm:$0xff]
        %v430 = vld [vmem:[%s1 + $0x5a8] sm:$0xff]
        %v431 = vld [vmem:[%s1 + $0x5b0] sm:$0xff]
        %v432 = vld [vmem:[%s1 + $0x5b8] sm:$0xff]
        %v433 = vld [vmem:[%s1 + $0x5c0] sm:$0xf]
        %v434 = vld [vmem:[%s1 + $0x5c4] sm:$0xff]
        %v435 = vld [vmem:[%s1 + $0x5cc] sm:$0xff]
        %v436 = vld [vmem:[%s1 + $0x5d4] sm:$0xff]
        %v437 = vld [vmem:[%s1 + $0x5dc] sm:$0xff]
        %v438 = vld [vmem:[%s1 + $0x5e4] sm:$0xf]
        %v439 = vld [vmem:[%s1 + $0x5e8] sm:$0xff]
        %v440 = vld [vmem:[%s1 + $0x5f0] sm:$0xff]
        %v441 = vld [vmem:[%s1 + $0x5f8] sm:$0xff]
        %v442 = vld [vmem:[%s1 + $0x600] sm:$0xff]
        %v443 = vld [vmem:[%s1 + $0x608] sm:$0xf]
        %v444 = vld [vmem:[%s1 + $0x60c] sm:$0xff]
        %v445 = vld [vmem:[%s1 + $0x614] sm:$0xff]
        %v446 = vld [vmem:[%s1 + $0x61c] sm:$0xff]
        %v447 = vld [vmem:[%s1 + $0x624] sm:$0xff]
        %v448 = vld [vmem:[%s1 + $0x62c] sm:$0xf]
        %v449 = vld [vmem:[%s1 + $0x630] sm:$0xff]
        %v450 = vld [vmem:[%s1 + $0x638] sm:$0xff]
        %v451 = vld [vmem:[%s1 + $0x640] sm:$0xff]
        %v452 = vld [vmem:[%s1 + $0x648] sm:$0xff]
        %v453 = vld [vmem:[%s1 + $0x650] sm:$0xf]
        %v454 = vld [vmem:[%s1 + $0x654] sm:$0xff]
        %v455 = vld [vmem:[%s1 + $0x65c] sm:$0xff]
        %v456 = vld [vmem:[%s1 + $0x664] sm:$0xff]
        %v457 = vld [vmem:[%s1 + $0x66c] sm:$0xff]
        %v458 = vld [vmem:[%s1 + $0x674] sm:$0xf]
        %v459 = vld [vmem:[%s1 + $0x678] sm:$0xff]
        %v460 = vld [vmem:[%s1 + $0x680] sm:$0xff]
        %v461 = vld [vmem:[%s1 + $0x688] sm:$0xff]
        %v462 = vld [vmem:[%s1 + $0x690] sm:$0xff]
        %v463 = vld [vmem:[%s1 + $0x698] sm:$0xf]
        %v464 = vld [vmem:[%s1 + $0x69c] sm:$0xff]
        %v465 = vld [vmem:[%s1 + $0x6a4] sm:$0xff]
        %v466 = vld [vmem:[%s1 + $0x6ac] sm:$0xff]
        %v467 = vld [vmem:[%s1 + $0x6b4] sm:$0xff]
        %v468 = vld [vmem:[%s1 + $0x6bc] sm:$0xf]
        %v501 = vunpack.c.l.b16 %v197
        %v502 = vunpack.c.h.b16 %v197
        %v503 = vunpack.c.l.b16 %v198
        %v504 = vunpack.c.l.b16 %v199
        %v505 = vunpack.c.h.b16 %v199
        %v506 = vunpack.c.l.b16 %v200
        %v507 = vunpack.c.l.b16 %v201
        %v508 = vunpack.c.h.b16 %v201
        %v509 = vunpack.c.l.b16 %v202
        %v510 = vunpack.c.l.b16 %v203
        %v511 = vunpack.c.h.b16 %v203
        %v512 = vunpack.c.l.b16 %v204
        %v513 = vunpack.c.l.b16 %v205
        %v514 = vunpack.c.h.b16 %v205
        %v515 = vunpack.c.l.b16 %v206
        %v516 = vunpack.c.l.b16 %v207
        %v517 = vunpack.c.h.b16 %v207
        %v518 = vunpack.c.l.b16 %v208
        %v519 = vunpack.c.l.b16 %v209
        %v520 = vunpack.c.h.b16 %v209
        %v521 = vunpack.c.l.b16 %v210
        %v522 = vunpack.c.l.b16 %v211
        %v523 = vunpack.c.h.b16 %v211
        %v524 = vunpack.c.l.b16 %v212
        %v525 = vunpack.c.l.b16 %v213
        %v526 = vunpack.c.h.b16 %v213
        %v527 = vunpack.c.l.b16 %v214
        %v528 = vunpack.c.l.b16 %v215
        %v529 = vunpack.c.h.b16 %v215
        %v530 = vunpack.c.l.b16 %v216
        %v531 = vunpack.c.l.b16 %v217
        %v532 = vunpack.c.h.b16 %v217
        %v533 = vunpack.c.l.b16 %v218
        %v534 = vunpack.c.l.b16 %v219
        %v535 = vunpack.c.h.b16 %v219
        %v536 = vunpack.c.l.b16 %v220
        %v537 = vunpack.c.l.b16 %v221
        %v538 = vunpack.c.h.b16 %v221
        %v539 = vunpack.c.l.b16 %v222
        %v540 = vunpack.c.l.b16 %v223
        %v541 = vunpack.c.h.b16 %v223
        %v542 = vunpack.c.l.b16 %v224
        %v543 = vunpack.c.l.b16 %v225
        %v544 = vunpack.c.h.b16 %v225
        %v545 = vunpack.c.l.b16 %v226
        %v546 = vunpack.c.l.b16 %v227
        %v547 = vunpack.c.h.b16 %v227
        %v548 = vunpack.c.l.b16 %v228
        %v549 = vpack.c.b16 %v504, %v501
        %v550 = vpack.c.b16 %v505, %v502
        %v551 = vpack.c.b16 %v506, %v503
        %v552 = vpack.c.b16 %v510, %v507
        %v553 = vpack.c.b16 %v511, %v508
        %v554 = vpack.c.b16 %v512, %v509
        %v555 = vpack.c.b16 %v516, %v513
        %v556 = vpack.c.b16 %v517, %v514
        %v557 = vpack.c.b16 %v518, %v515
        %v558 = vpack.c.b16 %v522, %v519
        %v559 = vpack.c.b16 %v523, %v520
        %v560 = vpack.c.b16 %v524, %v521
        %v561 = vpack.c.b16 %v528, %v525
        %v562 = vpack.c.b16 %v529, %v526
        %v563 = vpack.c.b16 %v530, %v527
        %v564 = vpack.c.b16 %v534, %v531
        %v565 = vpack.c.b16 %v535, %v532
        %v566 = vpack.c.b16 %v536, %v533
        %v567 = vpack.c.b16 %v540, %v537
        %v568 = vpack.c.b16 %v541, %v538
        %v569 = vpack.c.b16 %v542, %v539
        %v570 = vpack.c.b16 %v546, %v543
        %v571 = vpack.c.b16 %v547, %v544
        %v572 = vpack.c.b16 %v548, %v545
        %v837 = vunpack.c.l.b16 %v229
        %v838 = vunpack.c.h.b16 %v229
        %v839 = vunpack.c.l.b16 %v230
        %v840 = vunpack.c.h.b16 %v230
        %v841 = vunpack.c.l.b16 %v231
        %v842 = vunpack.c.h.b16 %v231
        %v843 = vunpack.c.l.b16 %v232
        %v844 = vunpack.c.h.b16 %v232
        %v845 = vunpack.c.l.b16 %v233
        %v846 = vunpack.c.l.b16 %v234
        %v847 = vunpack.c.h.b16 %v234
        %v848 = vunpack.c.l.b16 %v235
        %v849 = vunpack.c.h.b16 %v235
        %v850 = vunpack.c.l.b16 %v236
        %v851 = vunpack.c.h.b16 %v236
        %v852 = vunpack.c.l.b16 %v237
        %v853 = vunpack.c.h.b16 %v237
        %v854 = vunpack.c.l.b16 %v238
        %v855 = vunpack.c.l.b16 %v239
        %v856 = vunpack.c.h.b16 %v239
        %v857 = vunpack.c.l.b16 %v240
        %v858 = vunpack.c.h.b16 %v240
        %v859 = vunpack.c.l.b16 %v241
        %v860 = vunpack.c.h.b16 %v241
        %v861 = vunpack.c.l.b16 %v242
        %v862 = vunpack.c.h.b16 %v242
        %v863 = vunpack.c.l.b16 %v243
        %v864 = vunpack.c.l.b16 %v244
        %v865 = vunpack.c.h.b16 %v244
        %v866 = vunpack.c.l.b16 %v245
        %v867 = vunpack.c.h.b16 %v245
        %v868 = vunpack.c.l.b16 %v246
        %v869 = vunpack.c.h.b16 %v246
        %v870 = vunpack.c.l.b16 %v247
        %v871 = vunpack.c.h.b16 %v247
        %v872 = vunpack.c.l.b16 %v248
        %v873 = vunpack.c.l.b16 %v249
        %v874 = vunpack.c.h.b16 %v249
        %v875 = vunpack.c.l.b16 %v250
        %v876 = vunpack.c.h.b16 %v250
        %v877 = vunpack.c.l.b16 %v251
        %v878 = vunpack.c.h.b16 %v251
        %v879 = vunpack.c.l.b16 %v252
        %v880 = vunpack.c.h.b16 %v252
        %v881 = vunpack.c.l.b16 %v253
        %v882 = vunpack.c.l.b16 %v254
        %v883 = vunpack.c.h.b16 %v254
        %v884 = vunpack.c.l.b16 %v255
        %v885 = vunpack.c.h.b16 %v255
        %v886 = vunpack.c.l.b16 %v256
        %v887 = vunpack.c.h.b16 %v256
        %v888 = vunpack.c.l.b16 %v257
        %v889 = vunpack.c.h.b16 %v257
        %v890 = vunpack.c.l.b16 %v258
        %v891 = vunpack.c.l.b16 %v259
        %v892 = vunpack.c.h.b16 %v259
        %v893 = vunpack.c.l.b16 %v260
        %v894 = vunpack.c.h.b16 %v260
        %v895 = vunpack.c.l.b16 %v261
        %v896 = vunpack.c.h.b16 %v261
        %v897 = vunpack.c.l.b16 %v262
        %v898 = vunpack.c.h.b16 %v262
        %v899 = vunpack.c.l.b16 %v263
        %v900 = vunpack.c.l.b16 %v264
        %v901 = vunpack.c.h.b16 %v264
        %v902 = vunpack.c.l.b16 %v265
        %v903 = vunpack.c.h.b16 %v265
        %v904 = vunpack.c.l.b16 %v266
        %v905 = vunpack.c.h.b16 %v266
        %v906 = vunpack.c.l.b16 %v267
        %v907 = vunpack.c.h.b16 %v267
        %v908 = vunpack.c.l.b16 %v268
        %v909 = vunpack.c.l.b16 %v269
        %v910 = vunpack.c.h.b16 %v269
        %v911 = vunpack.c.l.b16 %v270
        %v912 = vunpack.c.h.b16 %v270
        %v913 = vunpack.c.l.b16 %v271
        %v914 = vunpack.c.h.b16 %v271
        %v915 = vunpack.c.l.b16 %v272
        %v916 = vunpack.c.h.b16 %v272
        %v917 = vunpack.c.l.b16 %v273
        %v918 = vunpack.c.l.b16 %v274
        %v919 = vunpack.c.h.b16 %v274
        %v920 = vunpack.c.l.b16 %v275
        %v921 = vunpack.c.h.b16 %v275
        %v922 = vunpack.c.l.b16 %v276
        %v923 = vunpack.c.h.b16 %v276
        %v924 = vunpack.c.l.b16 %v277
        %v925 = vunpack.c.h.b16 %v277
        %v926 = vunpack.c.l.b16 %v278
        %v927 = vunpack.c.l.b16 %v279
        %v928 = vunpack.c.h.b16 %v279
        %v929 = vunpack.c.l.b16 %v280
        %v930 = vunpack.c.h.b16 %v280
        %v931 = vunpack.c.l.b16 %v281
        %v932 = vunpack.c.h.b16 %v281
        %v933 = vunpack.c.l.b16 %v282
        %v934 = vunpack.c.h.b16 %v282
        %v935 = vunpack.c.l.b16 %v283
        %v936 = vunpack.c.l.b16 %v284
        %v937 = vunpack.c.h.b16 %v284
        %v938 = vunpack.c.l.b16 %v285
        %v939 = vunpack.c.h.b16 %v285
        %v940 = vunpack.c.l.b16 %v286
        %v941 = vunpack.c.h.b16 %v286
        %v942 = vunpack.c.l.b16 %v287
        %v943 = vunpack.c.h.b16 %v287
        %v944 = vunpack.c.l.b16 %v288
        %v945 = vunpack.c.l.b16 %v289
        %v946 = vunpack.c.h.b16 %v289
        %v947 = vunpack.c.l.b16 %v290
        %v948 = vunpack.c.h.b16 %v290
        %v949 = vunpack.c.l.b16 %v291
        %v950 = vunpack.c.h.b16 %v291
        %v951 = vunpack.c.l.b16 %v292
        %v952 = vunpack.c.h.b16 %v292
        %v953 = vunpack.c.l.b16 %v293
        %v954 = vunpack.c.l.b16 %v294
        %v955 = vunpack.c.h.b16 %v294
        %v956 = vunpack.c.l.b16 %v295
        %v957 = vunpack.c.h.b16 %v295
        %v958 = vunpack.c.l.b16 %v296
        %v959 = vunpack.c.h.b16 %v296
        %v960 = vunpack.c.l.b16 %v297
        %v961 = vunpack.c.h.b16 %v297
        %v962 = vunpack.c.l.b16 %v298
        %v963 = vunpack.c.l.b16 %v299
        %v964 = vunpack.c.h.b16 %v299
        %v965 = vunpack.c.l.b16 %v300
        %v966 = vunpack.c.h.b16 %v300
        %v967 = vunpack.c.l.b16 %v301
        %v968 = vunpack.c.h.b16 %v301
        %v969 = vunpack.c.l.b16 %v302
        %v970 = vunpack.c.h.b16 %v302
        %v971 = vunpack.c.l.b16 %v303
        %v972 = vunpack.c.l.b16 %v304
        %v973 = vunpack.c.h.b16 %v304
        %v974 = vunpack.c.l.b16 %v305
        %v975 = vunpack.c.h.b16 %v305
        %v976 = vunpack.c.l.b16 %v306
        %v977 = vunpack.c.h.b16 %v306
        %v978 = vunpack.c.l.b16 %v307
        %v979 = vunpack.c.h.b16 %v307
        %v980 = vunpack.c.l.b16 %v308
        %v981 = vunpack.c.l.b16 %v309
        %v982 = vunpack.c.h.b16 %v309
        %v983 = vunpack.c.l.b16 %v310
        %v984 = vunpack.c.h.b16 %v310
        %v985 = vunpack.c.l.b16 %v311
        %v986 = vunpack.c.h.b16 %v311
        %v987 = vunpack.c.l.b16 %v312
        %v988 = vunpack.c.h.b16 %v312
        %v989 = vunpack.c.l.b16 %v313
        %v990 = vunpack.c.l.b16 %v314
        %v991 = vunpack.c.h.b16 %v314
        %v992 = vunpack.c.l.b16 %v315
        %v993 = vunpack.c.h.b16 %v315
        %v994 = vunpack.c.l.b16 %v316
        %v995 = vunpack.c.h.b16 %v316
        %v996 = vunpack.c.l.b16 %v317
        %v997 = vunpack.c.h.b16 %v317
        %v998 = vunpack.c.l.b16 %v318
        %v999 = vunpack.c.l.b16 %v319
        %v1000 = vunpack.c.h.b16 %v319
        %v1001 = vunpack.c.l.b16 %v320
        %v1002 = vunpack.c.h.b16 %v320
        %v1003 = vunpack.c.l.b16 %v321
        %v1004 = vunpack.c.h.b16 %v321
        %v1005 = vunpack.c.l.b16 %v322
        %v1006 = vunpack.c.h.b16 %v322
        %v1007 = vunpack.c.l.b16 %v323
        %v1008 = vunpack.c.l.b16 %v324
        %v1009 = vunpack.c.h.b16 %v324
        %v1010 = vunpack.c.l.b16 %v325
        %v1011 = vunpack.c.h.b16 %v325
        %v1012 = vunpack.c.l.b16 %v326
        %v1013 = vunpack.c.h.b16 %v326
        %v1014 = vunpack.c.l.b16 %v327
        %v1015 = vunpack.c.h.b16 %v327
        %v1016 = vunpack.c.l.b16 %v328
        %v1017 = vunpack.c.l.b16 %v329
        %v1018 = vunpack.c.h.b16 %v329
        %v1019 = vunpack.c.l.b16 %v330
        %v1020 = vunpack.c.h.b16 %v330
        %v1021 = vunpack.c.l.b16 %v331
        %v1022 = vunpack.c.h.b16 %v331
        %v1023 = vunpack.c.l.b16 %v332
        %v1024 = vunpack.c.h.b16 %v332
        %v1025 = vunpack.c.l.b16 %v333
        %v1026 = vunpack.c.l.b16 %v334
        %v1027 = vunpack.c.h.b16 %v334
        %v1028 = vunpack.c.l.b16 %v335
        %v1029 = vunpack.c.h.b16 %v335
        %v1030 = vunpack.c.l.b16 %v336
        %v1031 = vunpack.c.h.b16 %v336
        %v1032 = vunpack.c.l.b16 %v337
        %v1033 = vunpack.c.h.b16 %v337
        %v1034 = vunpack.c.l.b16 %v338
        %v1035 = vunpack.c.l.b16 %v339
        %v1036 = vunpack.c.h.b16 %v339
        %v1037 = vunpack.c.l.b16 %v340
        %v1038 = vunpack.c.h.b16 %v340
        %v1039 = vunpack.c.l.b16 %v341
        %v1040 = vunpack.c.h.b16 %v341
        %v1041 = vunpack.c.l.b16 %v342
        %v1042 = vunpack.c.h.b16 %v342
        %v1043 = vunpack.c.l.b16 %v343
        %v1044 = vunpack.c.l.b16 %v344
        %v1045 = vunpack.c.h.b16 %v344
        %v1046 = vunpack.c.l.b16 %v345
        %v1047 = vunpack.c.h.b16 %v345
        %v1048 = vunpack.c.l.b16 %v346
        %v1049 = vunpack.c.h.b16 %v346
        %v1050 = vunpack.c.l.b16 %v347
        %v1051 = vunpack.c.h.b16 %v347
        %v1052 = vunpack.c.l.b16 %v348
        %v1053 = vunpack.c.l.b16 %v349
        %v1054 = vunpack.c.h.b16 %v349
        %v1055 = vunpack.c.l.b16 %v350
        %v1056 = vunpack.c.h.b16 %v350
        %v1057 = vunpack.c.l.b16 %v351
        %v1058 = vunpack.c.h.b16 %v351
        %v1059 = vunpack.c.l.b16 %v352
        %v1060 = vunpack.c.h.b16 %v352
        %v1061 = vunpack.c.l.b16 %v353
        %v1062 = vunpack.c.l.b16 %v354
        %v1063 = vunpack.c.h.b16 %v354
        %v1064 = vunpack.c.l.b16 %v355
        %v1065 = vunpack.c.h.b16 %v355
        %v1066 = vunpack.c.l.b16 %v356
        %v1067 = vunpack.c.h.b16 %v356
        %v1068 = vunpack.c.l.b16 %v357
        %v1069 = vunpack.c.h.b16 %v357
        %v1070 = vunpack.c.l.b16 %v358
        %v1071 = vunpack.c.l.b16 %v359
        %v1072 = vunpack.c.h.b16 %v359
        %v1073 = vunpack.c.l.b16 %v360
        %v1074 = vunpack.c.h.b16 %v360
        %v1075 = vunpack.c.l.b16 %v361
        %v1076 = vunpack.c.h.b16 %v361
        %v1077 = vunpack.c.l.b16 %v362
        %v1078 = vunpack.c.h.b16 %v362
        %v1079 = vunpack.c.l.b16 %v363
        %v1080 = vunpack.c.l.b16 %v364
        %v1081 = vunpack.c.h.b16 %v364
        %v1082 = vunpack.c.l.b16 %v365
        %v1083 = vunpack.c.h.b16 %v365
        %v1084 = vunpack.c.l.b16 %v366
        %v1085 = vunpack.c.h.b16 %v366
        %v1086 = vunpack.c.l.b16 %v367
        %v1087 = vunpack.c.h.b16 %v367
        %v1088 = vunpack.c.l.b16 %v368
        %v1089 = vunpack.c.l.b16 %v369
        %v1090 = vunpack.c.h.b16 %v369
        %v1091 = vunpack.c.l.b16 %v370
        %v1092 = vunpack.c.h.b16 %v370
        %v1093 = vunpack.c.l.b16 %v371
        %v1094 = vunpack.c.h.b16 %v371
        %v1095 = vunpack.c.l.b16 %v372
        %v1096 = vunpack.c.h.b16 %v372
        %v1097 = vunpack.c.l.b16 %v373
        %v1098 = vunpack.c.l.b16 %v374
        %v1099 = vunpack.c.h.b16 %v374
        %v1100 = vunpack.c.l.b16 %v375
        %v1101 = vunpack.c.h.b16 %v375
        %v1102 = vunpack.c.l.b16 %v376
        %v1103 = vunpack.c.h.b16 %v376
        %v1104 = vunpack.c.l.b16 %v377
        %v1105 = vunpack.c.h.b16 %v377
        %v1106 = vunpack.c.l.b16 %v378
        %v1107 = vunpack.c.l.b16 %v379
        %v1108 = vunpack.c.h.b16 %v379
        %v1109 = vunpack.c.l.b16 %v380
        %v1110 = vunpack.c.h.b16 %v380
        %v1111 = vunpack.c.l.b16 %v381
        %v1112 = vunpack.c.h.b16 %v381
        %v1113 = vunpack.c.l.b16 %v382
        %v1114 = vunpack.c.h.b16 %v382
        %v1115 = vunpack.c.l.b16 %v383
        %v1116 = vunpack.c.l.b16 %v384
        %v1117 = vunpack.c.h.b16 %v384
        %v1118 = vunpack.c.l.b16 %v385
        %v1119 = vunpack.c.h.b16 %v385
        %v1120 = vunpack.c.l.b16 %v386
        %v1121 = vunpack.c.h.b16 %v386
        %v1122 = vunpack.c.l.b16 %v387
        %v1123 = vunpack.c.h.b16 %v387
        %v1124 = vunpack.c.l.b16 %v388
        %v1125 = vunpack.c.l.b16 %v389
        %v1126 = vunpack.c.h.b16 %v389
        %v1127 = vunpack.c.l.b16 %v390
        %v1128 = vunpack.c.h.b16 %v390
        %v1129 = vunpack.c.l.b16 %v391
        %v1130 = vunpack.c.h.b16 %v391
        %v1131 = vunpack.c.l.b16 %v392
        %v1132 = vunpack.c.h.b16 %v392
        %v1133 = vunpack.c.l.b16 %v393
        %v1134 = vunpack.c.l.b16 %v394
        %v1135 = vunpack.c.h.b16 %v394
        %v1136 = vunpack.c.l.b16 %v395
        %v1137 = vunpack.c.h.b16 %v395
        %v1138 = vunpack.c.l.b16 %v396
        %v1139 = vunpack.c.h.b16 %v396
        %v1140 = vunpack.c.l.b16 %v397
        %v1141 = vunpack.c.h.b16 %v397
        %v1142 = vunpack.c.l.b16 %v398
        %v1143 = vunpack.c.l.b16 %v399
        %v1144 = vunpack.c.h.b16 %v399
        %v1145 = vunpack.c.l.b16 %v400
        %v1146 = vunpack.c.h.b16 %v400
        %v1147 = vunpack.c.l.b16 %v401
        %v1148 = vunpack.c.h.b16 %v401
        %v1149 = vunpack.c.l.b16 %v402
        %v1150 = vunpack.c.h.b16 %v402
        %v1151 = vunpack.c.l.b16 %v403
        %v1152 = vunpack.c.l.b16 %v404
        %v1153 = vunpack.c.h.b16 %v404
        %v1154 = vunpack.c.l.b16 %v405
        %v1155 = vunpack.c.h.b16 %v405
        %v1156 = vunpack.c.l.b16 %v406
        %v1157 = vunpack.c.h.b16 %v406
        %v1158 = vunpack.c.l.b16 %v407
        %v1159 = vunpack.c.h.b16 %v407
        %v1160 = vunpack.c.l.b16 %v408
        %v1161 = vunpack.c.l.b16 %v409
        %v1162 = vunpack.c.h.b16 %v409
        %v1163 = vunpack.c.l.b16 %v410
        %v1164 = vunpack.c.h.b16 %v410
        %v1165 = vunpack.c.l.b16 %v411
        %v1166 = vunpack.c.h.b16 %v411
        %v1167 = vunpack.c.l.b16 %v412
        %v1168 = vunpack.c.h.b16 %v412
        %v1169 = vunpack.c.l.b16 %v413
        %v1170 = vunpack.c.l.b16 %v414
        %v1171 = vunpack.c.h.b16 %v414
        %v1172 = vunpack.c.l.b16 %v415
        %v1173 = vunpack.c.h.b16 %v415
        %v1174 = vunpack.c.l.b16 %v416
        %v1175 = vunpack.c.h.b16 %v416
        %v1176 = vunpack.c.l.b16 %v417
        %v1177 = vunpack.c.h.b16 %v417
        %v1178 = vunpack.c.l.b16 %v418
        %v1179 = vunpack.c.l.b16 %v419
        %v1180 = vunpack.c.h.b16 %v419
        %v1181 = vunpack.c.l.b16 %v420
        %v1182 = vunpack.c.h.b16 %v420
        %v1183 = vunpack.c.l.b16 %v421
        %v1184 = vunpack.c.h.b16 %v421
        %v1185 = vunpack.c.l.b16 %v422
        %v1186 = vunpack.c.h.b16 %v422
        %v1187 = vunpack.c.l.b16 %v423
        %v1188 = vunpack.c.l.b16 %v424
        %v1189 = vunpack.c.h.b16 %v424
        %v1190 = vunpack.c.l.b16 %v425
        %v1191 = vunpack.c.h.b16 %v425
        %v1192 = vunpack.c.l.b16 %v426
        %v1193 = vunpack.c.h.b16 %v426
        %v1194 = vunpack.c.l.b16 %v427
        %v1195 = vunpack.c.h.b16 %v427
        %v1196 = vunpack.c.l.b16 %v428
        %v1197 = vunpack.c.l.b16 %v429
        %v1198 = vunpack.c.h.b16 %v429
        %v1199 = vunpack.c.l.b16 %v430
        %v1200 = vunpack.c.h.b16 %v430
        %v1201 = vunpack.c.l.b16 %v431
        %v1202 = vunpack.c.h.b16 %v431
        %v1203 = vunpack.c.l.b16 %v432
        %v1204 = vunpack.c.h.b16 %v432
        %v1205 = vunpack.c.l.b16 %v433
        %v1206 = vunpack.c.l.b16 %v434
        %v1207 = vunpack.c.h.b16 %v434
        %v1208 = vunpack.c.l.b16 %v435
        %v1209 = vunpack.c.h.b16 %v435
        %v1210 = vunpack.c.l.b16 %v436
        %v1211 = vunpack.c.h.b16 %v436
        %v1212 = vunpack.c.l.b16 %v437
        %v1213 = vunpack.c.h.b16 %v437
        %v1214 = vunpack.c.l.b16 %v438
        %v1215 = vunpack.c.l.b16 %v439
        %v1216 = vunpack.c.h.b16 %v439
        %v1217 = vunpack.c.l.b16 %v440
        %v1218 = vunpack.c.h.b16 %v440
        %v1219 = vunpack.c.l.b16 %v441
        %v1220 = vunpack.c.h.b16 %v441
        %v1221 = vunpack.c.l.b16 %v442
        %v1222 = vunpack.c.h.b16 %v442
        %v1223 = vunpack.c.l.b16 %v443
        %v1224 = vunpack.c.l.b16 %v444
        %v1225 = vunpack.c.h.b16 %v444
        %v1226 = vunpack.c.l.b16 %v445
        %v1227 = vunpack.c.h.b16 %v445
        %v1228 = vunpack.c.l.b16 %v446
        %v1229 = vunpack.c.h.b16 %v446
        %v1230 = vunpack.c.l.b16 %v447
        %v1231 = vunpack.c.h.b16 %v447
        %v1232 = vunpack.c.l.b16 %v448
        %v1233 = vunpack.c.l.b16 %v449
        %v1234 = vunpack.c.h.b16 %v449
        %v1235 = vunpack.c.l.b16 %v450
        %v1236 = vunpack.c.h.b16 %v450
        %v1237 = vunpack.c.l.b16 %v451
        %v1238 = vunpack.c.h.b16 %v451
        %v1239 = vunpack.c.l.b16 %v452
        %v1240 = vunpack.c.h.b16 %v452
        %v1241 = vunpack.c.l.b16 %v453
        %v1242 = vunpack.c.l.b16 %v454
        %v1243 = vunpack.c.h.b16 %v454
        %v1244 = vunpack.c.l.b16 %v455
        %v1245 = vunpack.c.h.b16 %v455
        %v1246 = vunpack.c.l.b16 %v456
        %v1247 = vunpack.c.h.b16 %v456
        %v1248 = vunpack.c.l.b16 %v457
        %v1249 = vunpack.c.h.b16 %v457
        %v1250 = vunpack.c.l.b16 %v458
        %v1251 = vunpack.c.l.b16 %v459
        %v1252 = vunpack.c.h.b16 %v459
        %v1253 = vunpack.c.l.b16 %v460
        %v1254 = vunpack.c.h.b16 %v460
        %v1255 = vunpack.c.l.b16 %v461
        %v1256 = vunpack.c.h.b16 %v461
        %v1257 = vunpack.c.l.b16 %v462
        %v1258 = vunpack.c.h.b16 %v462
        %v1259 = vunpack.c.l.b16 %v463
        %v1260 = vunpack.c.l.b16 %v464
        %v1261 = vunpack.c.h.b16 %v464
        %v1262 = vunpack.c.l.b16 %v465
        %v1263 = vunpack.c.h.b16 %v465
        %v1264 = vunpack.c.l.b16 %v466
        %v1265 = vunpack.c.h.b16 %v466
        %v1266 = vunpack.c.l.b16 %v467
        %v1267 = vunpack.c.h.b16 %v467
        %v1268 = vunpack.c.l.b16 %v468
        %v1269 = vpack.c.b16 %v846, %v837
        %v1270 = vpack.c.b16 %v847, %v838
        %v1271 = vpack.c.b16 %v848, %v839
        %v1272 = vpack.c.b16 %v849, %v840
        %v1273 = vpack.c.b16 %v850, %v841
        %v1274 = vpack.c.b16 %v851, %v842
        %v1275 = vpack.c.b16 %v852, %v843
        %v1276 = vpack.c.b16 %v853, %v844
        %v1277 = vpack.c.b16 %v854, %v845
        %v1278 = vpack.c.b16 %v864, %v855
        %v1279 = vpack.c.b16 %v865, %v856
        %v1280 = vpack.c.b16 %v866, %v857
        %v1281 = vpack.c.b16 %v867, %v858
        %v1282 = vpack.c.b16 %v868, %v859
        %v1283 = vpack.c.b16 %v869, %v860
        %v1284 = vpack.c.b16 %v870, %v861
        %v1285 = vpack.c.b16 %v871, %v862
        %v1286 = vpack.c.b16 %v872, %v863
        %v1287 = vpack.c.b16 %v882, %v873
        %v1288 = vpack.c.b16 %v883, %v874
        %v1289 = vpack.c.b16 %v884, %v875
        %v1290 = vpack.c.b16 %v885, %v876
        %v1291 = vpack.c.b16 %v886, %v877
        %v1292 = vpack.c.b16 %v887, %v878
        %v1293 = vpack.c.b16 %v888, %v879
        %v1294 = vpack.c.b16 %v889, %v880
        %v1295 = vpack.c.b16 %v890, %v881
        %v1296 = vpack.c.b16 %v900, %v891
        %v1297 = vpack.c.b16 %v901, %v892
        %v1298 = vpack.c.b16 %v902, %v893
        %v1299 = vpack.c.b16 %v903, %v894
        %v1300 = vpack.c.b16 %v904, %v895
        %v1301 = vpack.c.b16 %v905, %v896
        %v1302 = vpack.c.b16 %v906, %v897
        %v1303 = vpack.c.b16 %v907, %v898
        %v1304 = vpack.c.b16 %v908, %v899
        %v1305 = vpack.c.b16 %v918, %v909
        %v1306 = vpack.c.b16 %v919, %v910
        %v1307 = vpack.c.b16 %v920, %v911
        %v1308 = vpack.c.b16 %v921, %v912
        %v1309 = vpack.c.b16 %v922, %v913
        %v1310 = vpack.c.b16 %v923, %v914
        %v1311 = vpack.c.b16 %v924, %v915
        %v1312 = vpack.c.b16 %v925, %v916
        %v1313 = vpack.c.b16 %v926, %v917
        %v1314 = vpack.c.b16 %v936, %v927
        %v1315 = vpack.c.b16 %v937, %v928
        %v1316 = vpack.c.b16 %v938, %v929
        %v1317 = vpack.c.b16 %v939, %v930
        %v1318 = vpack.c.b16 %v940, %v931
        %v1319 = vpack.c.b16 %v941, %v932
        %v1320 = vpack.c.b16 %v942, %v933
        %v1321 = vpack.c.b16 %v943, %v934
        %v1322 = vpack.c.b16 %v944, %v935
        %v1323 = vpack.c.b16 %v954, %v945
        %v1324 = vpack.c.b16 %v955, %v946
        %v1325 = vpack.c.b16 %v956, %v947
        %v1326 = vpack.c.b16 %v957, %v948
        %v1327 = vpack.c.b16 %v958, %v949
        %v1328 = vpack.c.b16 %v959, %v950
        %v1329 = vpack.c.b16 %v960, %v951
        %v1330 = vpack.c.b16 %v961, %v952
        %v1331 = vpack.c.b16 %v962, %v953
        %v1332 = vpack.c.b16 %v972, %v963
        %v1333 = vpack.c.b16 %v973, %v964
        %v1334 = vpack.c.b16 %v974, %v965
        %v1335 = vpack.c.b16 %v975, %v966
        %v1336 = vpack.c.b16 %v976, %v967
        %v1337 = vpack.c.b16 %v977, %v968
        %v1338 = vpack.c.b16 %v978, %v969
        %v1339 = vpack.c.b16 %v979, %v970
        %v1340 = vpack.c.b16 %v980, %v971
        %v1341 = vpack.c.b16 %v990, %v981
        %v1342 = vpack.c.b16 %v991, %v982
        %v1343 = vpack.c.b16 %v992, %v983
        %v1344 = vpack.c.b16 %v993, %v984
        %v1345 = vpack.c.b16 %v994, %v985
        %v1346 = vpack.c.b16 %v995, %v986
        %v1347 = vpack.c.b16 %v996, %v987
        %v1348 = vpack.c.b16 %v997, %v988
        %v1349 = vpack.c.b16 %v998, %v989
        %v1350 = vpack.c.b16 %v1008, %v999
        %v1351 = vpack.c.b16 %v1009, %v1000
        %v1352 = vpack.c.b16 %v1010, %v1001
        %v1353 = vpack.c.b16 %v1011, %v1002
        %v1354 = vpack.c.b16 %v1012, %v1003
        %v1355 = vpack.c.b16 %v1013, %v1004
        %v1356 = vpack.c.b16 %v1014, %v1005
        %v1357 = vpack.c.b16 %v1015, %v1006
        %v1358 = vpack.c.b16 %v1016, %v1007
        %v1359 = vpack.c.b16 %v1026, %v1017
        %v1360 = vpack.c.b16 %v1027, %v1018
        %v1361 = vpack.c.b16 %v1028, %v1019
        %v1362 = vpack.c.b16 %v1029, %v1020
        %v1363 = vpack.c.b16 %v1030, %v1021
        %v1364 = vpack.c.b16 %v1031, %v1022
        %v1365 = vpack.c.b16 %v1032, %v1023
        %v1366 = vpack.c.b16 %v1033, %v1024
        %v1367 = vpack.c.b16 %v1034, %v1025
        %v1368 = vpack.c.b16 %v1044, %v1035
        %v1369 = vpack.c.b16 %v1045, %v1036
        %v1370 = vpack.c.b16 %v1046, %v1037
        %v1371 = vpack.c.b16 %v1047, %v1038
        %v1372 = vpack.c.b16 %v1048, %v1039
        %v1373 = vpack.c.b16 %v1049, %v1040
        %v1374 = vpack.c.b16 %v1050, %v1041
        %v1375 = vpack.c.b16 %v1051, %v1042
        %v1376 = vpack.c.b16 %v1052, %v1043
        %v1377 = vpack.c.b16 %v1062, %v1053
        %v1378 = vpack.c.b16 %v1063, %v1054
        %v1379 = vpack.c.b16 %v1064, %v1055
        %v1380 = vpack.c.b16 %v1065, %v1056
        %v1381 = vpack.c.b16 %v1066, %v1057
        %v1382 = vpack.c.b16 %v1067, %v1058
        %v1383 = vpack.c.b16 %v1068, %v1059
        %v1384 = vpack.c.b16 %v1069, %v1060
        %v1385 = vpack.c.b16 %v1070, %v1061
        %v1386 = vpack.c.b16 %v1080, %v1071
        %v1387 = vpack.c.b16 %v1081, %v1072
        %v1388 = vpack.c.b16 %v1082, %v1073
        %v1389 = vpack.c.b16 %v1083, %v1074
        %v1390 = vpack.c.b16 %v1084, %v1075
        %v1391 = vpack.c.b16 %v1085, %v1076
        %v1392 = vpack.c.b16 %v1086, %v1077
        %v1393 = vpack.c.b16 %v1087, %v1078
        %v1394 = vpack.c.b16 %v1088, %v1079
        %v1395 = vpack.c.b16 %v1098, %v1089
        %v1396 = vpack.c.b16 %v1099, %v1090
        %v1397 = vpack.c.b16 %v1100, %v1091
        %v1398 = vpack.c.b16 %v1101, %v1092
        %v1399 = vpack.c.b16 %v1102, %v1093
        %v1400 = vpack.c.b16 %v1103, %v1094
        %v1401 = vpack.c.b16 %v1104, %v1095
        %v1402 = vpack.c.b16 %v1105, %v1096
        %v1403 = vpack.c.b16 %v1106, %v1097
        %v1404 = vpack.c.b16 %v1116, %v1107
        %v1405 = vpack.c.b16 %v1117, %v1108
        %v1406 = vpack.c.b16 %v1118, %v1109
        %v1407 = vpack.c.b16 %v1119, %v1110
        %v1408 = vpack.c.b16 %v1120, %v1111
        %v1409 = vpack.c.b16 %v1121, %v1112
        %v1410 = vpack.c.b16 %v1122, %v1113
        %v1411 = vpack.c.b16 %v1123, %v1114
        %v1412 = vpack.c.b16 %v1124, %v1115
        %v1413 = vpack.c.b16 %v1134, %v1125
        %v1414 = vpack.c.b16 %v1135, %v1126
        %v1415 = vpack.c.b16 %v1136, %v1127
        %v1416 = vpack.c.b16 %v1137, %v1128
        %v1417 = vpack.c.b16 %v1138, %v1129
        %v1418 = vpack.c.b16 %v1139, %v1130
        %v1419 = vpack.c.b16 %v1140, %v1131
        %v1420 = vpack.c.b16 %v1141, %v1132
        %v1421 = vpack.c.b16 %v1142, %v1133
        %v1422 = vpack.c.b16 %v1152, %v1143
        %v1423 = vpack.c.b16 %v1153, %v1144
        %v1424 = vpack.c.b16 %v1154, %v1145
        %v1425 = vpack.c.b16 %v1155, %v1146
        %v1426 = vpack.c.b16 %v1156, %v1147
        %v1427 = vpack.c.b16 %v1157, %v1148
        %v1428 = vpack.c.b16 %v1158, %v1149
        %v1429 = vpack.c.b16 %v1159, %v1150
        %v1430 = vpack.c.b16 %v1160, %v1151
        %v1431 = vpack.c.b16 %v1170, %v1161
        %v1432 = vpack.c.b16 %v1171, %v1162
        %v1433 = vpack.c.b16 %v1172, %v1163
        %v1434 = vpack.c.b16 %v1173, %v1164
        %v1435 = vpack.c.b16 %v1174, %v1165
        %v1436 = vpack.c.b16 %v1175, %v1166
        %v1437 = vpack.c.b16 %v1176, %v1167
        %v1438 = vpack.c.b16 %v1177, %v1168
        %v1439 = vpack.c.b16 %v1178, %v1169
        %v1440 = vpack.c.b16 %v1188, %v1179
        %v1441 = vpack.c.b16 %v1189, %v1180
        %v1442 = vpack.c.b16 %v1190, %v1181
        %v1443 = vpack.c.b16 %v1191, %v1182
        %v1444 = vpack.c.b16 %v1192, %v1183
        %v1445 = vpack.c.b16 %v1193, %v1184
        %v1446 = vpack.c.b16 %v1194, %v1185
        %v1447 = vpack.c.b16 %v1195, %v1186
        %v1448 = vpack.c.b16 %v1196, %v1187
        %v1449 = vpack.c.b16 %v1206, %v1197
        %v1450 = vpack.c.b16 %v1207, %v1198
        %v1451 = vpack.c.b16 %v1208, %v1199
        %v1452 = vpack.c.b16 %v1209, %v1200
        %v1453 = vpack.c.b16 %v1210, %v1201
        %v1454 = vpack.c.b16 %v1211, %v1202
        %v1455 = vpack.c.b16 %v1212, %v1203
        %v1456 = vpack.c.b16 %v1213, %v1204
        %v1457 = vpack.c.b16 %v1214, %v1205
        %v1458 = vpack.c.b16 %v1224, %v1215
        %v1459 = vpack.c.b16 %v1225, %v1216
        %v1460 = vpack.c.b16 %v1226, %v1217
        %v1461 = vpack.c.b16 %v1227, %v1218
        %v1462 = vpack.c.b16 %v1228, %v1219
        %v1463 = vpack.c.b16 %v1229, %v1220
        %v1464 = vpack.c.b16 %v1230, %v1221
        %v1465 = vpack.c.b16 %v1231, %v1222
        %v1466 = vpack.c.b16 %v1232, %v1223
        %v1467 = vpack.c.b16 %v1242, %v1233
        %v1468 = vpack.c.b16 %v1243, %v1234
        %v1469 = vpack.c.b16 %v1244, %v1235
        %v1470 = vpack.c.b16 %v1245, %v1236
        %v1471 = vpack.c.b16 %v1246, %v1237
        %v1472 = vpack.c.b16 %v1247, %v1238
        %v1473 = vpack.c.b16 %v1248, %v1239
        %v1474 = vpack.c.b16 %v1249, %v1240
        %v1475 = vpack.c.b16 %v1250, %v1241
        %v1476 = vpack.c.b16 %v1260, %v1251
        %v1477 = vpack.c.b16 %v1261, %v1252
        %v1478 = vpack.c.b16 %v1262, %v1253
        %v1479 = vpack.c.b16 %v1263, %v1254
        %v1480 = vpack.c.b16 %v1264, %v1255
        %v1481 = vpack.c.b16 %v1265, %v1256
        %v1482 = vpack.c.b16 %v1266, %v1257
        %v1483 = vpack.c.b16 %v1267, %v1258
        %v1484 = vpack.c.b16 %v1268, %v1259
        %1701 = vmatprep.subr.bf16.mxu0 %v1333
        %1702 = vmatpush1.bf16.msra.mxu0 %v1332
        %1703 = vmatprep.subr.bf16.mxu0 %v1324
        %1704 = vmatpush1.bf16.msra.mxu0 %v1323
        %1705 = vmatprep.subr.bf16.mxu0 %v1315
        %1706 = vmatpush1.bf16.msra.mxu0 %v1314
        %1707 = vmatprep.subr.bf16.mxu0 %v1306
        %1708 = vmatpush1.bf16.msra.mxu0 %v1305
        %1709 = vmatprep.subr.bf16.mxu0 %v1297
        %1710 = vmatpush1.bf16.msra.mxu0 %v1296
        %1711 = vmatprep.subr.bf16.mxu0 %v1288
        %1712 = vmatpush1.bf16.msra.mxu0 %v1287
        %1713 = vmatprep.subr.bf16.mxu0 %v1279
        %1714 = vmatpush1.bf16.msra.mxu0 %v1278
        %1715 = vmatprep.subr.bf16.mxu0 %v1270
        %1716 = vmatpush1.bf16.msra.mxu0 %v1269
        %1717 = vmatprep.subr.bf16.mxu0 %v1405
        %1718 = vmatpush2.bf16.msra.mxu0 %v1404
        %1719 = vmatprep.subr.bf16.mxu0 %v1396
        %1720 = vmatpush2.bf16.msra.mxu0 %v1395
        %1721 = vmatprep.subr.bf16.mxu0 %v1387
        %1722 = vmatpush2.bf16.msra.mxu0 %v1386
        %1723 = vmatprep.subr.bf16.mxu0 %v1378
        %1724 = vmatpush2.bf16.msra.mxu0 %v1377
        %1725 = vmatprep.subr.bf16.mxu0 %v1369
        %1726 = vmatpush2.bf16.msra.mxu0 %v1368
        %1727 = vmatprep.subr.bf16.mxu0 %v1360
        %1728 = vmatpush2.bf16.msra.mxu0 %v1359
        %1729 = vmatprep.subr.bf16.mxu0 %v1351
        %1730 = vmatpush2.bf16.msra.mxu0 %v1350
        %1731 = vmatprep.subr.bf16.mxu0 %v1342
        %1732 = vmatpush2.bf16.msra.mxu0 %v1341
        %1733 = vmatprep.mubr.bf16.mxu0 %v550
        %1734 = vmatmul.mubr.bf16.gmra.mxu0 %v549
        %v1735 = vpop.f32.mrf.mxu0
        %v1736 = vadd.f32 0.0, %v1735
        %v1737 = vpop.f32.mrf.mxu0
        %v1738 = vadd.f32 0.0, %v1737
        %v1739 = vpop.f32.mrf.mxu0
        %v1740 = vadd.f32 0.0, %v1739
        %v1741 = vpop.f32.mrf.mxu0
        %v1742 = vadd.f32 0.0, %v1741
        %1743 = vmatprep.mubr.bf16.mxu0 %v553
        %1744 = vmatmul.mubr.bf16.gmra.mxu0 %v552
        %v1745 = vpop.f32.mrf.mxu0
        %v1746 = vadd.f32 0.0, %v1745
        %v1747 = vpop.f32.mrf.mxu0
        %v1748 = vadd.f32 0.0, %v1747
        %v1749 = vpop.f32.mrf.mxu0
        %v1750 = vadd.f32 0.0, %v1749
        %v1751 = vpop.f32.mrf.mxu0
        %v1752 = vadd.f32 0.0, %v1751
        %1753 = vmatprep.mubr.bf16.mxu0 %v556
        %1754 = vmatmul.mubr.bf16.gmra.mxu0 %v555
        %v1755 = vpop.f32.mrf.mxu0
        %v1756 = vadd.f32 0.0, %v1755
        %v1757 = vpop.f32.mrf.mxu0
        %v1758 = vadd.f32 0.0, %v1757
        %v1759 = vpop.f32.mrf.mxu0
        %v1760 = vadd.f32 0.0, %v1759
        %v1761 = vpop.f32.mrf.mxu0
        %v1762 = vadd.f32 0.0, %v1761
        %1763 = vmatprep.mubr.bf16.mxu0 %v559
        %1764 = vmatmul.mubr.bf16.gmra.mxu0 %v558
        %v1765 = vpop.f32.mrf.mxu0
        %v1766 = vadd.f32 0.0, %v1765
        %v1767 = vpop.f32.mrf.mxu0
        %v1768 = vadd.f32 0.0, %v1767
        %v1769 = vpop.f32.mrf.mxu0
        %v1770 = vadd.f32 0.0, %v1769
        %v1771 = vpop.f32.mrf.mxu0
        %v1772 = vadd.f32 0.0, %v1771
        %1773 = vmatprep.mubr.bf16.mxu0 %v562
        %1774 = vmatmul.mubr.bf16.gmra.mxu0 %v561
        %v1775 = vpop.f32.mrf.mxu0
        %v1776 = vadd.f32 0.0, %v1775
        %v1777 = vpop.f32.mrf.mxu0
        %v1778 = vadd.f32 0.0, %v1777
        %v1779 = vpop.f32.mrf.mxu0
        %v1780 = vadd.f32 0.0, %v1779
        %v1781 = vpop.f32.mrf.mxu0
        %v1782 = vadd.f32 0.0, %v1781
        %1783 = vmatprep.mubr.bf16.mxu0 %v565
        %1784 = vmatmul.mubr.bf16.gmra.mxu0 %v564
        %v1785 = vpop.f32.mrf.mxu0
        %v1786 = vadd.f32 0.0, %v1785
        %v1787 = vpop.f32.mrf.mxu0
        %v1788 = vadd.f32 0.0, %v1787
        %v1789 = vpop.f32.mrf.mxu0
        %v1790 = vadd.f32 0.0, %v1789
        %v1791 = vpop.f32.mrf.mxu0
        %v1792 = vadd.f32 0.0, %v1791
        %1793 = vmatprep.mubr.bf16.mxu0 %v568
        %1794 = vmatmul.mubr.bf16.gmra.mxu0 %v567
        %v1795 = vpop.f32.mrf.mxu0
        %v1796 = vadd.f32 0.0, %v1795
        %v1797 = vpop.f32.mrf.mxu0
        %v1798 = vadd.f32 0.0, %v1797
        %v1799 = vpop.f32.mrf.mxu0
        %v1800 = vadd.f32 0.0, %v1799
        %v1801 = vpop.f32.mrf.mxu0
        %v1802 = vadd.f32 0.0, %v1801
        %1803 = vmatprep.mubr.bf16.mxu0 %v571
        %1804 = vmatmul.mubr.bf16.gmra.mxu0 %v570
        %v1805 = vpop.f32.mrf.mxu0
        %v1806 = vadd.f32 0.0, %v1805
        %v1807 = vpop.f32.mrf.mxu0
        %v1808 = vadd.f32 0.0, %v1807
        %v1809 = vpop.f32.mrf.mxu0
        %v1810 = vadd.f32 0.0, %v1809
        %v1811 = vpop.f32.mrf.mxu0
        %v1812 = vadd.f32 0.0, %v1811
        %1813 = vdwg.mxu0
        %1814 = vmatprep.subr.bf16.mxu0 %v1477
        %1815 = vmatpush1.bf16.msra.mxu0 %v1476
        %1816 = vmatprep.subr.bf16.mxu0 %v1468
        %1817 = vmatpush1.bf16.msra.mxu0 %v1467
        %1818 = vmatprep.subr.bf16.mxu0 %v1459
        %1819 = vmatpush1.bf16.msra.mxu0 %v1458
        %1820 = vmatprep.subr.bf16.mxu0 %v1450
        %1821 = vmatpush1.bf16.msra.mxu0 %v1449
        %1822 = vmatprep.subr.bf16.mxu0 %v1441
        %1823 = vmatpush1.bf16.msra.mxu0 %v1440
        %1824 = vmatprep.subr.bf16.mxu0 %v1432
        %1825 = vmatpush1.bf16.msra.mxu0 %v1431
        %1826 = vmatprep.subr.bf16.mxu0 %v1423
        %1827 = vmatpush1.bf16.msra.mxu0 %v1422
        %1828 = vmatprep.subr.bf16.mxu0 %v1414
        %1829 = vmatpush1.bf16.msra.mxu0 %v1413
        %1830 = vmatprep.subr.bf16.mxu0 0
        %1831 = vmatpush2.bf16.msra.mxu0 0
        %1832 = vmatprep.subr.bf16.mxu0 0
        %1833 = vmatpush2.bf16.msra.mxu0 0
        %1834 = vmatprep.subr.bf16.mxu0 0
        %1835 = vmatpush2.bf16.msra.mxu0 0
        %1836 = vmatprep.subr.bf16.mxu0 0
        %1837 = vmatpush2.bf16.msra.mxu0 0
        %1838 = vmatprep.subr.bf16.mxu0 0
        %1839 = vmatpush2.bf16.msra.mxu0 0
        %1840 = vmatprep.subr.bf16.mxu0 0
        %1841 = vmatpush2.bf16.msra.mxu0 0
        %1842 = vmatprep.subr.bf16.mxu0 0
        %1843 = vmatpush2.bf16.msra.mxu0 0
        %1844 = vmatprep.subr.bf16.mxu0 0
        %1845 = vmatpush2.bf16.msra.mxu0 0
        %1846 = vmatprep.mubr.bf16.mxu0 0
        %1847 = vmatmul.mubr.bf16.gmra.mxu0 %v551
        %v1848 = vpop.f32.mrf.mxu0
        %v1849 = vadd.f32 %v1736, %v1848
        %v1850 = vpop.f32.mrf.mxu0
        %v1851 = vadd.f32 %v1738, %v1850
        %v1852 = vpop.f32.mrf.mxu0
        %v1853 = vadd.f32 %v1740, %v1852
        %v1854 = vpop.f32.mrf.mxu0
        %v1855 = vadd.f32 %v1742, %v1854
        %1856 = vmatprep.mubr.bf16.mxu0 0
        %1857 = vmatmul.mubr.bf16.gmra.mxu0 %v554
        %v1858 = vpop.f32.mrf.mxu0
        %v1859 = vadd.f32 %v1746, %v1858
        %v1860 = vpop.f32.mrf.mxu0
        %v1861 = vadd.f32 %v1748, %v1860
        %v1862 = vpop.f32.mrf.mxu0
        %v1863 = vadd.f32 %v1750, %v1862
        %v1864 = vpop.f32.mrf.mxu0
        %v1865 = vadd.f32 %v1752, %v1864
        %1866 = vmatprep.mubr.bf16.mxu0 0
        %1867 = vmatmul.mubr.bf16.gmra.mxu0 %v557
        %v1868 = vpop.f32.mrf.mxu0
        %v1869 = vadd.f32 %v1756, %v1868
        %v1870 = vpop.f32.mrf.mxu0
        %v1871 = vadd.f32 %v1758, %v1870
        %v1872 = vpop.f32.mrf.mxu0
        %v1873 = vadd.f32 %v1760, %v1872
        %v1874 = vpop.f32.mrf.mxu0
        %v1875 = vadd.f32 %v1762, %v1874
        %1876 = vmatprep.mubr.bf16.mxu0 0
        %1877 = vmatmul.mubr.bf16.gmra.mxu0 %v560
        %v1878 = vpop.f32.mrf.mxu0
        %v1879 = vadd.f32 %v1766, %v1878
        %v1880 = vpop.f32.mrf.mxu0
        %v1881 = vadd.f32 %v1768, %v1880
        %v1882 = vpop.f32.mrf.mxu0
        %v1883 = vadd.f32 %v1770, %v1882
        %v1884 = vpop.f32.mrf.mxu0
        %v1885 = vadd.f32 %v1772, %v1884
        %1886 = vmatprep.mubr.bf16.mxu0 0
        %1887 = vmatmul.mubr.bf16.gmra.mxu0 %v563
        %v1888 = vpop.f32.mrf.mxu0
        %v1889 = vadd.f32 %v1776, %v1888
        %v1890 = vpop.f32.mrf.mxu0
        %v1891 = vadd.f32 %v1778, %v1890
        %v1892 = vpop.f32.mrf.mxu0
        %v1893 = vadd.f32 %v1780, %v1892
        %v1894 = vpop.f32.mrf.mxu0
        %v1895 = vadd.f32 %v1782, %v1894
        %1896 = vmatprep.mubr.bf16.mxu0 0
        %1897 = vmatmul.mubr.bf16.gmra.mxu0 %v566
        %v1898 = vpop.f32.mrf.mxu0
        %v1899 = vadd.f32 %v1786, %v1898
        %v1900 = vpop.f32.mrf.mxu0
        %v1901 = vadd.f32 %v1788, %v1900
        %v1902 = vpop.f32.mrf.mxu0
        %v1903 = vadd.f32 %v1790, %v1902
        %v1904 = vpop.f32.mrf.mxu0
        %v1905 = vadd.f32 %v1792, %v1904
        %1906 = vmatprep.mubr.bf16.mxu0 0
        %1907 = vmatmul.mubr.bf16.gmra.mxu0 %v569
        %v1908 = vpop.f32.mrf.mxu0
        %v1909 = vadd.f32 %v1796, %v1908
        %v1910 = vpop.f32.mrf.mxu0
        %v1911 = vadd.f32 %v1798, %v1910
        %v1912 = vpop.f32.mrf.mxu0
        %v1913 = vadd.f32 %v1800, %v1912
        %v1914 = vpop.f32.mrf.mxu0
        %v1915 = vadd.f32 %v1802, %v1914
        %1916 = vmatprep.mubr.bf16.mxu0 0
        %1917 = vmatmul.mubr.bf16.gmra.mxu0 %v572
        %v1918 = vpop.f32.mrf.mxu0
        %v1919 = vadd.f32 %v1806, %v1918
        %v1920 = vpop.f32.mrf.mxu0
        %v1921 = vadd.f32 %v1808, %v1920
        %v1922 = vpop.f32.mrf.mxu0
        %v1923 = vadd.f32 %v1810, %v1922
        %v1924 = vpop.f32.mrf.mxu0
        %v1925 = vadd.f32 %v1812, %v1924
        %1926 = vdwg.mxu0
        %1927 = vmatprep.subr.bf16.mxu0 %v1335
        %1928 = vmatpush1.bf16.msra.mxu0 %v1334
        %1929 = vmatprep.subr.bf16.mxu0 %v1326
        %1930 = vmatpush1.bf16.msra.mxu0 %v1325
        %1931 = vmatprep.subr.bf16.mxu0 %v1317
        %1932 = vmatpush1.bf16.msra.mxu0 %v1316
        %1933 = vmatprep.subr.bf16.mxu0 %v1308
        %1934 = vmatpush1.bf16.msra.mxu0 %v1307
        %1935 = vmatprep.subr.bf16.mxu0 %v1299
        %1936 = vmatpush1.bf16.msra.mxu0 %v1298
        %1937 = vmatprep.subr.bf16.mxu0 %v1290
        %1938 = vmatpush1.bf16.msra.mxu0 %v1289
        %1939 = vmatprep.subr.bf16.mxu0 %v1281
        %1940 = vmatpush1.bf16.msra.mxu0 %v1280
        %1941 = vmatprep.subr.bf16.mxu0 %v1272
        %1942 = vmatpush1.bf16.msra.mxu0 %v1271
        %1943 = vmatprep.subr.bf16.mxu0 %v1407
        %1944 = vmatpush2.bf16.msra.mxu0 %v1406
        %1945 = vmatprep.subr.bf16.mxu0 %v1398
        %1946 = vmatpush2.bf16.msra.mxu0 %v1397
        %1947 = vmatprep.subr.bf16.mxu0 %v1389
        %1948 = vmatpush2.bf16.msra.mxu0 %v1388
        %1949 = vmatprep.subr.bf16.mxu0 %v1380
        %1950 = vmatpush2.bf16.msra.mxu0 %v1379
        %1951 = vmatprep.subr.bf16.mxu0 %v1371
        %1952 = vmatpush2.bf16.msra.mxu0 %v1370
        %1953 = vmatprep.subr.bf16.mxu0 %v1362
        %1954 = vmatpush2.bf16.msra.mxu0 %v1361
        %1955 = vmatprep.subr.bf16.mxu0 %v1353
        %1956 = vmatpush2.bf16.msra.mxu0 %v1352
        %1957 = vmatprep.subr.bf16.mxu0 %v1344
        %1958 = vmatpush2.bf16.msra.mxu0 %v1343
        %1959 = vmatprep.mubr.bf16.mxu0 %v550
        %1960 = vmatmul.mubr.bf16.gmra.mxu0 %v549
        %v1961 = vpop.f32.mrf.mxu0
        %v1962 = vadd.f32 0.0, %v1961
        %v1963 = vpop.f32.mrf.mxu0
        %v1964 = vadd.f32 0.0, %v1963
        %v1965 = vpop.f32.mrf.mxu0
        %v1966 = vadd.f32 0.0, %v1965
        %v1967 = vpop.f32.mrf.mxu0
        %v1968 = vadd.f32 0.0, %v1967
        %1969 = vmatprep.mubr.bf16.mxu0 %v553
        %1970 = vmatmul.mubr.bf16.gmra.mxu0 %v552
        %v1971 = vpop.f32.mrf.mxu0
        %v1972 = vadd.f32 0.0, %v1971
        %v1973 = vpop.f32.mrf.mxu0
        %v1974 = vadd.f32 0.0, %v1973
        %v1975 = vpop.f32.mrf.mxu0
        %v1976 = vadd.f32 0.0, %v1975
        %v1977 = vpop.f32.mrf.mxu0
        %v1978 = vadd.f32 0.0, %v1977
        %1979 = vmatprep.mubr.bf16.mxu0 %v556
        %1980 = vmatmul.mubr.bf16.gmra.mxu0 %v555
        %v1981 = vpop.f32.mrf.mxu0
        %v1982 = vadd.f32 0.0, %v1981
        %v1983 = vpop.f32.mrf.mxu0
        %v1984 = vadd.f32 0.0, %v1983
        %v1985 = vpop.f32.mrf.mxu0
        %v1986 = vadd.f32 0.0, %v1985
        %v1987 = vpop.f32.mrf.mxu0
        %v1988 = vadd.f32 0.0, %v1987
        %1989 = vmatprep.mubr.bf16.mxu0 %v559
        %1990 = vmatmul.mubr.bf16.gmra.mxu0 %v558
        %v1991 = vpop.f32.mrf.mxu0
        %v1992 = vadd.f32 0.0, %v1991
        %v1993 = vpop.f32.mrf.mxu0
        %v1994 = vadd.f32 0.0, %v1993
        %v1995 = vpop.f32.mrf.mxu0
        %v1996 = vadd.f32 0.0, %v1995
        %v1997 = vpop.f32.mrf.mxu0
        %v1998 = vadd.f32 0.0, %v1997
        %1999 = vmatprep.mubr.bf16.mxu0 %v562
        %2000 = vmatmul.mubr.bf16.gmra.mxu0 %v561
        %v2001 = vpop.f32.mrf.mxu0
        %v2002 = vadd.f32 0.0, %v2001
        %v2003 = vpop.f32.mrf.mxu0
        %v2004 = vadd.f32 0.0, %v2003
        %v2005 = vpop.f32.mrf.mxu0
        %v2006 = vadd.f32 0.0, %v2005
        %v2007 = vpop.f32.mrf.mxu0
        %v2008 = vadd.f32 0.0, %v2007
        %2009 = vmatprep.mubr.bf16.mxu0 %v565
        %2010 = vmatmul.mubr.bf16.gmra.mxu0 %v564
        %v2011 = vpop.f32.mrf.mxu0
        %v2012 = vadd.f32 0.0, %v2011
        %v2013 = vpop.f32.mrf.mxu0
        %v2014 = vadd.f32 0.0, %v2013
        %v2015 = vpop.f32.mrf.mxu0
        %v2016 = vadd.f32 0.0, %v2015
        %v2017 = vpop.f32.mrf.mxu0
        %v2018 = vadd.f32 0.0, %v2017
        %2019 = vmatprep.mubr.bf16.mxu0 %v568
        %2020 = vmatmul.mubr.bf16.gmra.mxu0 %v567
        %v2021 = vpop.f32.mrf.mxu0
        %v2022 = vadd.f32 0.0, %v2021
        %v2023 = vpop.f32.mrf.mxu0
        %v2024 = vadd.f32 0.0, %v2023
        %v2025 = vpop.f32.mrf.mxu0
        %v2026 = vadd.f32 0.0, %v2025
        %v2027 = vpop.f32.mrf.mxu0
        %v2028 = vadd.f32 0.0, %v2027
        %2029 = vmatprep.mubr.bf16.mxu0 %v571
        %2030 = vmatmul.mubr.bf16.gmra.mxu0 %v570
        %v2031 = vpop.f32.mrf.mxu0
        %v2032 = vadd.f32 0.0, %v2031
        %v2033 = vpop.f32.mrf.mxu0
        %v2034 = vadd.f32 0.0, %v2033
        %v2035 = vpop.f32.mrf.mxu0
        %v2036 = vadd.f32 0.0, %v2035
        %v2037 = vpop.f32.mrf.mxu0
        %v2038 = vadd.f32 0.0, %v2037
        %2039 = vdwg.mxu0
        %2040 = vmatprep.subr.bf16.mxu0 %v1479
        %2041 = vmatpush1.bf16.msra.mxu0 %v1478
        %2042 = vmatprep.subr.bf16.mxu0 %v1470
        %2043 = vmatpush1.bf16.msra.mxu0 %v1469
        %2044 = vmatprep.subr.bf16.mxu0 %v1461
        %2045 = vmatpush1.bf16.msra.mxu0 %v1460
        %2046 = vmatprep.subr.bf16.mxu0 %v1452
        %2047 = vmatpush1.bf16.msra.mxu0 %v1451
        %2048 = vmatprep.subr.bf16.mxu0 %v1443
        %2049 = vmatpush1.bf16.msra.mxu0 %v1442
        %2050 = vmatprep.subr.bf16.mxu0 %v1434
        %2051 = vmatpush1.bf16.msra.mxu0 %v1433
        %2052 = vmatprep.subr.bf16.mxu0 %v1425
        %2053 = vmatpush1.bf16.msra.mxu0 %v1424
        %2054 = vmatprep.subr.bf16.mxu0 %v1416
        %2055 = vmatpush1.bf16.msra.mxu0 %v1415
        %2056 = vmatprep.subr.bf16.mxu0 0
        %2057 = vmatpush2.bf16.msra.mxu0 0
        %2058 = vmatprep.subr.bf16.mxu0 0
        %2059 = vmatpush2.bf16.msra.mxu0 0
        %2060 = vmatprep.subr.bf16.mxu0 0
        %2061 = vmatpush2.bf16.msra.mxu0 0
        %2062 = vmatprep.subr.bf16.mxu0 0
        %2063 = vmatpush2.bf16.msra.mxu0 0
        %2064 = vmatprep.subr.bf16.mxu0 0
        %2065 = vmatpush2.bf16.msra.mxu0 0
        %2066 = vmatprep.subr.bf16.mxu0 0
        %2067 = vmatpush2.bf16.msra.mxu0 0
        %2068 = vmatprep.subr.bf16.mxu0 0
        %2069 = vmatpush2.bf16.msra.mxu0 0
        %2070 = vmatprep.subr.bf16.mxu0 0
        %2071 = vmatpush2.bf16.msra.mxu0 0
        %2072 = vmatprep.mubr.bf16.mxu0 0
        %2073 = vmatmul.mubr.bf16.gmra.mxu0 %v551
        %v2074 = vpop.f32.mrf.mxu0
        %v2075 = vadd.f32 %v1962, %v2074
        %v2076 = vpop.f32.mrf.mxu0
        %v2077 = vadd.f32 %v1964, %v2076
        %v2078 = vpop.f32.mrf.mxu0
        %v2079 = vadd.f32 %v1966, %v2078
        %v2080 = vpop.f32.mrf.mxu0
        %v2081 = vadd.f32 %v1968, %v2080
        %2082 = vmatprep.mubr.bf16.mxu0 0
        %2083 = vmatmul.mubr.bf16.gmra.mxu0 %v554
        %v2084 = vpop.f32.mrf.mxu0
        %v2085 = vadd.f32 %v1972, %v2084
        %v2086 = vpop.f32.mrf.mxu0
        %v2087 = vadd.f32 %v1974, %v2086
        %v2088 = vpop.f32.mrf.mxu0
        %v2089 = vadd.f32 %v1976, %v2088
        %v2090 = vpop.f32.mrf.mxu0
        %v2091 = vadd.f32 %v1978, %v2090
        %2092 = vmatprep.mubr.bf16.mxu0 0
        %2093 = vmatmul.mubr.bf16.gmra.mxu0 %v557
        %v2094 = vpop.f32.mrf.mxu0
        %v2095 = vadd.f32 %v1982, %v2094
        %v2096 = vpop.f32.mrf.mxu0
        %v2097 = vadd.f32 %v1984, %v2096
        %v2098 = vpop.f32.mrf.mxu0
        %v2099 = vadd.f32 %v1986, %v2098
        %v2100 = vpop.f32.mrf.mxu0
        %v2101 = vadd.f32 %v1988, %v2100
        %2102 = vmatprep.mubr.bf16.mxu0 0
        %2103 = vmatmul.mubr.bf16.gmra.mxu0 %v560
        %v2104 = vpop.f32.mrf.mxu0
        %v2105 = vadd.f32 %v1992, %v2104
        %v2106 = vpop.f32.mrf.mxu0
        %v2107 = vadd.f32 %v1994, %v2106
        %v2108 = vpop.f32.mrf.mxu0
        %v2109 = vadd.f32 %v1996, %v2108
        %v2110 = vpop.f32.mrf.mxu0
        %v2111 = vadd.f32 %v1998, %v2110
        %2112 = vmatprep.mubr.bf16.mxu0 0
        %2113 = vmatmul.mubr.bf16.gmra.mxu0 %v563
        %v2114 = vpop.f32.mrf.mxu0
        %v2115 = vadd.f32 %v2002, %v2114
        %v2116 = vpop.f32.mrf.mxu0
        %v2117 = vadd.f32 %v2004, %v2116
        %v2118 = vpop.f32.mrf.mxu0
        %v2119 = vadd.f32 %v2006, %v2118
        %v2120 = vpop.f32.mrf.mxu0
        %v2121 = vadd.f32 %v2008, %v2120
        %2122 = vmatprep.mubr.bf16.mxu0 0
        %2123 = vmatmul.mubr.bf16.gmra.mxu0 %v566
        %v2124 = vpop.f32.mrf.mxu0
        %v2125 = vadd.f32 %v2012, %v2124
        %v2126 = vpop.f32.mrf.mxu0
        %v2127 = vadd.f32 %v2014, %v2126
        %v2128 = vpop.f32.mrf.mxu0
        %v2129 = vadd.f32 %v2016, %v2128
        %v2130 = vpop.f32.mrf.mxu0
        %v2131 = vadd.f32 %v2018, %v2130
        %2132 = vmatprep.mubr.bf16.mxu0 0
        %2133 = vmatmul.mubr.bf16.gmra.mxu0 %v569
        %v2134 = vpop.f32.mrf.mxu0
        %v2135 = vadd.f32 %v2022, %v2134
        %v2136 = vpop.f32.mrf.mxu0
        %v2137 = vadd.f32 %v2024, %v2136
        %v2138 = vpop.f32.mrf.mxu0
        %v2139 = vadd.f32 %v2026, %v2138
        %v2140 = vpop.f32.mrf.mxu0
        %v2141 = vadd.f32 %v2028, %v2140
        %2142 = vmatprep.mubr.bf16.mxu0 0
        %2143 = vmatmul.mubr.bf16.gmra.mxu0 %v572
        %v2144 = vpop.f32.mrf.mxu0
        %v2145 = vadd.f32 %v2032, %v2144
        %v2146 = vpop.f32.mrf.mxu0
        %v2147 = vadd.f32 %v2034, %v2146
        %v2148 = vpop.f32.mrf.mxu0
        %v2149 = vadd.f32 %v2036, %v2148
        %v2150 = vpop.f32.mrf.mxu0
        %v2151 = vadd.f32 %v2038, %v2150
        %2152 = vdwg.mxu0
        %2153 = vmatprep.subr.bf16.mxu0 %v1337
        %2154 = vmatpush1.bf16.msra.mxu0 %v1336
        %2155 = vmatprep.subr.bf16.mxu0 %v1328
        %2156 = vmatpush1.bf16.msra.mxu0 %v1327
        %2157 = vmatprep.subr.bf16.mxu0 %v1319
        %2158 = vmatpush1.bf16.msra.mxu0 %v1318
        %2159 = vmatprep.subr.bf16.mxu0 %v1310
        %2160 = vmatpush1.bf16.msra.mxu0 %v1309
        %2161 = vmatprep.subr.bf16.mxu0 %v1301
        %2162 = vmatpush1.bf16.msra.mxu0 %v1300
        %2163 = vmatprep.subr.bf16.mxu0 %v1292
        %2164 = vmatpush1.bf16.msra.mxu0 %v1291
        %2165 = vmatprep.subr.bf16.mxu0 %v1283
        %2166 = vmatpush1.bf16.msra.mxu0 %v1282
        %2167 = vmatprep.subr.bf16.mxu0 %v1274
        %2168 = vmatpush1.bf16.msra.mxu0 %v1273
        %2169 = vmatprep.subr.bf16.mxu0 %v1409
        %2170 = vmatpush2.bf16.msra.mxu0 %v1408
        %2171 = vmatprep.subr.bf16.mxu0 %v1400
        %2172 = vmatpush2.bf16.msra.mxu0 %v1399
        %2173 = vmatprep.subr.bf16.mxu0 %v1391
        %2174 = vmatpush2.bf16.msra.mxu0 %v1390
        %2175 = vmatprep.subr.bf16.mxu0 %v1382
        %2176 = vmatpush2.bf16.msra.mxu0 %v1381
        %2177 = vmatprep.subr.bf16.mxu0 %v1373
        %2178 = vmatpush2.bf16.msra.mxu0 %v1372
        %2179 = vmatprep.subr.bf16.mxu0 %v1364
        %2180 = vmatpush2.bf16.msra.mxu0 %v1363
        %2181 = vmatprep.subr.bf16.mxu0 %v1355
        %2182 = vmatpush2.bf16.msra.mxu0 %v1354
        %2183 = vmatprep.subr.bf16.mxu0 %v1346
        %2184 = vmatpush2.bf16.msra.mxu0 %v1345
        %2185 = vmatprep.mubr.bf16.mxu0 %v550
        %2186 = vmatmul.mubr.bf16.gmra.mxu0 %v549
        %v2187 = vpop.f32.mrf.mxu0
        %v2188 = vadd.f32 0.0, %v2187
        %v2189 = vpop.f32.mrf.mxu0
        %v2190 = vadd.f32 0.0, %v2189
        %v2191 = vpop.f32.mrf.mxu0
        %v2192 = vadd.f32 0.0, %v2191
        %v2193 = vpop.f32.mrf.mxu0
        %v2194 = vadd.f32 0.0, %v2193
        %2195 = vmatprep.mubr.bf16.mxu0 %v553
        %2196 = vmatmul.mubr.bf16.gmra.mxu0 %v552
        %v2197 = vpop.f32.mrf.mxu0
        %v2198 = vadd.f32 0.0, %v2197
        %v2199 = vpop.f32.mrf.mxu0
        %v2200 = vadd.f32 0.0, %v2199
        %v2201 = vpop.f32.mrf.mxu0
        %v2202 = vadd.f32 0.0, %v2201
        %v2203 = vpop.f32.mrf.mxu0
        %v2204 = vadd.f32 0.0, %v2203
        %2205 = vmatprep.mubr.bf16.mxu0 %v556
        %2206 = vmatmul.mubr.bf16.gmra.mxu0 %v555
        %v2207 = vpop.f32.mrf.mxu0
        %v2208 = vadd.f32 0.0, %v2207
        %v2209 = vpop.f32.mrf.mxu0
        %v2210 = vadd.f32 0.0, %v2209
        %v2211 = vpop.f32.mrf.mxu0
        %v2212 = vadd.f32 0.0, %v2211
        %v2213 = vpop.f32.mrf.mxu0
        %v2214 = vadd.f32 0.0, %v2213
        %2215 = vmatprep.mubr.bf16.mxu0 %v559
        %2216 = vmatmul.mubr.bf16.gmra.mxu0 %v558
        %v2217 = vpop.f32.mrf.mxu0
        %v2218 = vadd.f32 0.0, %v2217
        %v2219 = vpop.f32.mrf.mxu0
        %v2220 = vadd.f32 0.0, %v2219
        %v2221 = vpop.f32.mrf.mxu0
        %v2222 = vadd.f32 0.0, %v2221
        %v2223 = vpop.f32.mrf.mxu0
        %v2224 = vadd.f32 0.0, %v2223
        %2225 = vmatprep.mubr.bf16.mxu0 %v562
        %2226 = vmatmul.mubr.bf16.gmra.mxu0 %v561
        %v2227 = vpop.f32.mrf.mxu0
        %v2228 = vadd.f32 0.0, %v2227
        %v2229 = vpop.f32.mrf.mxu0
        %v2230 = vadd.f32 0.0, %v2229
        %v2231 = vpop.f32.mrf.mxu0
        %v2232 = vadd.f32 0.0, %v2231
        %v2233 = vpop.f32.mrf.mxu0
        %v2234 = vadd.f32 0.0, %v2233
        %2235 = vmatprep.mubr.bf16.mxu0 %v565
        %2236 = vmatmul.mubr.bf16.gmra.mxu0 %v564
        %v2237 = vpop.f32.mrf.mxu0
        %v2238 = vadd.f32 0.0, %v2237
        %v2239 = vpop.f32.mrf.mxu0
        %v2240 = vadd.f32 0.0, %v2239
        %v2241 = vpop.f32.mrf.mxu0
        %v2242 = vadd.f32 0.0, %v2241
        %v2243 = vpop.f32.mrf.mxu0
        %v2244 = vadd.f32 0.0, %v2243
        %2245 = vmatprep.mubr.bf16.mxu0 %v568
        %2246 = vmatmul.mubr.bf16.gmra.mxu0 %v567
        %v2247 = vpop.f32.mrf.mxu0
        %v2248 = vadd.f32 0.0, %v2247
        %v2249 = vpop.f32.mrf.mxu0
        %v2250 = vadd.f32 0.0, %v2249
        %v2251 = vpop.f32.mrf.mxu0
        %v2252 = vadd.f32 0.0, %v2251
        %v2253 = vpop.f32.mrf.mxu0
        %v2254 = vadd.f32 0.0, %v2253
        %2255 = vmatprep.mubr.bf16.mxu0 %v571
        %2256 = vmatmul.mubr.bf16.gmra.mxu0 %v570
        %v2257 = vpop.f32.mrf.mxu0
        %v2258 = vadd.f32 0.0, %v2257
        %v2259 = vpop.f32.mrf.mxu0
        %v2260 = vadd.f32 0.0, %v2259
        %v2261 = vpop.f32.mrf.mxu0
        %v2262 = vadd.f32 0.0, %v2261
        %v2263 = vpop.f32.mrf.mxu0
        %v2264 = vadd.f32 0.0, %v2263
        %2265 = vdwg.mxu0
        %2266 = vmatprep.subr.bf16.mxu0 %v1481
        %2267 = vmatpush1.bf16.msra.mxu0 %v1480
        %2268 = vmatprep.subr.bf16.mxu0 %v1472
        %2269 = vmatpush1.bf16.msra.mxu0 %v1471
        %2270 = vmatprep.subr.bf16.mxu0 %v1463
        %2271 = vmatpush1.bf16.msra.mxu0 %v1462
        %2272 = vmatprep.subr.bf16.mxu0 %v1454
        %2273 = vmatpush1.bf16.msra.mxu0 %v1453
        %2274 = vmatprep.subr.bf16.mxu0 %v1445
        %2275 = vmatpush1.bf16.msra.mxu0 %v1444
        %2276 = vmatprep.subr.bf16.mxu0 %v1436
        %2277 = vmatpush1.bf16.msra.mxu0 %v1435
        %2278 = vmatprep.subr.bf16.mxu0 %v1427
        %2279 = vmatpush1.bf16.msra.mxu0 %v1426
        %2280 = vmatprep.subr.bf16.mxu0 %v1418
        %2281 = vmatpush1.bf16.msra.mxu0 %v1417
        %2282 = vmatprep.subr.bf16.mxu0 0
        %2283 = vmatpush2.bf16.msra.mxu0 0
        %2284 = vmatprep.subr.bf16.mxu0 0
        %2285 = vmatpush2.bf16.msra.mxu0 0
        %2286 = vmatprep.subr.bf16.mxu0 0
        %2287 = vmatpush2.bf16.msra.mxu0 0
        %2288 = vmatprep.subr.bf16.mxu0 0
        %2289 = vmatpush2.bf16.msra.mxu0 0
        %2290 = vmatprep.subr.bf16.mxu0 0
        %2291 = vmatpush2.bf16.msra.mxu0 0
        %2292 = vmatprep.subr.bf16.mxu0 0
        %2293 = vmatpush2.bf16.msra.mxu0 0
        %2294 = vmatprep.subr.bf16.mxu0 0
        %2295 = vmatpush2.bf16.msra.mxu0 0
        %2296 = vmatprep.subr.bf16.mxu0 0
        %2297 = vmatpush2.bf16.msra.mxu0 0
        %2298 = vmatprep.mubr.bf16.mxu0 0
        %2299 = vmatmul.mubr.bf16.gmra.mxu0 %v551
        %v2300 = vpop.f32.mrf.mxu0
        %v2301 = vadd.f32 %v2188, %v2300
        %v2302 = vpop.f32.mrf.mxu0
        %v2303 = vadd.f32 %v2190, %v2302
        %v2304 = vpop.f32.mrf.mxu0
        %v2305 = vadd.f32 %v2192, %v2304
        %v2306 = vpop.f32.mrf.mxu0
        %v2307 = vadd.f32 %v2194, %v2306
        %2308 = vmatprep.mubr.bf16.mxu0 0
        %2309 = vmatmul.mubr.bf16.gmra.mxu0 %v554
        %v2310 = vpop.f32.mrf.mxu0
        %v2311 = vadd.f32 %v2198, %v2310
        %v2312 = vpop.f32.mrf.mxu0
        %v2313 = vadd.f32 %v2200, %v2312
        %v2314 = vpop.f32.mrf.mxu0
        %v2315 = vadd.f32 %v2202, %v2314
        %v2316 = vpop.f32.mrf.mxu0
        %v2317 = vadd.f32 %v2204, %v2316
        %2318 = vmatprep.mubr.bf16.mxu0 0
        %2319 = vmatmul.mubr.bf16.gmra.mxu0 %v557
        %v2320 = vpop.f32.mrf.mxu0
        %v2321 = vadd.f32 %v2208, %v2320
        %v2322 = vpop.f32.mrf.mxu0
        %v2323 = vadd.f32 %v2210, %v2322
        %v2324 = vpop.f32.mrf.mxu0
        %v2325 = vadd.f32 %v2212, %v2324
        %v2326 = vpop.f32.mrf.mxu0
        %v2327 = vadd.f32 %v2214, %v2326
        %2328 = vmatprep.mubr.bf16.mxu0 0
        %2329 = vmatmul.mubr.bf16.gmra.mxu0 %v560
        %v2330 = vpop.f32.mrf.mxu0
        %v2331 = vadd.f32 %v2218, %v2330
        %v2332 = vpop.f32.mrf.mxu0
        %v2333 = vadd.f32 %v2220, %v2332
        %v2334 = vpop.f32.mrf.mxu0
        %v2335 = vadd.f32 %v2222, %v2334
        %v2336 = vpop.f32.mrf.mxu0
        %v2337 = vadd.f32 %v2224, %v2336
        %2338 = vmatprep.mubr.bf16.mxu0 0
        %2339 = vmatmul.mubr.bf16.gmra.mxu0 %v563
        %v2340 = vpop.f32.mrf.mxu0
        %v2341 = vadd.f32 %v2228, %v2340
        %v2342 = vpop.f32.mrf.mxu0
        %v2343 = vadd.f32 %v2230, %v2342
        %v2344 = vpop.f32.mrf.mxu0
        %v2345 = vadd.f32 %v2232, %v2344
        %v2346 = vpop.f32.mrf.mxu0
        %v2347 = vadd.f32 %v2234, %v2346
        %2348 = vmatprep.mubr.bf16.mxu0 0
        %2349 = vmatmul.mubr.bf16.gmra.mxu0 %v566
        %v2350 = vpop.f32.mrf.mxu0
        %v2351 = vadd.f32 %v2238, %v2350
        %v2352 = vpop.f32.mrf.mxu0
        %v2353 = vadd.f32 %v2240, %v2352
        %v2354 = vpop.f32.mrf.mxu0
        %v2355 = vadd.f32 %v2242, %v2354
        %v2356 = vpop.f32.mrf.mxu0
        %v2357 = vadd.f32 %v2244, %v2356
        %2358 = vmatprep.mubr.bf16.mxu0 0
        %2359 = vmatmul.mubr.bf16.gmra.mxu0 %v569
        %v2360 = vpop.f32.mrf.mxu0
        %v2361 = vadd.f32 %v2248, %v2360
        %v2362 = vpop.f32.mrf.mxu0
        %v2363 = vadd.f32 %v2250, %v2362
        %v2364 = vpop.f32.mrf.mxu0
        %v2365 = vadd.f32 %v2252, %v2364
        %v2366 = vpop.f32.mrf.mxu0
        %v2367 = vadd.f32 %v2254, %v2366
        %2368 = vmatprep.mubr.bf16.mxu0 0
        %2369 = vmatmul.mubr.bf16.gmra.mxu0 %v572
        %v2370 = vpop.f32.mrf.mxu0
        %v2371 = vadd.f32 %v2258, %v2370
        %v2372 = vpop.f32.mrf.mxu0
        %v2373 = vadd.f32 %v2260, %v2372
        %v2374 = vpop.f32.mrf.mxu0
        %v2375 = vadd.f32 %v2262, %v2374
        %v2376 = vpop.f32.mrf.mxu0
        %v2377 = vadd.f32 %v2264, %v2376
        %2378 = vdwg.mxu0
        %2379 = vmatprep.subr.bf16.mxu0 %v1339
        %2380 = vmatpush1.bf16.msra.mxu0 %v1338
        %2381 = vmatprep.subr.bf16.mxu0 %v1330
        %2382 = vmatpush1.bf16.msra.mxu0 %v1329
        %2383 = vmatprep.subr.bf16.mxu0 %v1321
        %2384 = vmatpush1.bf16.msra.mxu0 %v1320
        %2385 = vmatprep.subr.bf16.mxu0 %v1312
        %2386 = vmatpush1.bf16.msra.mxu0 %v1311
        %2387 = vmatprep.subr.bf16.mxu0 %v1303
        %2388 = vmatpush1.bf16.msra.mxu0 %v1302
        %2389 = vmatprep.subr.bf16.mxu0 %v1294
        %2390 = vmatpush1.bf16.msra.mxu0 %v1293
        %2391 = vmatprep.subr.bf16.mxu0 %v1285
        %2392 = vmatpush1.bf16.msra.mxu0 %v1284
        %2393 = vmatprep.subr.bf16.mxu0 %v1276
        %2394 = vmatpush1.bf16.msra.mxu0 %v1275
        %2395 = vmatprep.subr.bf16.mxu0 %v1411
        %2396 = vmatpush2.bf16.msra.mxu0 %v1410
        %2397 = vmatprep.subr.bf16.mxu0 %v1402
        %2398 = vmatpush2.bf16.msra.mxu0 %v1401
        %2399 = vmatprep.subr.bf16.mxu0 %v1393
        %2400 = vmatpush2.bf16.msra.mxu0 %v1392
        %2401 = vmatprep.subr.bf16.mxu0 %v1384
        %2402 = vmatpush2.bf16.msra.mxu0 %v1383
        %2403 = vmatprep.subr.bf16.mxu0 %v1375
        %2404 = vmatpush2.bf16.msra.mxu0 %v1374
        %2405 = vmatprep.subr.bf16.mxu0 %v1366
        %2406 = vmatpush2.bf16.msra.mxu0 %v1365
        %2407 = vmatprep.subr.bf16.mxu0 %v1357
        %2408 = vmatpush2.bf16.msra.mxu0 %v1356
        %2409 = vmatprep.subr.bf16.mxu0 %v1348
        %2410 = vmatpush2.bf16.msra.mxu0 %v1347
        %2411 = vmatprep.mubr.bf16.mxu0 %v550
        %2412 = vmatmul.mubr.bf16.gmra.mxu0 %v549
        %v2413 = vpop.f32.mrf.mxu0
        %v2414 = vadd.f32 0.0, %v2413
        %v2415 = vpop.f32.mrf.mxu0
        %v2416 = vadd.f32 0.0, %v2415
        %v2417 = vpop.f32.mrf.mxu0
        %v2418 = vadd.f32 0.0, %v2417
        %v2419 = vpop.f32.mrf.mxu0
        %v2420 = vadd.f32 0.0, %v2419
        %2421 = vmatprep.mubr.bf16.mxu0 %v553
        %2422 = vmatmul.mubr.bf16.gmra.mxu0 %v552
        %v2423 = vpop.f32.mrf.mxu0
        %v2424 = vadd.f32 0.0, %v2423
        %v2425 = vpop.f32.mrf.mxu0
        %v2426 = vadd.f32 0.0, %v2425
        %v2427 = vpop.f32.mrf.mxu0
        %v2428 = vadd.f32 0.0, %v2427
        %v2429 = vpop.f32.mrf.mxu0
        %v2430 = vadd.f32 0.0, %v2429
        %2431 = vmatprep.mubr.bf16.mxu0 %v556
        %2432 = vmatmul.mubr.bf16.gmra.mxu0 %v555
        %v2433 = vpop.f32.mrf.mxu0
        %v2434 = vadd.f32 0.0, %v2433
        %v2435 = vpop.f32.mrf.mxu0
        %v2436 = vadd.f32 0.0, %v2435
        %v2437 = vpop.f32.mrf.mxu0
        %v2438 = vadd.f32 0.0, %v2437
        %v2439 = vpop.f32.mrf.mxu0
        %v2440 = vadd.f32 0.0, %v2439
        %2441 = vmatprep.mubr.bf16.mxu0 %v559
        %2442 = vmatmul.mubr.bf16.gmra.mxu0 %v558
        %v2443 = vpop.f32.mrf.mxu0
        %v2444 = vadd.f32 0.0, %v2443
        %v2445 = vpop.f32.mrf.mxu0
        %v2446 = vadd.f32 0.0, %v2445
        %v2447 = vpop.f32.mrf.mxu0
        %v2448 = vadd.f32 0.0, %v2447
        %v2449 = vpop.f32.mrf.mxu0
        %v2450 = vadd.f32 0.0, %v2449
        %2451 = vmatprep.mubr.bf16.mxu0 %v562
        %2452 = vmatmul.mubr.bf16.gmra.mxu0 %v561
        %v2453 = vpop.f32.mrf.mxu0
        %v2454 = vadd.f32 0.0, %v2453
        %v2455 = vpop.f32.mrf.mxu0
        %v2456 = vadd.f32 0.0, %v2455
        %v2457 = vpop.f32.mrf.mxu0
        %v2458 = vadd.f32 0.0, %v2457
        %v2459 = vpop.f32.mrf.mxu0
        %v2460 = vadd.f32 0.0, %v2459
        %2461 = vmatprep.mubr.bf16.mxu0 %v565
        %2462 = vmatmul.mubr.bf16.gmra.mxu0 %v564
        %v2463 = vpop.f32.mrf.mxu0
        %v2464 = vadd.f32 0.0, %v2463
        %v2465 = vpop.f32.mrf.mxu0
        %v2466 = vadd.f32 0.0, %v2465
        %v2467 = vpop.f32.mrf.mxu0
        %v2468 = vadd.f32 0.0, %v2467
        %v2469 = vpop.f32.mrf.mxu0
        %v2470 = vadd.f32 0.0, %v2469
        %2471 = vmatprep.mubr.bf16.mxu0 %v568
        %2472 = vmatmul.mubr.bf16.gmra.mxu0 %v567
        %v2473 = vpop.f32.mrf.mxu0
        %v2474 = vadd.f32 0.0, %v2473
        %v2475 = vpop.f32.mrf.mxu0
        %v2476 = vadd.f32 0.0, %v2475
        %v2477 = vpop.f32.mrf.mxu0
        %v2478 = vadd.f32 0.0, %v2477
        %v2479 = vpop.f32.mrf.mxu0
        %v2480 = vadd.f32 0.0, %v2479
        %2481 = vmatprep.mubr.bf16.mxu0 %v571
        %2482 = vmatmul.mubr.bf16.gmra.mxu0 %v570
        %v2483 = vpop.f32.mrf.mxu0
        %v2484 = vadd.f32 0.0, %v2483
        %v2485 = vpop.f32.mrf.mxu0
        %v2486 = vadd.f32 0.0, %v2485
        %v2487 = vpop.f32.mrf.mxu0
        %v2488 = vadd.f32 0.0, %v2487
        %v2489 = vpop.f32.mrf.mxu0
        %v2490 = vadd.f32 0.0, %v2489
        %2491 = vdwg.mxu0
        %2492 = vmatprep.subr.bf16.mxu0 %v1483
        %2493 = vmatpush1.bf16.msra.mxu0 %v1482
        %2494 = vmatprep.subr.bf16.mxu0 %v1474
        %2495 = vmatpush1.bf16.msra.mxu0 %v1473
        %2496 = vmatprep.subr.bf16.mxu0 %v1465
        %2497 = vmatpush1.bf16.msra.mxu0 %v1464
        %2498 = vmatprep.subr.bf16.mxu0 %v1456
        %2499 = vmatpush1.bf16.msra.mxu0 %v1455
        %2500 = vmatprep.subr.bf16.mxu0 %v1447
        %2501 = vmatpush1.bf16.msra.mxu0 %v1446
        %2502 = vmatprep.subr.bf16.mxu0 %v1438
        %2503 = vmatpush1.bf16.msra.mxu0 %v1437
        %2504 = vmatprep.subr.bf16.mxu0 %v1429
        %2505 = vmatpush1.bf16.msra.mxu0 %v1428
        %2506 = vmatprep.subr.bf16.mxu0 %v1420
        %2507 = vmatpush1.bf16.msra.mxu0 %v1419
        %2508 = vmatprep.subr.bf16.mxu0 0
        %2509 = vmatpush2.bf16.msra.mxu0 0
        %2510 = vmatprep.subr.bf16.mxu0 0
        %2511 = vmatpush2.bf16.msra.mxu0 0
        %2512 = vmatprep.subr.bf16.mxu0 0
        %2513 = vmatpush2.bf16.msra.mxu0 0
        %2514 = vmatprep.subr.bf16.mxu0 0
        %2515 = vmatpush2.bf16.msra.mxu0 0
        %2516 = vmatprep.subr.bf16.mxu0 0
        %2517 = vmatpush2.bf16.msra.mxu0 0
        %2518 = vmatprep.subr.bf16.mxu0 0
        %2519 = vmatpush2.bf16.msra.mxu0 0
        %2520 = vmatprep.subr.bf16.mxu0 0
        %2521 = vmatpush2.bf16.msra.mxu0 0
        %2522 = vmatprep.subr.bf16.mxu0 0
        %2523 = vmatpush2.bf16.msra.mxu0 0
        %2524 = vmatprep.mubr.bf16.mxu0 0
        %2525 = vmatmul.mubr.bf16.gmra.mxu0 %v551
        %v2526 = vpop.f32.mrf.mxu0
        %v2527 = vadd.f32 %v2414, %v2526
        %v2528 = vpop.f32.mrf.mxu0
        %v2529 = vadd.f32 %v2416, %v2528
        %v2530 = vpop.f32.mrf.mxu0
        %v2531 = vadd.f32 %v2418, %v2530
        %v2532 = vpop.f32.mrf.mxu0
        %v2533 = vadd.f32 %v2420, %v2532
        %2534 = vmatprep.mubr.bf16.mxu0 0
        %2535 = vmatmul.mubr.bf16.gmra.mxu0 %v554
        %v2536 = vpop.f32.mrf.mxu0
        %v2537 = vadd.f32 %v2424, %v2536
        %v2538 = vpop.f32.mrf.mxu0
        %v2539 = vadd.f32 %v2426, %v2538
        %v2540 = vpop.f32.mrf.mxu0
        %v2541 = vadd.f32 %v2428, %v2540
        %v2542 = vpop.f32.mrf.mxu0
        %v2543 = vadd.f32 %v2430, %v2542
        %2544 = vmatprep.mubr.bf16.mxu0 0
        %2545 = vmatmul.mubr.bf16.gmra.mxu0 %v557
        %v2546 = vpop.f32.mrf.mxu0
        %v2547 = vadd.f32 %v2434, %v2546
        %v2548 = vpop.f32.mrf.mxu0
        %v2549 = vadd.f32 %v2436, %v2548
        %v2550 = vpop.f32.mrf.mxu0
        %v2551 = vadd.f32 %v2438, %v2550
        %v2552 = vpop.f32.mrf.mxu0
        %v2553 = vadd.f32 %v2440, %v2552
        %2554 = vmatprep.mubr.bf16.mxu0 0
        %2555 = vmatmul.mubr.bf16.gmra.mxu0 %v560
        %v2556 = vpop.f32.mrf.mxu0
        %v2557 = vadd.f32 %v2444, %v2556
        %v2558 = vpop.f32.mrf.mxu0
        %v2559 = vadd.f32 %v2446, %v2558
        %v2560 = vpop.f32.mrf.mxu0
        %v2561 = vadd.f32 %v2448, %v2560
        %v2562 = vpop.f32.mrf.mxu0
        %v2563 = vadd.f32 %v2450, %v2562
        %2564 = vmatprep.mubr.bf16.mxu0 0
        %2565 = vmatmul.mubr.bf16.gmra.mxu0 %v563
        %v2566 = vpop.f32.mrf.mxu0
        %v2567 = vadd.f32 %v2454, %v2566
        %v2568 = vpop.f32.mrf.mxu0
        %v2569 = vadd.f32 %v2456, %v2568
        %v2570 = vpop.f32.mrf.mxu0
        %v2571 = vadd.f32 %v2458, %v2570
        %v2572 = vpop.f32.mrf.mxu0
        %v2573 = vadd.f32 %v2460, %v2572
        %2574 = vmatprep.mubr.bf16.mxu0 0
        %2575 = vmatmul.mubr.bf16.gmra.mxu0 %v566
        %v2576 = vpop.f32.mrf.mxu0
        %v2577 = vadd.f32 %v2464, %v2576
        %v2578 = vpop.f32.mrf.mxu0
        %v2579 = vadd.f32 %v2466, %v2578
        %v2580 = vpop.f32.mrf.mxu0
        %v2581 = vadd.f32 %v2468, %v2580
        %v2582 = vpop.f32.mrf.mxu0
        %v2583 = vadd.f32 %v2470, %v2582
        %2584 = vmatprep.mubr.bf16.mxu0 0
        %2585 = vmatmul.mubr.bf16.gmra.mxu0 %v569
        %v2586 = vpop.f32.mrf.mxu0
        %v2587 = vadd.f32 %v2474, %v2586
        %v2588 = vpop.f32.mrf.mxu0
        %v2589 = vadd.f32 %v2476, %v2588
        %v2590 = vpop.f32.mrf.mxu0
        %v2591 = vadd.f32 %v2478, %v2590
        %v2592 = vpop.f32.mrf.mxu0
        %v2593 = vadd.f32 %v2480, %v2592
        %2594 = vmatprep.mubr.bf16.mxu0 0
        %2595 = vmatmul.mubr.bf16.gmra.mxu0 %v572
        %v2596 = vpop.f32.mrf.mxu0
        %v2597 = vadd.f32 %v2484, %v2596
        %v2598 = vpop.f32.mrf.mxu0
        %v2599 = vadd.f32 %v2486, %v2598
        %v2600 = vpop.f32.mrf.mxu0
        %v2601 = vadd.f32 %v2488, %v2600
        %v2602 = vpop.f32.mrf.mxu0
        %v2603 = vadd.f32 %v2490, %v2602
        %2604 = vdwg.mxu0
        %2605 = vmatprep.subr.bf16.mxu0 0
        %2606 = vmatpush1.bf16.msra.mxu0 %v1340
        %2607 = vmatprep.subr.bf16.mxu0 0
        %2608 = vmatpush1.bf16.msra.mxu0 %v1331
        %2609 = vmatprep.subr.bf16.mxu0 0
        %2610 = vmatpush1.bf16.msra.mxu0 %v1322
        %2611 = vmatprep.subr.bf16.mxu0 0
        %2612 = vmatpush1.bf16.msra.mxu0 %v1313
        %2613 = vmatprep.subr.bf16.mxu0 0
        %2614 = vmatpush1.bf16.msra.mxu0 %v1304
        %2615 = vmatprep.subr.bf16.mxu0 0
        %2616 = vmatpush1.bf16.msra.mxu0 %v1295
        %2617 = vmatprep.subr.bf16.mxu0 0
        %2618 = vmatpush1.bf16.msra.mxu0 %v1286
        %2619 = vmatprep.subr.bf16.mxu0 0
        %2620 = vmatpush1.bf16.msra.mxu0 %v1277
        %2621 = vmatprep.subr.bf16.mxu0 0
        %2622 = vmatpush2.bf16.msra.mxu0 %v1412
        %2623 = vmatprep.subr.bf16.mxu0 0
        %2624 = vmatpush2.bf16.msra.mxu0 %v1403
        %2625 = vmatprep.subr.bf16.mxu0 0
        %2626 = vmatpush2.bf16.msra.mxu0 %v1394
        %2627 = vmatprep.subr.bf16.mxu0 0
        %2628 = vmatpush2.bf16.msra.mxu0 %v1385
        %2629 = vmatprep.subr.bf16.mxu0 0
        %2630 = vmatpush2.bf16.msra.mxu0 %v1376
        %2631 = vmatprep.subr.bf16.mxu0 0
        %2632 = vmatpush2.bf16.msra.mxu0 %v1367
        %2633 = vmatprep.subr.bf16.mxu0 0
        %2634 = vmatpush2.bf16.msra.mxu0 %v1358
        %2635 = vmatprep.subr.bf16.mxu0 0
        %2636 = vmatpush2.bf16.msra.mxu0 %v1349
        %2637 = vmatprep.mubr.bf16.mxu0 %v550
        %2638 = vmatmul.mubr.bf16.gmra.mxu0 %v549
        %v2639 = vpop.f32.mrf.mxu0
        %v2640 = vadd.f32 0.0, %v2639
        %v2641 = vpop.f32.mrf.mxu0
        %v2642 = vpop.f32.mrf.mxu0
        %v2643 = vadd.f32 0.0, %v2642
        %v2644 = vpop.f32.mrf.mxu0
        %2645 = vmatprep.mubr.bf16.mxu0 %v553
        %2646 = vmatmul.mubr.bf16.gmra.mxu0 %v552
        %v2647 = vpop.f32.mrf.mxu0
        %v2648 = vadd.f32 0.0, %v2647
        %v2649 = vpop.f32.mrf.mxu0
        %v2650 = vpop.f32.mrf.mxu0
        %v2651 = vadd.f32 0.0, %v2650
        %v2652 = vpop.f32.mrf.mxu0
        %2653 = vmatprep.mubr.bf16.mxu0 %v556
        %2654 = vmatmul.mubr.bf16.gmra.mxu0 %v555
        %v2655 = vpop.f32.mrf.mxu0
        %v2656 = vadd.f32 0.0, %v2655
        %v2657 = vpop.f32.mrf.mxu0
        %v2658 = vpop.f32.mrf.mxu0
        %v2659 = vadd.f32 0.0, %v2658
        %v2660 = vpop.f32.mrf.mxu0
        %2661 = vmatprep.mubr.bf16.mxu0 %v559
        %2662 = vmatmul.mubr.bf16.gmra.mxu0 %v558
        %v2663 = vpop.f32.mrf.mxu0
        %v2664 = vadd.f32 0.0, %v2663
        %v2665 = vpop.f32.mrf.mxu0
        %v2666 = vpop.f32.mrf.mxu0
        %v2667 = vadd.f32 0.0, %v2666
        %v2668 = vpop.f32.mrf.mxu0
        %2669 = vmatprep.mubr.bf16.mxu0 %v562
        %2670 = vmatmul.mubr.bf16.gmra.mxu0 %v561
        %v2671 = vpop.f32.mrf.mxu0
        %v2672 = vadd.f32 0.0, %v2671
        %v2673 = vpop.f32.mrf.mxu0
        %v2674 = vpop.f32.mrf.mxu0
        %v2675 = vadd.f32 0.0, %v2674
        %v2676 = vpop.f32.mrf.mxu0
        %2677 = vmatprep.mubr.bf16.mxu0 %v565
        %2678 = vmatmul.mubr.bf16.gmra.mxu0 %v564
        %v2679 = vpop.f32.mrf.mxu0
        %v2680 = vadd.f32 0.0, %v2679
        %v2681 = vpop.f32.mrf.mxu0
        %v2682 = vpop.f32.mrf.mxu0
        %v2683 = vadd.f32 0.0, %v2682
        %v2684 = vpop.f32.mrf.mxu0
        %2685 = vmatprep.mubr.bf16.mxu0 %v568
        %2686 = vmatmul.mubr.bf16.gmra.mxu0 %v567
        %v2687 = vpop.f32.mrf.mxu0
        %v2688 = vadd.f32 0.0, %v2687
        %v2689 = vpop.f32.mrf.mxu0
        %v2690 = vpop.f32.mrf.mxu0
        %v2691 = vadd.f32 0.0, %v2690
        %v2692 = vpop.f32.mrf.mxu0
        %2693 = vmatprep.mubr.bf16.mxu0 %v571
        %2694 = vmatmul.mubr.bf16.gmra.mxu0 %v570
        %v2695 = vpop.f32.mrf.mxu0
        %v2696 = vadd.f32 0.0, %v2695
        %v2697 = vpop.f32.mrf.mxu0
        %v2698 = vpop.f32.mrf.mxu0
        %v2699 = vadd.f32 0.0, %v2698
        %v2700 = vpop.f32.mrf.mxu0
        %2701 = vdwg.mxu0
        %2702 = vmatprep.subr.bf16.mxu0 0
        %2703 = vmatpush1.bf16.msra.mxu0 %v1484
        %2704 = vmatprep.subr.bf16.mxu0 0
        %2705 = vmatpush1.bf16.msra.mxu0 %v1475
        %2706 = vmatprep.subr.bf16.mxu0 0
        %2707 = vmatpush1.bf16.msra.mxu0 %v1466
        %2708 = vmatprep.subr.bf16.mxu0 0
        %2709 = vmatpush1.bf16.msra.mxu0 %v1457
        %2710 = vmatprep.subr.bf16.mxu0 0
        %2711 = vmatpush1.bf16.msra.mxu0 %v1448
        %2712 = vmatprep.subr.bf16.mxu0 0
        %2713 = vmatpush1.bf16.msra.mxu0 %v1439
        %2714 = vmatprep.subr.bf16.mxu0 0
        %2715 = vmatpush1.bf16.msra.mxu0 %v1430
        %2716 = vmatprep.subr.bf16.mxu0 0
        %2717 = vmatpush1.bf16.msra.mxu0 %v1421
        %2718 = vmatprep.subr.bf16.mxu0 0
        %2719 = vmatpush2.bf16.msra.mxu0 0
        %2720 = vmatprep.subr.bf16.mxu0 0
        %2721 = vmatpush2.bf16.msra.mxu0 0
        %2722 = vmatprep.subr.bf16.mxu0 0
        %2723 = vmatpush2.bf16.msra.mxu0 0
        %2724 = vmatprep.subr.bf16.mxu0 0
        %2725 = vmatpush2.bf16.msra.mxu0 0
        %2726 = vmatprep.subr.bf16.mxu0 0
        %2727 = vmatpush2.bf16.msra.mxu0 0
        %2728 = vmatprep.subr.bf16.mxu0 0
        %2729 = vmatpush2.bf16.msra.mxu0 0
        %2730 = vmatprep.subr.bf16.mxu0 0
        %2731 = vmatpush2.bf16.msra.mxu0 0
        %2732 = vmatprep.subr.bf16.mxu0 0
        %2733 = vmatpush2.bf16.msra.mxu0 0
        %2734 = vmatprep.mubr.bf16.mxu0 0
        %2735 = vmatmul.mubr.bf16.gmra.mxu0 %v551
        %v2736 = vpop.f32.mrf.mxu0
        %v2737 = vadd.f32 %v2640, %v2736
        %v2738 = vpop.f32.mrf.mxu0
        %v2739 = vpop.f32.mrf.mxu0
        %v2740 = vadd.f32 %v2643, %v2739
        %v2741 = vpop.f32.mrf.mxu0
        %2742 = vmatprep.mubr.bf16.mxu0 0
        %2743 = vmatmul.mubr.bf16.gmra.mxu0 %v554
        %v2744 = vpop.f32.mrf.mxu0
        %v2745 = vadd.f32 %v2648, %v2744
        %v2746 = vpop.f32.mrf.mxu0
        %v2747 = vpop.f32.mrf.mxu0
        %v2748 = vadd.f32 %v2651, %v2747
        %v2749 = vpop.f32.mrf.mxu0
        %2750 = vmatprep.mubr.bf16.mxu0 0
        %2751 = vmatmul.mubr.bf16.gmra.mxu0 %v557
        %v2752 = vpop.f32.mrf.mxu0
        %v2753 = vadd.f32 %v2656, %v2752
        %v2754 = vpop.f32.mrf.mxu0
        %v2755 = vpop.f32.mrf.mxu0
        %v2756 = vadd.f32 %v2659, %v2755
        %v2757 = vpop.f32.mrf.mxu0
        %2758 = vmatprep.mubr.bf16.mxu0 0
        %2759 = vmatmul.mubr.bf16.gmra.mxu0 %v560
        %v2760 = vpop.f32.mrf.mxu0
        %v2761 = vadd.f32 %v2664, %v2760
        %v2762 = vpop.f32.mrf.mxu0
        %v2763 = vpop.f32.mrf.mxu0
        %v2764 = vadd.f32 %v2667, %v2763
        %v2765 = vpop.f32.mrf.mxu0
        %2766 = vmatprep.mubr.bf16.mxu0 0
        %2767 = vmatmul.mubr.bf16.gmra.mxu0 %v563
        %v2768 = vpop.f32.mrf.mxu0
        %v2769 = vadd.f32 %v2672, %v2768
        %v2770 = vpop.f32.mrf.mxu0
        %v2771 = vpop.f32.mrf.mxu0
        %v2772 = vadd.f32 %v2675, %v2771
        %v2773 = vpop.f32.mrf.mxu0
        %2774 = vmatprep.mubr.bf16.mxu0 0
        %2775 = vmatmul.mubr.bf16.gmra.mxu0 %v566
        %v2776 = vpop.f32.mrf.mxu0
        %v2777 = vadd.f32 %v2680, %v2776
        %v2778 = vpop.f32.mrf.mxu0
        %v2779 = vpop.f32.mrf.mxu0
        %v2780 = vadd.f32 %v2683, %v2779
        %v2781 = vpop.f32.mrf.mxu0
        %2782 = vmatprep.mubr.bf16.mxu0 0
        %2783 = vmatmul.mubr.bf16.gmra.mxu0 %v569
        %v2784 = vpop.f32.mrf.mxu0
        %v2785 = vadd.f32 %v2688, %v2784
        %v2786 = vpop.f32.mrf.mxu0
        %v2787 = vpop.f32.mrf.mxu0
        %v2788 = vadd.f32 %v2691, %v2787
        %v2789 = vpop.f32.mrf.mxu0
        %2790 = vmatprep.mubr.bf16.mxu0 0
        %2791 = vmatmul.mubr.bf16.gmra.mxu0 %v572
        %v2792 = vpop.f32.mrf.mxu0
        %v2793 = vadd.f32 %v2696, %v2792
        %v2794 = vpop.f32.mrf.mxu0
        %v2795 = vpop.f32.mrf.mxu0
        %v2796 = vadd.f32 %v2699, %v2795
        %v2797 = vpop.f32.mrf.mxu0
        %2798 = vdwg.mxu0
        %v2799 = vpack.c.bf16 %v1853, %v1849
        %v2800 = vpack.c.bf16 %v1855, %v1851
        %v2801 = vpack.c.bf16 %v2079, %v2075
        %v2802 = vpack.c.bf16 %v2081, %v2077
        %v2803 = vpack.c.bf16 %v2305, %v2301
        %v2804 = vpack.c.bf16 %v2307, %v2303
        %v2805 = vpack.c.bf16 %v2531, %v2527
        %v2806 = vpack.c.bf16 %v2533, %v2529
        %v2807 = vpack.c.bf16 %v2740, %v2737
        %v2808 = vpack.c.bf16 %v1863, %v1859
        %v2809 = vpack.c.bf16 %v1865, %v1861
        %v2810 = vpack.c.bf16 %v2089, %v2085
        %v2811 = vpack.c.bf16 %v2091, %v2087
        %v2812 = vpack.c.bf16 %v2315, %v2311
        %v2813 = vpack.c.bf16 %v2317, %v2313
        %v2814 = vpack.c.bf16 %v2541, %v2537
        %v2815 = vpack.c.bf16 %v2543, %v2539
        %v2816 = vpack.c.bf16 %v2748, %v2745
        %v2817 = vpack.c.bf16 %v1873, %v1869
        %v2818 = vpack.c.bf16 %v1875, %v1871
        %v2819 = vpack.c.bf16 %v2099, %v2095
        %v2820 = vpack.c.bf16 %v2101, %v2097
        %v2821 = vpack.c.bf16 %v2325, %v2321
        %v2822 = vpack.c.bf16 %v2327, %v2323
        %v2823 = vpack.c.bf16 %v2551, %v2547
        %v2824 = vpack.c.bf16 %v2553, %v2549
        %v2825 = vpack.c.bf16 %v2756, %v2753
        %v2826 = vpack.c.bf16 %v1883, %v1879
        %v2827 = vpack.c.bf16 %v1885, %v1881
        %v2828 = vpack.c.bf16 %v2109, %v2105
        %v2829 = vpack.c.bf16 %v2111, %v2107
        %v2830 = vpack.c.bf16 %v2335, %v2331
        %v2831 = vpack.c.bf16 %v2337, %v2333
        %v2832 = vpack.c.bf16 %v2561, %v2557
        %v2833 = vpack.c.bf16 %v2563, %v2559
        %v2834 = vpack.c.bf16 %v2764, %v2761
        %v2835 = vpack.c.bf16 %v1893, %v1889
        %v2836 = vpack.c.bf16 %v1895, %v1891
        %v2837 = vpack.c.bf16 %v2119, %v2115
        %v2838 = vpack.c.bf16 %v2121, %v2117
        %v2839 = vpack.c.bf16 %v2345, %v2341
        %v2840 = vpack.c.bf16 %v2347, %v2343
        %v2841 = vpack.c.bf16 %v2571, %v2567
        %v2842 = vpack.c.bf16 %v2573, %v2569
        %v2843 = vpack.c.bf16 %v2772, %v2769
        %v2844 = vpack.c.bf16 %v1903, %v1899
        %v2845 = vpack.c.bf16 %v1905, %v1901
        %v2846 = vpack.c.bf16 %v2129, %v2125
        %v2847 = vpack.c.bf16 %v2131, %v2127
        %v2848 = vpack.c.bf16 %v2355, %v2351
        %v2849 = vpack.c.bf16 %v2357, %v2353
        %v2850 = vpack.c.bf16 %v2581, %v2577
        %v2851 = vpack.c.bf16 %v2583, %v2579
        %v2852 = vpack.c.bf16 %v2780, %v2777
        %v2853 = vpack.c.bf16 %v1913, %v1909
        %v2854 = vpack.c.bf16 %v1915, %v1911
        %v2855 = vpack.c.bf16 %v2139, %v2135
        %v2856 = vpack.c.bf16 %v2141, %v2137
        %v2857 = vpack.c.bf16 %v2365, %v2361
        %v2858 = vpack.c.bf16 %v2367, %v2363
        %v2859 = vpack.c.bf16 %v2591, %v2587
        %v2860 = vpack.c.bf16 %v2593, %v2589
        %v2861 = vpack.c.bf16 %v2788, %v2785
        %v2862 = vpack.c.bf16 %v1923, %v1919
        %v2863 = vpack.c.bf16 %v1925, %v1921
        %v2864 = vpack.c.bf16 %v2149, %v2145
        %v2865 = vpack.c.bf16 %v2151, %v2147
        %v2866 = vpack.c.bf16 %v2375, %v2371
        %v2867 = vpack.c.bf16 %v2377, %v2373
        %v2868 = vpack.c.bf16 %v2601, %v2597
        %v2869 = vpack.c.bf16 %v2603, %v2599
        %v2870 = vpack.c.bf16 %v2796, %v2793
        %v2871 = vlaneseq
        %v2872 = vshrl.u32 %v2871, 7
        %v2873 = vadd.s32 %v2872, 8
        %v2874 = vadd.s32 %v2872, 16
        %v2875 = vadd.s32 %v2872, 24
        %v2876 = vadd.s32 %v2872, 32
        %v2877 = vadd.s32 %v2872, 40
        %v2878 = vadd.s32 %v2872, 48
        %v2879 = vadd.s32 %v2872, 56
        %v2880 = vadd.s32 %v2872, 64
        %v2881 = vadd.s32 %v2872, 72
        %v2882 = vadd.s32 %v2872, 80
        %v2883 = vadd.s32 %v2872, 88
        %v2884 = vadd.s32 %v2872, 96
        %v2885 = vadd.s32 %v2872, 104
        %v2886 = vadd.s32 %v2872, 112
        %v2887 = vadd.s32 %v2872, 120
        %v2888 = vlaneseq
        %v2889 = vand.u32 %v2888, 127
        %vm2890 = vcmp.le.s32.totalorder %v2889, %v2872
        %vm2891 = vcmp.le.s32.totalorder %v2889, %v2873
        %vm2892 = vcmp.le.s32.totalorder %v2889, %v2874
        %vm2893 = vcmp.le.s32.totalorder %v2889, %v2875
        %vm2894 = vcmp.le.s32.totalorder %v2889, %v2876
        %vm2895 = vcmp.le.s32.totalorder %v2889, %v2877
        %vm2896 = vcmp.le.s32.totalorder %v2889, %v2878
        %vm2897 = vcmp.le.s32.totalorder %v2889, %v2879
        %vm2898 = vcmp.le.s32.totalorder %v2889, %v2880
        %vm2899 = vcmp.le.s32.totalorder %v2889, %v2881
        %vm2900 = vcmp.le.s32.totalorder %v2889, %v2882
        %vm2901 = vcmp.le.s32.totalorder %v2889, %v2883
        %vm2902 = vcmp.le.s32.totalorder %v2889, %v2884
        %vm2903 = vcmp.le.s32.totalorder %v2889, %v2885
        %vm2904 = vcmp.le.s32.totalorder %v2889, %v2886
        %vm2905 = vcmp.le.s32.totalorder %v2889, %v2887
        %v2906 = vsel %vm2890, 0.0, -1e+30
        %v2907 = vsel %vm2891, 0.0, -1e+30
        %v2908 = vsel %vm2892, 0.0, -1e+30
        %v2909 = vsel %vm2893, 0.0, -1e+30
        %v2910 = vsel %vm2894, 0.0, -1e+30
        %v2911 = vsel %vm2895, 0.0, -1e+30
        %v2912 = vsel %vm2896, 0.0, -1e+30
        %v2913 = vsel %vm2897, 0.0, -1e+30
        %v2914 = vsel %vm2898, 0.0, -1e+30
        %v2915 = vsel %vm2899, 0.0, -1e+30
        %v2916 = vsel %vm2900, 0.0, -1e+30
        %v2917 = vsel %vm2901, 0.0, -1e+30
        %v2918 = vsel %vm2902, 0.0, -1e+30
        %v2919 = vsel %vm2903, 0.0, -1e+30
        %v2920 = vsel %vm2904, 0.0, -1e+30
        %v2921 = vsel %vm2905, 0.0, -1e+30
        %vm2922 = vcmask 523264
        %v2924 = vsel %vm2922, %v2799, 0
        %v2927 = vsel %vm2922, %v2808, 0
        %v2930 = vsel %vm2922, %v2817, 0
        %v2933 = vsel %vm2922, %v2826, 0
        %v2936 = vsel %vm2922, %v2835, 0
        %v2939 = vsel %vm2922, %v2844, 0
        %v2942 = vsel %vm2922, %v2853, 0
        %v2945 = vsel %vm2922, %v2862, 0
        %v2948 = vsel %vm2922, %v2802, 0
        %v2951 = vsel %vm2922, %v2811, 0
        %v2954 = vsel %vm2922, %v2820, 0
        %v2957 = vsel %vm2922, %v2829, 0
        %v2960 = vsel %vm2922, %v2838, 0
        %v2963 = vsel %vm2922, %v2847, 0
        %v2966 = vsel %vm2922, %v2856, 0
        %v2969 = vsel %vm2922, %v2865, 0
        %2971 = vmatprep.subr.bf16.mxu0 0
        %2972 = vmatpush1.bf16.xpose.msra.mxu0 %v2969
        %2973 = vmatprep.subr.bf16.mxu0 0
        %2974 = vmatpush1.bf16.xpose.msra.mxu0 %v2966
        %2975 = vmatprep.subr.bf16.mxu0 0
        %2976 = vmatpush1.bf16.xpose.msra.mxu0 %v2963
        %2977 = vmatprep.subr.bf16.mxu0 0
        %2978 = vmatpush1.bf16.xpose.msra.mxu0 %v2960
        %2979 = vmatprep.subr.bf16.mxu0 0
        %2980 = vmatpush1.bf16.xpose.msra.mxu0 %v2957
        %2981 = vmatprep.subr.bf16.mxu0 0
        %2982 = vmatpush1.bf16.xpose.msra.mxu0 %v2954
        %2983 = vmatprep.subr.bf16.mxu0 0
        %2984 = vmatpush1.bf16.xpose.msra.mxu0 %v2951
        %2985 = vmatprep.subr.bf16.mxu0 0
        %2986 = vmatpush1.bf16.xpose.msra.mxu0 %v2948
        %2987 = vmatprep.subr.bf16.mxu0 0
        %2988 = vmatpush2.bf16.xpose.msra.mxu0 0
        %2989 = vmatprep.subr.bf16.mxu0 0
        %2990 = vmatpush2.bf16.xpose.msra.mxu0 0
        %2991 = vmatprep.subr.bf16.mxu0 0
        %2992 = vmatpush2.bf16.xpose.msra.mxu0 0
        %2993 = vmatprep.subr.bf16.mxu0 0
        %2994 = vmatpush2.bf16.xpose.msra.mxu0 0
        %2995 = vmatprep.subr.bf16.mxu0 0
        %2996 = vmatpush2.bf16.xpose.msra.mxu0 0
        %2997 = vmatprep.subr.bf16.mxu0 0
        %2998 = vmatpush2.bf16.xpose.msra.mxu0 0
        %2999 = vmatprep.subr.bf16.mxu0 0
        %3000 = vmatpush2.bf16.xpose.msra.mxu0 0
        %3001 = vmatprep.subr.bf16.mxu0 0
        %3002 = vmatpush2.bf16.xpose.msra.mxu0 0
        %3003 = vmatprep.mubr.bf16.mxu0 0
        %3004 = vmatmul.mubr.bf16.gmra.mxu0 %v2924
        %v3005 = vpop.f32.mrf.mxu0
        %v3006 = vadd.f32 %v2906, %v3005
        %v3007 = vpop.f32.mrf.mxu0
        %v3008 = vpop.f32.mrf.mxu0
        %v3009 = vadd.f32 %v2907, %v3008
        %v3010 = vpop.f32.mrf.mxu0
        %3011 = vmatprep.mubr.bf16.mxu0 0
        %3012 = vmatmul.mubr.bf16.gmra.mxu0 %v2927
        %v3013 = vpop.f32.mrf.mxu0
        %v3014 = vadd.f32 %v2908, %v3013
        %v3015 = vpop.f32.mrf.mxu0
        %v3016 = vpop.f32.mrf.mxu0
        %v3017 = vadd.f32 %v2909, %v3016
        %v3018 = vpop.f32.mrf.mxu0
        %3019 = vmatprep.mubr.bf16.mxu0 0
        %3020 = vmatmul.mubr.bf16.gmra.mxu0 %v2930
        %v3021 = vpop.f32.mrf.mxu0
        %v3022 = vadd.f32 %v2910, %v3021
        %v3023 = vpop.f32.mrf.mxu0
        %v3024 = vpop.f32.mrf.mxu0
        %v3025 = vadd.f32 %v2911, %v3024
        %v3026 = vpop.f32.mrf.mxu0
        %3027 = vmatprep.mubr.bf16.mxu0 0
        %3028 = vmatmul.mubr.bf16.gmra.mxu0 %v2933
        %v3029 = vpop.f32.mrf.mxu0
        %v3030 = vadd.f32 %v2912, %v3029
        %v3031 = vpop.f32.mrf.mxu0
        %v3032 = vpop.f32.mrf.mxu0
        %v3033 = vadd.f32 %v2913, %v3032
        %v3034 = vpop.f32.mrf.mxu0
        %3035 = vmatprep.mubr.bf16.mxu0 0
        %3036 = vmatmul.mubr.bf16.gmra.mxu0 %v2936
        %v3037 = vpop.f32.mrf.mxu0
        %v3038 = vadd.f32 %v2914, %v3037
        %v3039 = vpop.f32.mrf.mxu0
        %v3040 = vpop.f32.mrf.mxu0
        %v3041 = vadd.f32 %v2915, %v3040
        %v3042 = vpop.f32.mrf.mxu0
        %3043 = vmatprep.mubr.bf16.mxu0 0
        %3044 = vmatmul.mubr.bf16.gmra.mxu0 %v2939
        %v3045 = vpop.f32.mrf.mxu0
        %v3046 = vadd.f32 %v2916, %v3045
        %v3047 = vpop.f32.mrf.mxu0
        %v3048 = vpop.f32.mrf.mxu0
        %v3049 = vadd.f32 %v2917, %v3048
        %v3050 = vpop.f32.mrf.mxu0
        %3051 = vmatprep.mubr.bf16.mxu0 0
        %3052 = vmatmul.mubr.bf16.gmra.mxu0 %v2942
        %v3053 = vpop.f32.mrf.mxu0
        %v3054 = vadd.f32 %v2918, %v3053
        %v3055 = vpop.f32.mrf.mxu0
        %v3056 = vpop.f32.mrf.mxu0
        %v3057 = vadd.f32 %v2919, %v3056
        %v3058 = vpop.f32.mrf.mxu0
        %3059 = vmatprep.mubr.bf16.mxu0 0
        %3060 = vmatmul.mubr.bf16.gmra.mxu0 %v2945
        %v3061 = vpop.f32.mrf.mxu0
        %v3062 = vadd.f32 %v2920, %v3061
        %v3063 = vpop.f32.mrf.mxu0
        %v3064 = vpop.f32.mrf.mxu0
        %v3065 = vadd.f32 %v2921, %v3064
        %v3066 = vpop.f32.mrf.mxu0
        %3067 = vdwg.mxu0
        %3068 = vmax.xlane.f32.xlu0 %v3006
        %v3069 = vpop.xlane.xlu0 %3068
        %3070 = vmax.xlane.f32.xlu0 %v3009
        %v3071 = vpop.xlane.xlu0 %3070
        %3072 = vmax.xlane.f32.xlu0 %v3014
        %v3073 = vpop.xlane.xlu0 %3072
        %3074 = vmax.xlane.f32.xlu0 %v3017
        %v3075 = vpop.xlane.xlu0 %3074
        %3076 = vmax.xlane.f32.xlu0 %v3022
        %v3077 = vpop.xlane.xlu0 %3076
        %3078 = vmax.xlane.f32.xlu0 %v3025
        %v3079 = vpop.xlane.xlu0 %3078
        %3080 = vmax.xlane.f32.xlu0 %v3030
        %v3081 = vpop.xlane.xlu0 %3080
        %3082 = vmax.xlane.f32.xlu0 %v3033
        %v3083 = vpop.xlane.xlu0 %3082
        %3084 = vmax.xlane.f32.xlu0 %v3038
        %v3085 = vpop.xlane.xlu0 %3084
        %3086 = vmax.xlane.f32.xlu0 %v3041
        %v3087 = vpop.xlane.xlu0 %3086
        %3088 = vmax.xlane.f32.xlu0 %v3046
        %v3089 = vpop.xlane.xlu0 %3088
        %3090 = vmax.xlane.f32.xlu0 %v3049
        %v3091 = vpop.xlane.xlu0 %3090
        %3092 = vmax.xlane.f32.xlu0 %v3054
        %v3093 = vpop.xlane.xlu0 %3092
        %3094 = vmax.xlane.f32.xlu0 %v3057
        %v3095 = vpop.xlane.xlu0 %3094
        %3096 = vmax.xlane.f32.xlu0 %v3062
        %v3097 = vpop.xlane.xlu0 %3096
        %3098 = vmax.xlane.f32.xlu0 %v3065
        %v3099 = vpop.xlane.xlu0 %3098
        %v3100 = vsub.f32 %v3006, %v3069
        %v3101 = vsub.f32 %v3009, %v3071
        %v3102 = vsub.f32 %v3014, %v3073
        %v3103 = vsub.f32 %v3017, %v3075
        %v3104 = vsub.f32 %v3022, %v3077
        %v3105 = vsub.f32 %v3025, %v3079
        %v3106 = vsub.f32 %v3030, %v3081
        %v3107 = vsub.f32 %v3033, %v3083
        %v3108 = vsub.f32 %v3038, %v3085
        %v3109 = vsub.f32 %v3041, %v3087
        %v3110 = vsub.f32 %v3046, %v3089
        %v3111 = vsub.f32 %v3049, %v3091
        %v3112 = vsub.f32 %v3054, %v3093
        %v3113 = vsub.f32 %v3057, %v3095
        %v3114 = vsub.f32 %v3062, %v3097
        %v3115 = vsub.f32 %v3065, %v3099
        %v3116 = vmul.f32 %v3100, 1.442695
        %v3117 = vpow.pop %v3116
        %v3118 = vmul.f32 %v3101, 1.442695
        %v3119 = vpow.pop %v3118
        %v3120 = vmul.f32 %v3102, 1.442695
        %v3121 = vpow.pop %v3120
        %v3122 = vmul.f32 %v3103, 1.442695
        %v3123 = vpow.pop %v3122
        %v3124 = vmul.f32 %v3104, 1.442695
        %v3125 = vpow.pop %v3124
        %v3126 = vmul.f32 %v3105, 1.442695
        %v3127 = vpow.pop %v3126
        %v3128 = vmul.f32 %v3106, 1.442695
        %v3129 = vpow.pop %v3128
        %v3130 = vmul.f32 %v3107, 1.442695
        %v3131 = vpow.pop %v3130
        %v3132 = vmul.f32 %v3108, 1.442695
        %v3133 = vpow.pop %v3132
        %v3134 = vmul.f32 %v3109, 1.442695
        %v3135 = vpow.pop %v3134
        %v3136 = vmul.f32 %v3110, 1.442695
        %v3137 = vpow.pop %v3136
        %v3138 = vmul.f32 %v3111, 1.442695
        %v3139 = vpow.pop %v3138
        %v3140 = vmul.f32 %v3112, 1.442695
        %v3141 = vpow.pop %v3140
        %v3142 = vmul.f32 %v3113, 1.442695
        %v3143 = vpow.pop %v3142
        %v3144 = vmul.f32 %v3114, 1.442695
        %v3145 = vpow.pop %v3144
        %v3146 = vmul.f32 %v3115, 1.442695
        %v3147 = vpow.pop %v3146
        %3148 = vadd.xlane.f32.xlu0 %v3117
        %v3149 = vpop.xlane.xlu0 %3148
        %3150 = vadd.xlane.f32.xlu0 %v3119
        %v3151 = vpop.xlane.xlu0 %3150
        %3152 = vadd.xlane.f32.xlu0 %v3121
        %v3153 = vpop.xlane.xlu0 %3152
        %3154 = vadd.xlane.f32.xlu0 %v3123
        %v3155 = vpop.xlane.xlu0 %3154
        %3156 = vadd.xlane.f32.xlu0 %v3125
        %v3157 = vpop.xlane.xlu0 %3156
        %3158 = vadd.xlane.f32.xlu0 %v3127
        %v3159 = vpop.xlane.xlu0 %3158
        %3160 = vadd.xlane.f32.xlu0 %v3129
        %v3161 = vpop.xlane.xlu0 %3160
        %3162 = vadd.xlane.f32.xlu0 %v3131
        %v3163 = vpop.xlane.xlu0 %3162
        %3164 = vadd.xlane.f32.xlu0 %v3133
        %v3165 = vpop.xlane.xlu0 %3164
        %3166 = vadd.xlane.f32.xlu0 %v3135
        %v3167 = vpop.xlane.xlu0 %3166
        %3168 = vadd.xlane.f32.xlu0 %v3137
        %v3169 = vpop.xlane.xlu0 %3168
        %3170 = vadd.xlane.f32.xlu0 %v3139
        %v3171 = vpop.xlane.xlu0 %3170
        %3172 = vadd.xlane.f32.xlu0 %v3141
        %v3173 = vpop.xlane.xlu0 %3172
        %3174 = vadd.xlane.f32.xlu0 %v3143
        %v3175 = vpop.xlane.xlu0 %3174
        %3176 = vadd.xlane.f32.xlu0 %v3145
        %v3177 = vpop.xlane.xlu0 %3176
        %3178 = vadd.xlane.f32.xlu0 %v3147
        %v3179 = vpop.xlane.xlu0 %3178
        %v3180 = vrcp.pop %v3149
        %v3181 = vrcp.pop %v3151
        %v3182 = vrcp.pop %v3153
        %v3183 = vrcp.pop %v3155
        %v3184 = vrcp.pop %v3157
        %v3185 = vrcp.pop %v3159
        %v3186 = vrcp.pop %v3161
        %v3187 = vrcp.pop %v3163
        %v3188 = vrcp.pop %v3165
        %v3189 = vrcp.pop %v3167
        %v3190 = vrcp.pop %v3169
        %v3191 = vrcp.pop %v3171
        %v3192 = vrcp.pop %v3173
        %v3193 = vrcp.pop %v3175
        %v3194 = vrcp.pop %v3177
        %v3195 = vrcp.pop %v3179
        %v3196 = vmul.f32 %v3117, %v3180
        %v3197 = vmul.f32 %v3119, %v3181
        %v3198 = vmul.f32 %v3121, %v3182
        %v3199 = vmul.f32 %v3123, %v3183
        %v3200 = vmul.f32 %v3125, %v3184
        %v3201 = vmul.f32 %v3127, %v3185
        %v3202 = vmul.f32 %v3129, %v3186
        %v3203 = vmul.f32 %v3131, %v3187
        %v3204 = vmul.f32 %v3133, %v3188
        %v3205 = vmul.f32 %v3135, %v3189
        %v3206 = vmul.f32 %v3137, %v3190
        %v3207 = vmul.f32 %v3139, %v3191
        %v3208 = vmul.f32 %v3141, %v3192
        %v3209 = vmul.f32 %v3143, %v3193
        %v3210 = vmul.f32 %v3145, %v3194
        %v3211 = vmul.f32 %v3147, %v3195
        %v3212 = vpack.c.bf16 %v3197, %v3196
        %v3213 = vpack.c.bf16 %v3199, %v3198
        %v3214 = vpack.c.bf16 %v3201, %v3200
        %v3215 = vpack.c.bf16 %v3203, %v3202
        %v3216 = vpack.c.bf16 %v3205, %v3204
        %v3217 = vpack.c.bf16 %v3207, %v3206
        %v3218 = vpack.c.bf16 %v3209, %v3208
        %v3219 = vpack.c.bf16 %v3211, %v3210
        %3220 = vmatprep.subr.bf16.mxu0 0
        %3221 = vmatpush1.bf16.msra.mxu0 %v2868
        %3222 = vmatprep.subr.bf16.mxu0 0
        %3223 = vmatpush1.bf16.msra.mxu0 %v2859
        %3224 = vmatprep.subr.bf16.mxu0 0
        %3225 = vmatpush1.bf16.msra.mxu0 %v2850
        %3226 = vmatprep.subr.bf16.mxu0 0
        %3227 = vmatpush1.bf16.msra.mxu0 %v2841
        %3228 = vmatprep.subr.bf16.mxu0 0
        %3229 = vmatpush1.bf16.msra.mxu0 %v2832
        %3230 = vmatprep.subr.bf16.mxu0 0
        %3231 = vmatpush1.bf16.msra.mxu0 %v2823
        %3232 = vmatprep.subr.bf16.mxu0 0
        %3233 = vmatpush1.bf16.msra.mxu0 %v2814
        %3234 = vmatprep.subr.bf16.mxu0 0
        %3235 = vmatpush1.bf16.msra.mxu0 %v2805
        %3236 = vmatprep.subr.bf16.mxu0 0
        %3237 = vmatpush2.bf16.msra.mxu0 0
        %3238 = vmatprep.subr.bf16.mxu0 0
        %3239 = vmatpush2.bf16.msra.mxu0 0
        %3240 = vmatprep.subr.bf16.mxu0 0
        %3241 = vmatpush2.bf16.msra.mxu0 0
        %3242 = vmatprep.subr.bf16.mxu0 0
        %3243 = vmatpush2.bf16.msra.mxu0 0
        %3244 = vmatprep.subr.bf16.mxu0 0
        %3245 = vmatpush2.bf16.msra.mxu0 0
        %3246 = vmatprep.subr.bf16.mxu0 0
        %3247 = vmatpush2.bf16.msra.mxu0 0
        %3248 = vmatprep.subr.bf16.mxu0 0
        %3249 = vmatpush2.bf16.msra.mxu0 0
        %3250 = vmatprep.subr.bf16.mxu0 0
        %3251 = vmatpush2.bf16.msra.mxu0 0
        %3252 = vmatprep.mubr.bf16.mxu0 0
        %3253 = vmatmul.mubr.bf16.gmra.mxu0 %v3212
        %v3254 = vpop.f32.mrf.mxu0
        %v3255 = vadd.f32 0.0, %v3254
        %v3256 = vpop.f32.mrf.mxu0
        %v3257 = vpop.f32.mrf.mxu0
        %v3258 = vadd.f32 0.0, %v3257
        %v3259 = vpop.f32.mrf.mxu0
        %3260 = vmatprep.mubr.bf16.mxu0 0
        %3261 = vmatmul.mubr.bf16.gmra.mxu0 %v3213
        %v3262 = vpop.f32.mrf.mxu0
        %v3263 = vadd.f32 0.0, %v3262
        %v3264 = vpop.f32.mrf.mxu0
        %v3265 = vpop.f32.mrf.mxu0
        %v3266 = vadd.f32 0.0, %v3265
        %v3267 = vpop.f32.mrf.mxu0
        %3268 = vmatprep.mubr.bf16.mxu0 0
        %3269 = vmatmul.mubr.bf16.gmra.mxu0 %v3214
        %v3270 = vpop.f32.mrf.mxu0
        %v3271 = vadd.f32 0.0, %v3270
        %v3272 = vpop.f32.mrf.mxu0
        %v3273 = vpop.f32.mrf.mxu0
        %v3274 = vadd.f32 0.0, %v3273
        %v3275 = vpop.f32.mrf.mxu0
        %3276 = vmatprep.mubr.bf16.mxu0 0
        %3277 = vmatmul.mubr.bf16.gmra.mxu0 %v3215
        %v3278 = vpop.f32.mrf.mxu0
        %v3279 = vadd.f32 0.0, %v3278
        %v3280 = vpop.f32.mrf.mxu0
        %v3281 = vpop.f32.mrf.mxu0
        %v3282 = vadd.f32 0.0, %v3281
        %v3283 = vpop.f32.mrf.mxu0
        %3284 = vmatprep.mubr.bf16.mxu0 0
        %3285 = vmatmul.mubr.bf16.gmra.mxu0 %v3216
        %v3286 = vpop.f32.mrf.mxu0
        %v3287 = vadd.f32 0.0, %v3286
        %v3288 = vpop.f32.mrf.mxu0
        %v3289 = vpop.f32.mrf.mxu0
        %v3290 = vadd.f32 0.0, %v3289
        %v3291 = vpop.f32.mrf.mxu0
        %3292 = vmatprep.mubr.bf16.mxu0 0
        %3293 = vmatmul.mubr.bf16.gmra.mxu0 %v3217
        %v3294 = vpop.f32.mrf.mxu0
        %v3295 = vadd.f32 0.0, %v3294
        %v3296 = vpop.f32.mrf.mxu0
        %v3297 = vpop.f32.mrf.mxu0
        %v3298 = vadd.f32 0.0, %v3297
        %v3299 = vpop.f32.mrf.mxu0
        %3300 = vmatprep.mubr.bf16.mxu0 0
        %3301 = vmatmul.mubr.bf16.gmra.mxu0 %v3218
        %v3302 = vpop.f32.mrf.mxu0
        %v3303 = vadd.f32 0.0, %v3302
        %v3304 = vpop.f32.mrf.mxu0
        %v3305 = vpop.f32.mrf.mxu0
        %v3306 = vadd.f32 0.0, %v3305
        %v3307 = vpop.f32.mrf.mxu0
        %3308 = vmatprep.mubr.bf16.mxu0 0
        %3309 = vmatmul.mubr.bf16.gmra.mxu0 %v3219
        %v3310 = vpop.f32.mrf.mxu0
        %v3311 = vadd.f32 0.0, %v3310
        %v3312 = vpop.f32.mrf.mxu0
        %v3313 = vpop.f32.mrf.mxu0
        %v3314 = vadd.f32 0.0, %v3313
        %v3315 = vpop.f32.mrf.mxu0
        %3316 = vdwg.mxu0
        %v3317 = vpack.c.bf16 %v3258, %v3255
        %v3318 = vpack.c.bf16 %v3266, %v3263
        %v3319 = vpack.c.bf16 %v3274, %v3271
        %v3320 = vpack.c.bf16 %v3282, %v3279
        %v3321 = vpack.c.bf16 %v3290, %v3287
        %v3322 = vpack.c.bf16 %v3298, %v3295
        %v3323 = vpack.c.bf16 %v3306, %v3303
        %v3324 = vpack.c.bf16 %v3314, %v3311
        %3333 = vrot.lane.b32.xlu0 %v2799, 64
        %v3334 = vpop.permute.xlu0 %3333
        %3335 = vrot.lane.b32.xlu0 %v2808, 64
        %v3336 = vpop.permute.xlu0 %3335
        %3337 = vrot.lane.b32.xlu0 %v2817, 64
        %v3338 = vpop.permute.xlu0 %3337
        %3339 = vrot.lane.b32.xlu0 %v2826, 64
        %v3340 = vpop.permute.xlu0 %3339
        %3341 = vrot.lane.b32.xlu0 %v2835, 64
        %v3342 = vpop.permute.xlu0 %3341
        %3343 = vrot.lane.b32.xlu0 %v2844, 64
        %v3344 = vpop.permute.xlu0 %3343
        %3345 = vrot.lane.b32.xlu0 %v2853, 64
        %v3346 = vpop.permute.xlu0 %3345
        %3347 = vrot.lane.b32.xlu0 %v2862, 64
        %v3348 = vpop.permute.xlu0 %3347
        %3357 = vrot.lane.b32.xlu0 %v2802, 64
        %v3358 = vpop.permute.xlu0 %3357
        %3359 = vrot.lane.b32.xlu0 %v2811, 64
        %v3360 = vpop.permute.xlu0 %3359
        %3361 = vrot.lane.b32.xlu0 %v2820, 64
        %v3362 = vpop.permute.xlu0 %3361
        %3363 = vrot.lane.b32.xlu0 %v2829, 64
        %v3364 = vpop.permute.xlu0 %3363
        %3365 = vrot.lane.b32.xlu0 %v2838, 64
        %v3366 = vpop.permute.xlu0 %3365
        %3367 = vrot.lane.b32.xlu0 %v2847, 64
        %v3368 = vpop.permute.xlu0 %3367
        %3369 = vrot.lane.b32.xlu0 %v2856, 64
        %v3370 = vpop.permute.xlu0 %3369
        %3371 = vrot.lane.b32.xlu0 %v2865, 64
        %v3372 = vpop.permute.xlu0 %3371
        %v3374 = vsel %vm2922, %v3334, 0
        %v3377 = vsel %vm2922, %v3336, 0
        %v3380 = vsel %vm2922, %v3338, 0
        %v3383 = vsel %vm2922, %v3340, 0
        %v3386 = vsel %vm2922, %v3342, 0
        %v3389 = vsel %vm2922, %v3344, 0
        %v3392 = vsel %vm2922, %v3346, 0
        %v3395 = vsel %vm2922, %v3348, 0
        %v3398 = vsel %vm2922, %v3358, 0
        %v3401 = vsel %vm2922, %v3360, 0
        %v3404 = vsel %vm2922, %v3362, 0
        %v3407 = vsel %vm2922, %v3364, 0
        %v3410 = vsel %vm2922, %v3366, 0
        %v3413 = vsel %vm2922, %v3368, 0
        %v3416 = vsel %vm2922, %v3370, 0
        %v3419 = vsel %vm2922, %v3372, 0
        %3421 = vmatprep.subr.bf16.mxu0 0
        %3422 = vmatpush1.bf16.xpose.msra.mxu0 %v3419
        %3423 = vmatprep.subr.bf16.mxu0 0
        %3424 = vmatpush1.bf16.xpose.msra.mxu0 %v3416
        %3425 = vmatprep.subr.bf16.mxu0 0
        %3426 = vmatpush1.bf16.xpose.msra.mxu0 %v3413
        %3427 = vmatprep.subr.bf16.mxu0 0
        %3428 = vmatpush1.bf16.xpose.msra.mxu0 %v3410
        %3429 = vmatprep.subr.bf16.mxu0 0
        %3430 = vmatpush1.bf16.xpose.msra.mxu0 %v3407
        %3431 = vmatprep.subr.bf16.mxu0 0
        %3432 = vmatpush1.bf16.xpose.msra.mxu0 %v3404
        %3433 = vmatprep.subr.bf16.mxu0 0
        %3434 = vmatpush1.bf16.xpose.msra.mxu0 %v3401
        %3435 = vmatprep.subr.bf16.mxu0 0
        %3436 = vmatpush1.bf16.xpose.msra.mxu0 %v3398
        %3437 = vmatprep.subr.bf16.mxu0 0
        %3438 = vmatpush2.bf16.xpose.msra.mxu0 0
        %3439 = vmatprep.subr.bf16.mxu0 0
        %3440 = vmatpush2.bf16.xpose.msra.mxu0 0
        %3441 = vmatprep.subr.bf16.mxu0 0
        %3442 = vmatpush2.bf16.xpose.msra.mxu0 0
        %3443 = vmatprep.subr.bf16.mxu0 0
        %3444 = vmatpush2.bf16.xpose.msra.mxu0 0
        %3445 = vmatprep.subr.bf16.mxu0 0
        %3446 = vmatpush2.bf16.xpose.msra.mxu0 0
        %3447 = vmatprep.subr.bf16.mxu0 0
        %3448 = vmatpush2.bf16.xpose.msra.mxu0 0
        %3449 = vmatprep.subr.bf16.mxu0 0
        %3450 = vmatpush2.bf16.xpose.msra.mxu0 0
        %3451 = vmatprep.subr.bf16.mxu0 0
        %3452 = vmatpush2.bf16.xpose.msra.mxu0 0
        %3453 = vmatprep.mubr.bf16.mxu0 0
        %3454 = vmatmul.mubr.bf16.gmra.mxu0 %v3374
        %v3455 = vpop.f32.mrf.mxu0
        %v3456 = vadd.f32 %v2906, %v3455
        %v3457 = vpop.f32.mrf.mxu0
        %v3458 = vpop.f32.mrf.mxu0
        %v3459 = vadd.f32 %v2907, %v3458
        %v3460 = vpop.f32.mrf.mxu0
        %3461 = vmatprep.mubr.bf16.mxu0 0
        %3462 = vmatmul.mubr.bf16.gmra.mxu0 %v3377
        %v3463 = vpop.f32.mrf.mxu0
        %v3464 = vadd.f32 %v2908, %v3463
        %v3465 = vpop.f32.mrf.mxu0
        %v3466 = vpop.f32.mrf.mxu0
        %v3467 = vadd.f32 %v2909, %v3466
        %v3468 = vpop.f32.mrf.mxu0
        %3469 = vmatprep.mubr.bf16.mxu0 0
        %3470 = vmatmul.mubr.bf16.gmra.mxu0 %v3380
        %v3471 = vpop.f32.mrf.mxu0
        %v3472 = vadd.f32 %v2910, %v3471
        %v3473 = vpop.f32.mrf.mxu0
        %v3474 = vpop.f32.mrf.mxu0
        %v3475 = vadd.f32 %v2911, %v3474
        %v3476 = vpop.f32.mrf.mxu0
        %3477 = vmatprep.mubr.bf16.mxu0 0
        %3478 = vmatmul.mubr.bf16.gmra.mxu0 %v3383
        %v3479 = vpop.f32.mrf.mxu0
        %v3480 = vadd.f32 %v2912, %v3479
        %v3481 = vpop.f32.mrf.mxu0
        %v3482 = vpop.f32.mrf.mxu0
        %v3483 = vadd.f32 %v2913, %v3482
        %v3484 = vpop.f32.mrf.mxu0
        %3485 = vmatprep.mubr.bf16.mxu0 0
        %3486 = vmatmul.mubr.bf16.gmra.mxu0 %v3386
        %v3487 = vpop.f32.mrf.mxu0
        %v3488 = vadd.f32 %v2914, %v3487
        %v3489 = vpop.f32.mrf.mxu0
        %v3490 = vpop.f32.mrf.mxu0
        %v3491 = vadd.f32 %v2915, %v3490
        %v3492 = vpop.f32.mrf.mxu0
        %3493 = vmatprep.mubr.bf16.mxu0 0
        %3494 = vmatmul.mubr.bf16.gmra.mxu0 %v3389
        %v3495 = vpop.f32.mrf.mxu0
        %v3496 = vadd.f32 %v2916, %v3495
        %v3497 = vpop.f32.mrf.mxu0
        %v3498 = vpop.f32.mrf.mxu0
        %v3499 = vadd.f32 %v2917, %v3498
        %v3500 = vpop.f32.mrf.mxu0
        %3501 = vmatprep.mubr.bf16.mxu0 0
        %3502 = vmatmul.mubr.bf16.gmra.mxu0 %v3392
        %v3503 = vpop.f32.mrf.mxu0
        %v3504 = vadd.f32 %v2918, %v3503
        %v3505 = vpop.f32.mrf.mxu0
        %v3506 = vpop.f32.mrf.mxu0
        %v3507 = vadd.f32 %v2919, %v3506
        %v3508 = vpop.f32.mrf.mxu0
        %3509 = vmatprep.mubr.bf16.mxu0 0
        %3510 = vmatmul.mubr.bf16.gmra.mxu0 %v3395
        %v3511 = vpop.f32.mrf.mxu0
        %v3512 = vadd.f32 %v2920, %v3511
        %v3513 = vpop.f32.mrf.mxu0
        %v3514 = vpop.f32.mrf.mxu0
        %v3515 = vadd.f32 %v2921, %v3514
        %v3516 = vpop.f32.mrf.mxu0
        %3517 = vdwg.mxu0
        %3518 = vmax.xlane.f32.xlu0 %v3456
        %v3519 = vpop.xlane.xlu0 %3518
        %3520 = vmax.xlane.f32.xlu0 %v3459
        %v3521 = vpop.xlane.xlu0 %3520
        %3522 = vmax.xlane.f32.xlu0 %v3464
        %v3523 = vpop.xlane.xlu0 %3522
        %3524 = vmax.xlane.f32.xlu0 %v3467
        %v3525 = vpop.xlane.xlu0 %3524
        %3526 = vmax.xlane.f32.xlu0 %v3472
        %v3527 = vpop.xlane.xlu0 %3526
        %3528 = vmax.xlane.f32.xlu0 %v3475
        %v3529 = vpop.xlane.xlu0 %3528
        %3530 = vmax.xlane.f32.xlu0 %v3480
        %v3531 = vpop.xlane.xlu0 %3530
        %3532 = vmax.xlane.f32.xlu0 %v3483
        %v3533 = vpop.xlane.xlu0 %3532
        %3534 = vmax.xlane.f32.xlu0 %v3488
        %v3535 = vpop.xlane.xlu0 %3534
        %3536 = vmax.xlane.f32.xlu0 %v3491
        %v3537 = vpop.xlane.xlu0 %3536
        %3538 = vmax.xlane.f32.xlu0 %v3496
        %v3539 = vpop.xlane.xlu0 %3538
        %3540 = vmax.xlane.f32.xlu0 %v3499
        %v3541 = vpop.xlane.xlu0 %3540
        %3542 = vmax.xlane.f32.xlu0 %v3504
        %v3543 = vpop.xlane.xlu0 %3542
        %3544 = vmax.xlane.f32.xlu0 %v3507
        %v3545 = vpop.xlane.xlu0 %3544
        %3546 = vmax.xlane.f32.xlu0 %v3512
        %v3547 = vpop.xlane.xlu0 %3546
        %3548 = vmax.xlane.f32.xlu0 %v3515
        %v3549 = vpop.xlane.xlu0 %3548
        %v3550 = vsub.f32 %v3456, %v3519
        %v3551 = vsub.f32 %v3459, %v3521
        %v3552 = vsub.f32 %v3464, %v3523
        %v3553 = vsub.f32 %v3467, %v3525
        %v3554 = vsub.f32 %v3472, %v3527
        %v3555 = vsub.f32 %v3475, %v3529
        %v3556 = vsub.f32 %v3480, %v3531
        %v3557 = vsub.f32 %v3483, %v3533
        %v3558 = vsub.f32 %v3488, %v3535
        %v3559 = vsub.f32 %v3491, %v3537
        %v3560 = vsub.f32 %v3496, %v3539
        %v3561 = vsub.f32 %v3499, %v3541
        %v3562 = vsub.f32 %v3504, %v3543
        %v3563 = vsub.f32 %v3507, %v3545
        %v3564 = vsub.f32 %v3512, %v3547
        %v3565 = vsub.f32 %v3515, %v3549
        %v3566 = vmul.f32 %v3550, 1.442695
        %v3567 = vpow.pop %v3566
        %v3568 = vmul.f32 %v3551, 1.442695
        %v3569 = vpow.pop %v3568
        %v3570 = vmul.f32 %v3552, 1.442695
        %v3571 = vpow.pop %v3570
        %v3572 = vmul.f32 %v3553, 1.442695
        %v3573 = vpow.pop %v3572
        %v3574 = vmul.f32 %v3554, 1.442695
        %v3575 = vpow.pop %v3574
        %v3576 = vmul.f32 %v3555, 1.442695
        %v3577 = vpow.pop %v3576
        %v3578 = vmul.f32 %v3556, 1.442695
        %v3579 = vpow.pop %v3578
        %v3580 = vmul.f32 %v3557, 1.442695
        %v3581 = vpow.pop %v3580
        %v3582 = vmul.f32 %v3558, 1.442695
        %v3583 = vpow.pop %v3582
        %v3584 = vmul.f32 %v3559, 1.442695
        %v3585 = vpow.pop %v3584
        %v3586 = vmul.f32 %v3560, 1.442695
        %v3587 = vpow.pop %v3586
        %v3588 = vmul.f32 %v3561, 1.442695
        %v3589 = vpow.pop %v3588
        %v3590 = vmul.f32 %v3562, 1.442695
        %v3591 = vpow.pop %v3590
        %v3592 = vmul.f32 %v3563, 1.442695
        %v3593 = vpow.pop %v3592
        %v3594 = vmul.f32 %v3564, 1.442695
        %v3595 = vpow.pop %v3594
        %v3596 = vmul.f32 %v3565, 1.442695
        %v3597 = vpow.pop %v3596
        %3598 = vadd.xlane.f32.xlu0 %v3567
        %v3599 = vpop.xlane.xlu0 %3598
        %3600 = vadd.xlane.f32.xlu0 %v3569
        %v3601 = vpop.xlane.xlu0 %3600
        %3602 = vadd.xlane.f32.xlu0 %v3571
        %v3603 = vpop.xlane.xlu0 %3602
        %3604 = vadd.xlane.f32.xlu0 %v3573
        %v3605 = vpop.xlane.xlu0 %3604
        %3606 = vadd.xlane.f32.xlu0 %v3575
        %v3607 = vpop.xlane.xlu0 %3606
        %3608 = vadd.xlane.f32.xlu0 %v3577
        %v3609 = vpop.xlane.xlu0 %3608
        %3610 = vadd.xlane.f32.xlu0 %v3579
        %v3611 = vpop.xlane.xlu0 %3610
        %3612 = vadd.xlane.f32.xlu0 %v3581
        %v3613 = vpop.xlane.xlu0 %3612
        %3614 = vadd.xlane.f32.xlu0 %v3583
        %v3615 = vpop.xlane.xlu0 %3614
        %3616 = vadd.xlane.f32.xlu0 %v3585
        %v3617 = vpop.xlane.xlu0 %3616
        %3618 = vadd.xlane.f32.xlu0 %v3587
        %v3619 = vpop.xlane.xlu0 %3618
        %3620 = vadd.xlane.f32.xlu0 %v3589
        %v3621 = vpop.xlane.xlu0 %3620
        %3622 = vadd.xlane.f32.xlu0 %v3591
        %v3623 = vpop.xlane.xlu0 %3622
        %3624 = vadd.xlane.f32.xlu0 %v3593
        %v3625 = vpop.xlane.xlu0 %3624
        %3626 = vadd.xlane.f32.xlu0 %v3595
        %v3627 = vpop.xlane.xlu0 %3626
        %3628 = vadd.xlane.f32.xlu0 %v3597
        %v3629 = vpop.xlane.xlu0 %3628
        %v3630 = vrcp.pop %v3599
        %v3631 = vrcp.pop %v3601
        %v3632 = vrcp.pop %v3603
        %v3633 = vrcp.pop %v3605
        %v3634 = vrcp.pop %v3607
        %v3635 = vrcp.pop %v3609
        %v3636 = vrcp.pop %v3611
        %v3637 = vrcp.pop %v3613
        %v3638 = vrcp.pop %v3615
        %v3639 = vrcp.pop %v3617
        %v3640 = vrcp.pop %v3619
        %v3641 = vrcp.pop %v3621
        %v3642 = vrcp.pop %v3623
        %v3643 = vrcp.pop %v3625
        %v3644 = vrcp.pop %v3627
        %v3645 = vrcp.pop %v3629
        %v3646 = vmul.f32 %v3567, %v3630
        %v3647 = vmul.f32 %v3569, %v3631
        %v3648 = vmul.f32 %v3571, %v3632
        %v3649 = vmul.f32 %v3573, %v3633
        %v3650 = vmul.f32 %v3575, %v3634
        %v3651 = vmul.f32 %v3577, %v3635
        %v3652 = vmul.f32 %v3579, %v3636
        %v3653 = vmul.f32 %v3581, %v3637
        %v3654 = vmul.f32 %v3583, %v3638
        %v3655 = vmul.f32 %v3585, %v3639
        %v3656 = vmul.f32 %v3587, %v3640
        %v3657 = vmul.f32 %v3589, %v3641
        %v3658 = vmul.f32 %v3591, %v3642
        %v3659 = vmul.f32 %v3593, %v3643
        %v3660 = vmul.f32 %v3595, %v3644
        %v3661 = vmul.f32 %v3597, %v3645
        %v3662 = vpack.c.bf16 %v3647, %v3646
        %v3663 = vpack.c.bf16 %v3649, %v3648
        %v3664 = vpack.c.bf16 %v3651, %v3650
        %v3665 = vpack.c.bf16 %v3653, %v3652
        %v3666 = vpack.c.bf16 %v3655, %v3654
        %v3667 = vpack.c.bf16 %v3657, %v3656
        %v3668 = vpack.c.bf16 %v3659, %v3658
        %v3669 = vpack.c.bf16 %v3661, %v3660
        %3678 = vrot.lane.b32.xlu0 %v2805, 64
        %v3679 = vpop.permute.xlu0 %3678
        %3680 = vrot.lane.b32.xlu0 %v2814, 64
        %v3681 = vpop.permute.xlu0 %3680
        %3682 = vrot.lane.b32.xlu0 %v2823, 64
        %v3683 = vpop.permute.xlu0 %3682
        %3684 = vrot.lane.b32.xlu0 %v2832, 64
        %v3685 = vpop.permute.xlu0 %3684
        %3686 = vrot.lane.b32.xlu0 %v2841, 64
        %v3687 = vpop.permute.xlu0 %3686
        %3688 = vrot.lane.b32.xlu0 %v2850, 64
        %v3689 = vpop.permute.xlu0 %3688
        %3690 = vrot.lane.b32.xlu0 %v2859, 64
        %v3691 = vpop.permute.xlu0 %3690
        %3692 = vrot.lane.b32.xlu0 %v2868, 64
        %v3693 = vpop.permute.xlu0 %3692
        %3702 = vmatprep.subr.bf16.mxu0 0
        %3703 = vmatpush1.bf16.msra.mxu0 %v3693
        %3704 = vmatprep.subr.bf16.mxu0 0
        %3705 = vmatpush1.bf16.msra.mxu0 %v3691
        %3706 = vmatprep.subr.bf16.mxu0 0
        %3707 = vmatpush1.bf16.msra.mxu0 %v3689
        %3708 = vmatprep.subr.bf16.mxu0 0
        %3709 = vmatpush1.bf16.msra.mxu0 %v3687
        %3710 = vmatprep.subr.bf16.mxu0 0
        %3711 = vmatpush1.bf16.msra.mxu0 %v3685
        %3712 = vmatprep.subr.bf16.mxu0 0
        %3713 = vmatpush1.bf16.msra.mxu0 %v3683
        %3714 = vmatprep.subr.bf16.mxu0 0
        %3715 = vmatpush1.bf16.msra.mxu0 %v3681
        %3716 = vmatprep.subr.bf16.mxu0 0
        %3717 = vmatpush1.bf16.msra.mxu0 %v3679
        %3718 = vmatprep.subr.bf16.mxu0 0
        %3719 = vmatpush2.bf16.msra.mxu0 0
        %3720 = vmatprep.subr.bf16.mxu0 0
        %3721 = vmatpush2.bf16.msra.mxu0 0
        %3722 = vmatprep.subr.bf16.mxu0 0
        %3723 = vmatpush2.bf16.msra.mxu0 0
        %3724 = vmatprep.subr.bf16.mxu0 0
        %3725 = vmatpush2.bf16.msra.mxu0 0
        %3726 = vmatprep.subr.bf16.mxu0 0
        %3727 = vmatpush2.bf16.msra.mxu0 0
        %3728 = vmatprep.subr.bf16.mxu0 0
        %3729 = vmatpush2.bf16.msra.mxu0 0
        %3730 = vmatprep.subr.bf16.mxu0 0
        %3731 = vmatpush2.bf16.msra.mxu0 0
        %3732 = vmatprep.subr.bf16.mxu0 0
        %3733 = vmatpush2.bf16.msra.mxu0 0
        %3734 = vmatprep.mubr.bf16.mxu0 0
        %3735 = vmatmul.mubr.bf16.gmra.mxu0 %v3662
        %v3736 = vpop.f32.mrf.mxu0
        %v3737 = vadd.f32 0.0, %v3736
        %v3738 = vpop.f32.mrf.mxu0
        %v3739 = vpop.f32.mrf.mxu0
        %v3740 = vadd.f32 0.0, %v3739
        %v3741 = vpop.f32.mrf.mxu0
        %3742 = vmatprep.mubr.bf16.mxu0 0
        %3743 = vmatmul.mubr.bf16.gmra.mxu0 %v3663
        %v3744 = vpop.f32.mrf.mxu0
        %v3745 = vadd.f32 0.0, %v3744
        %v3746 = vpop.f32.mrf.mxu0
        %v3747 = vpop.f32.mrf.mxu0
        %v3748 = vadd.f32 0.0, %v3747
        %v3749 = vpop.f32.mrf.mxu0
        %3750 = vmatprep.mubr.bf16.mxu0 0
        %3751 = vmatmul.mubr.bf16.gmra.mxu0 %v3664
        %v3752 = vpop.f32.mrf.mxu0
        %v3753 = vadd.f32 0.0, %v3752
        %v3754 = vpop.f32.mrf.mxu0
        %v3755 = vpop.f32.mrf.mxu0
        %v3756 = vadd.f32 0.0, %v3755
        %v3757 = vpop.f32.mrf.mxu0
        %3758 = vmatprep.mubr.bf16.mxu0 0
        %3759 = vmatmul.mubr.bf16.gmra.mxu0 %v3665
        %v3760 = vpop.f32.mrf.mxu0
        %v3761 = vadd.f32 0.0, %v3760
        %v3762 = vpop.f32.mrf.mxu0
        %v3763 = vpop.f32.mrf.mxu0
        %v3764 = vadd.f32 0.0, %v3763
        %v3765 = vpop.f32.mrf.mxu0
        %3766 = vmatprep.mubr.bf16.mxu0 0
        %3767 = vmatmul.mubr.bf16.gmra.mxu0 %v3666
        %v3768 = vpop.f32.mrf.mxu0
        %v3769 = vadd.f32 0.0, %v3768
        %v3770 = vpop.f32.mrf.mxu0
        %v3771 = vpop.f32.mrf.mxu0
        %v3772 = vadd.f32 0.0, %v3771
        %v3773 = vpop.f32.mrf.mxu0
        %3774 = vmatprep.mubr.bf16.mxu0 0
        %3775 = vmatmul.mubr.bf16.gmra.mxu0 %v3667
        %v3776 = vpop.f32.mrf.mxu0
        %v3777 = vadd.f32 0.0, %v3776
        %v3778 = vpop.f32.mrf.mxu0
        %v3779 = vpop.f32.mrf.mxu0
        %v3780 = vadd.f32 0.0, %v3779
        %v3781 = vpop.f32.mrf.mxu0
        %3782 = vmatprep.mubr.bf16.mxu0 0
        %3783 = vmatmul.mubr.bf16.gmra.mxu0 %v3668
        %v3784 = vpop.f32.mrf.mxu0
        %v3785 = vadd.f32 0.0, %v3784
        %v3786 = vpop.f32.mrf.mxu0
        %v3787 = vpop.f32.mrf.mxu0
        %v3788 = vadd.f32 0.0, %v3787
        %v3789 = vpop.f32.mrf.mxu0
        %3790 = vmatprep.mubr.bf16.mxu0 0
        %3791 = vmatmul.mubr.bf16.gmra.mxu0 %v3669
        %v3792 = vpop.f32.mrf.mxu0
        %v3793 = vadd.f32 0.0, %v3792
        %v3794 = vpop.f32.mrf.mxu0
        %v3795 = vpop.f32.mrf.mxu0
        %v3796 = vadd.f32 0.0, %v3795
        %v3797 = vpop.f32.mrf.mxu0
        %3798 = vdwg.mxu0
        %v3799 = vpack.c.bf16 %v3740, %v3737
        %v3800 = vpack.c.bf16 %v3748, %v3745
        %v3801 = vpack.c.bf16 %v3756, %v3753
        %v3802 = vpack.c.bf16 %v3764, %v3761
        %v3803 = vpack.c.bf16 %v3772, %v3769
        %v3804 = vpack.c.bf16 %v3780, %v3777
        %v3805 = vpack.c.bf16 %v3788, %v3785
        %v3806 = vpack.c.bf16 %v3796, %v3793
        %v3808 = vsel %vm2922, %v2800, 0
        %v3811 = vsel %vm2922, %v2809, 0
        %v3814 = vsel %vm2922, %v2818, 0
        %v3817 = vsel %vm2922, %v2827, 0
        %v3820 = vsel %vm2922, %v2836, 0
        %v3823 = vsel %vm2922, %v2845, 0
        %v3826 = vsel %vm2922, %v2854, 0
        %v3829 = vsel %vm2922, %v2863, 0
        %v3832 = vsel %vm2922, %v2803, 0
        %v3835 = vsel %vm2922, %v2812, 0
        %v3838 = vsel %vm2922, %v2821, 0
        %v3841 = vsel %vm2922, %v2830, 0
        %v3844 = vsel %vm2922, %v2839, 0
        %v3847 = vsel %vm2922, %v2848, 0
        %v3850 = vsel %vm2922, %v2857, 0
        %v3853 = vsel %vm2922, %v2866, 0
        %3855 = vmatprep.subr.bf16.mxu0 0
        %3856 = vmatpush1.bf16.xpose.msra.mxu0 %v3853
        %3857 = vmatprep.subr.bf16.mxu0 0
        %3858 = vmatpush1.bf16.xpose.msra.mxu0 %v3850
        %3859 = vmatprep.subr.bf16.mxu0 0
        %3860 = vmatpush1.bf16.xpose.msra.mxu0 %v3847
        %3861 = vmatprep.subr.bf16.mxu0 0
        %3862 = vmatpush1.bf16.xpose.msra.mxu0 %v3844
        %3863 = vmatprep.subr.bf16.mxu0 0
        %3864 = vmatpush1.bf16.xpose.msra.mxu0 %v3841
        %3865 = vmatprep.subr.bf16.mxu0 0
        %3866 = vmatpush1.bf16.xpose.msra.mxu0 %v3838
        %3867 = vmatprep.subr.bf16.mxu0 0
        %3868 = vmatpush1.bf16.xpose.msra.mxu0 %v3835
        %3869 = vmatprep.subr.bf16.mxu0 0
        %3870 = vmatpush1.bf16.xpose.msra.mxu0 %v3832
        %3871 = vmatprep.subr.bf16.mxu0 0
        %3872 = vmatpush2.bf16.xpose.msra.mxu0 0
        %3873 = vmatprep.subr.bf16.mxu0 0
        %3874 = vmatpush2.bf16.xpose.msra.mxu0 0
        %3875 = vmatprep.subr.bf16.mxu0 0
        %3876 = vmatpush2.bf16.xpose.msra.mxu0 0
        %3877 = vmatprep.subr.bf16.mxu0 0
        %3878 = vmatpush2.bf16.xpose.msra.mxu0 0
        %3879 = vmatprep.subr.bf16.mxu0 0
        %3880 = vmatpush2.bf16.xpose.msra.mxu0 0
        %3881 = vmatprep.subr.bf16.mxu0 0
        %3882 = vmatpush2.bf16.xpose.msra.mxu0 0
        %3883 = vmatprep.subr.bf16.mxu0 0
        %3884 = vmatpush2.bf16.xpose.msra.mxu0 0
        %3885 = vmatprep.subr.bf16.mxu0 0
        %3886 = vmatpush2.bf16.xpose.msra.mxu0 0
        %3887 = vmatprep.mubr.bf16.mxu0 0
        %3888 = vmatmul.mubr.bf16.gmra.mxu0 %v3808
        %v3889 = vpop.f32.mrf.mxu0
        %v3890 = vadd.f32 %v2906, %v3889
        %v3891 = vpop.f32.mrf.mxu0
        %v3892 = vpop.f32.mrf.mxu0
        %v3893 = vadd.f32 %v2907, %v3892
        %v3894 = vpop.f32.mrf.mxu0
        %3895 = vmatprep.mubr.bf16.mxu0 0
        %3896 = vmatmul.mubr.bf16.gmra.mxu0 %v3811
        %v3897 = vpop.f32.mrf.mxu0
        %v3898 = vadd.f32 %v2908, %v3897
        %v3899 = vpop.f32.mrf.mxu0
        %v3900 = vpop.f32.mrf.mxu0
        %v3901 = vadd.f32 %v2909, %v3900
        %v3902 = vpop.f32.mrf.mxu0
        %3903 = vmatprep.mubr.bf16.mxu0 0
        %3904 = vmatmul.mubr.bf16.gmra.mxu0 %v3814
        %v3905 = vpop.f32.mrf.mxu0
        %v3906 = vadd.f32 %v2910, %v3905
        %v3907 = vpop.f32.mrf.mxu0
        %v3908 = vpop.f32.mrf.mxu0
        %v3909 = vadd.f32 %v2911, %v3908
        %v3910 = vpop.f32.mrf.mxu0
        %3911 = vmatprep.mubr.bf16.mxu0 0
        %3912 = vmatmul.mubr.bf16.gmra.mxu0 %v3817
        %v3913 = vpop.f32.mrf.mxu0
        %v3914 = vadd.f32 %v2912, %v3913
        %v3915 = vpop.f32.mrf.mxu0
        %v3916 = vpop.f32.mrf.mxu0
        %v3917 = vadd.f32 %v2913, %v3916
        %v3918 = vpop.f32.mrf.mxu0
        %3919 = vmatprep.mubr.bf16.mxu0 0
        %3920 = vmatmul.mubr.bf16.gmra.mxu0 %v3820
        %v3921 = vpop.f32.mrf.mxu0
        %v3922 = vadd.f32 %v2914, %v3921
        %v3923 = vpop.f32.mrf.mxu0
        %v3924 = vpop.f32.mrf.mxu0
        %v3925 = vadd.f32 %v2915, %v3924
        %v3926 = vpop.f32.mrf.mxu0
        %3927 = vmatprep.mubr.bf16.mxu0 0
        %3928 = vmatmul.mubr.bf16.gmra.mxu0 %v3823
        %v3929 = vpop.f32.mrf.mxu0
        %v3930 = vadd.f32 %v2916, %v3929
        %v3931 = vpop.f32.mrf.mxu0
        %v3932 = vpop.f32.mrf.mxu0
        %v3933 = vadd.f32 %v2917, %v3932
        %v3934 = vpop.f32.mrf.mxu0
        %3935 = vmatprep.mubr.bf16.mxu0 0
        %3936 = vmatmul.mubr.bf16.gmra.mxu0 %v3826
        %v3937 = vpop.f32.mrf.mxu0
        %v3938 = vadd.f32 %v2918, %v3937
        %v3939 = vpop.f32.mrf.mxu0
        %v3940 = vpop.f32.mrf.mxu0
        %v3941 = vadd.f32 %v2919, %v3940
        %v3942 = vpop.f32.mrf.mxu0
        %3943 = vmatprep.mubr.bf16.mxu0 0
        %3944 = vmatmul.mubr.bf16.gmra.mxu0 %v3829
        %v3945 = vpop.f32.mrf.mxu0
        %v3946 = vadd.f32 %v2920, %v3945
        %v3947 = vpop.f32.mrf.mxu0
        %v3948 = vpop.f32.mrf.mxu0
        %v3949 = vadd.f32 %v2921, %v3948
        %v3950 = vpop.f32.mrf.mxu0
        %3951 = vdwg.mxu0
        %3952 = vmax.xlane.f32.xlu0 %v3890
        %v3953 = vpop.xlane.xlu0 %3952
        %3954 = vmax.xlane.f32.xlu0 %v3893
        %v3955 = vpop.xlane.xlu0 %3954
        %3956 = vmax.xlane.f32.xlu0 %v3898
        %v3957 = vpop.xlane.xlu0 %3956
        %3958 = vmax.xlane.f32.xlu0 %v3901
        %v3959 = vpop.xlane.xlu0 %3958
        %3960 = vmax.xlane.f32.xlu0 %v3906
        %v3961 = vpop.xlane.xlu0 %3960
        %3962 = vmax.xlane.f32.xlu0 %v3909
        %v3963 = vpop.xlane.xlu0 %3962
        %3964 = vmax.xlane.f32.xlu0 %v3914
        %v3965 = vpop.xlane.xlu0 %3964
        %3966 = vmax.xlane.f32.xlu0 %v3917
        %v3967 = vpop.xlane.xlu0 %3966
        %3968 = vmax.xlane.f32.xlu0 %v3922
        %v3969 = vpop.xlane.xlu0 %3968
        %3970 = vmax.xlane.f32.xlu0 %v3925
        %v3971 = vpop.xlane.xlu0 %3970
        %3972 = vmax.xlane.f32.xlu0 %v3930
        %v3973 = vpop.xlane.xlu0 %3972
        %3974 = vmax.xlane.f32.xlu0 %v3933
        %v3975 = vpop.xlane.xlu0 %3974
        %3976 = vmax.xlane.f32.xlu0 %v3938
        %v3977 = vpop.xlane.xlu0 %3976
        %3978 = vmax.xlane.f32.xlu0 %v3941
        %v3979 = vpop.xlane.xlu0 %3978
        %3980 = vmax.xlane.f32.xlu0 %v3946
        %v3981 = vpop.xlane.xlu0 %3980
        %3982 = vmax.xlane.f32.xlu0 %v3949
        %v3983 = vpop.xlane.xlu0 %3982
        %v3984 = vsub.f32 %v3890, %v3953
        %v3985 = vsub.f32 %v3893, %v3955
        %v3986 = vsub.f32 %v3898, %v3957
        %v3987 = vsub.f32 %v3901, %v3959
        %v3988 = vsub.f32 %v3906, %v3961
        %v3989 = vsub.f32 %v3909, %v3963
        %v3990 = vsub.f32 %v3914, %v3965
        %v3991 = vsub.f32 %v3917, %v3967
        %v3992 = vsub.f32 %v3922, %v3969
        %v3993 = vsub.f32 %v3925, %v3971
        %v3994 = vsub.f32 %v3930, %v3973
        %v3995 = vsub.f32 %v3933, %v3975
        %v3996 = vsub.f32 %v3938, %v3977
        %v3997 = vsub.f32 %v3941, %v3979
        %v3998 = vsub.f32 %v3946, %v3981
        %v3999 = vsub.f32 %v3949, %v3983
        %v4000 = vmul.f32 %v3984, 1.442695
        %v4001 = vpow.pop %v4000
        %v4002 = vmul.f32 %v3985, 1.442695
        %v4003 = vpow.pop %v4002
        %v4004 = vmul.f32 %v3986, 1.442695
        %v4005 = vpow.pop %v4004
        %v4006 = vmul.f32 %v3987, 1.442695
        %v4007 = vpow.pop %v4006
        %v4008 = vmul.f32 %v3988, 1.442695
        %v4009 = vpow.pop %v4008
        %v4010 = vmul.f32 %v3989, 1.442695
        %v4011 = vpow.pop %v4010
        %v4012 = vmul.f32 %v3990, 1.442695
        %v4013 = vpow.pop %v4012
        %v4014 = vmul.f32 %v3991, 1.442695
        %v4015 = vpow.pop %v4014
        %v4016 = vmul.f32 %v3992, 1.442695
        %v4017 = vpow.pop %v4016
        %v4018 = vmul.f32 %v3993, 1.442695
        %v4019 = vpow.pop %v4018
        %v4020 = vmul.f32 %v3994, 1.442695
        %v4021 = vpow.pop %v4020
        %v4022 = vmul.f32 %v3995, 1.442695
        %v4023 = vpow.pop %v4022
        %v4024 = vmul.f32 %v3996, 1.442695
        %v4025 = vpow.pop %v4024
        %v4026 = vmul.f32 %v3997, 1.442695
        %v4027 = vpow.pop %v4026
        %v4028 = vmul.f32 %v3998, 1.442695
        %v4029 = vpow.pop %v4028
        %v4030 = vmul.f32 %v3999, 1.442695
        %v4031 = vpow.pop %v4030
        %4032 = vadd.xlane.f32.xlu0 %v4001
        %v4033 = vpop.xlane.xlu0 %4032
        %4034 = vadd.xlane.f32.xlu0 %v4003
        %v4035 = vpop.xlane.xlu0 %4034
        %4036 = vadd.xlane.f32.xlu0 %v4005
        %v4037 = vpop.xlane.xlu0 %4036
        %4038 = vadd.xlane.f32.xlu0 %v4007
        %v4039 = vpop.xlane.xlu0 %4038
        %4040 = vadd.xlane.f32.xlu0 %v4009
        %v4041 = vpop.xlane.xlu0 %4040
        %4042 = vadd.xlane.f32.xlu0 %v4011
        %v4043 = vpop.xlane.xlu0 %4042
        %4044 = vadd.xlane.f32.xlu0 %v4013
        %v4045 = vpop.xlane.xlu0 %4044
        %4046 = vadd.xlane.f32.xlu0 %v4015
        %v4047 = vpop.xlane.xlu0 %4046
        %4048 = vadd.xlane.f32.xlu0 %v4017
        %v4049 = vpop.xlane.xlu0 %4048
        %4050 = vadd.xlane.f32.xlu0 %v4019
        %v4051 = vpop.xlane.xlu0 %4050
        %4052 = vadd.xlane.f32.xlu0 %v4021
        %v4053 = vpop.xlane.xlu0 %4052
        %4054 = vadd.xlane.f32.xlu0 %v4023
        %v4055 = vpop.xlane.xlu0 %4054
        %4056 = vadd.xlane.f32.xlu0 %v4025
        %v4057 = vpop.xlane.xlu0 %4056
        %4058 = vadd.xlane.f32.xlu0 %v4027
        %v4059 = vpop.xlane.xlu0 %4058
        %4060 = vadd.xlane.f32.xlu0 %v4029
        %v4061 = vpop.xlane.xlu0 %4060
        %4062 = vadd.xlane.f32.xlu0 %v4031
        %v4063 = vpop.xlane.xlu0 %4062
        %v4064 = vrcp.pop %v4033
        %v4065 = vrcp.pop %v4035
        %v4066 = vrcp.pop %v4037
        %v4067 = vrcp.pop %v4039
        %v4068 = vrcp.pop %v4041
        %v4069 = vrcp.pop %v4043
        %v4070 = vrcp.pop %v4045
        %v4071 = vrcp.pop %v4047
        %v4072 = vrcp.pop %v4049
        %v4073 = vrcp.pop %v4051
        %v4074 = vrcp.pop %v4053
        %v4075 = vrcp.pop %v4055
        %v4076 = vrcp.pop %v4057
        %v4077 = vrcp.pop %v4059
        %v4078 = vrcp.pop %v4061
        %v4079 = vrcp.pop %v4063
        %v4080 = vmul.f32 %v4001, %v4064
        %v4081 = vmul.f32 %v4003, %v4065
        %v4082 = vmul.f32 %v4005, %v4066
        %v4083 = vmul.f32 %v4007, %v4067
        %v4084 = vmul.f32 %v4009, %v4068
        %v4085 = vmul.f32 %v4011, %v4069
        %v4086 = vmul.f32 %v4013, %v4070
        %v4087 = vmul.f32 %v4015, %v4071
        %v4088 = vmul.f32 %v4017, %v4072
        %v4089 = vmul.f32 %v4019, %v4073
        %v4090 = vmul.f32 %v4021, %v4074
        %v4091 = vmul.f32 %v4023, %v4075
        %v4092 = vmul.f32 %v4025, %v4076
        %v4093 = vmul.f32 %v4027, %v4077
        %v4094 = vmul.f32 %v4029, %v4078
        %v4095 = vmul.f32 %v4031, %v4079
        %v4096 = vpack.c.bf16 %v4081, %v4080
        %v4097 = vpack.c.bf16 %v4083, %v4082
        %v4098 = vpack.c.bf16 %v4085, %v4084
        %v4099 = vpack.c.bf16 %v4087, %v4086
        %v4100 = vpack.c.bf16 %v4089, %v4088
        %v4101 = vpack.c.bf16 %v4091, %v4090
        %v4102 = vpack.c.bf16 %v4093, %v4092
        %v4103 = vpack.c.bf16 %v4095, %v4094
        %4104 = vmatprep.subr.bf16.mxu0 0
        %4105 = vmatpush1.bf16.msra.mxu0 %v2869
        %4106 = vmatprep.subr.bf16.mxu0 0
        %4107 = vmatpush1.bf16.msra.mxu0 %v2860
        %4108 = vmatprep.subr.bf16.mxu0 0
        %4109 = vmatpush1.bf16.msra.mxu0 %v2851
        %4110 = vmatprep.subr.bf16.mxu0 0
        %4111 = vmatpush1.bf16.msra.mxu0 %v2842
        %4112 = vmatprep.subr.bf16.mxu0 0
        %4113 = vmatpush1.bf16.msra.mxu0 %v2833
        %4114 = vmatprep.subr.bf16.mxu0 0
        %4115 = vmatpush1.bf16.msra.mxu0 %v2824
        %4116 = vmatprep.subr.bf16.mxu0 0
        %4117 = vmatpush1.bf16.msra.mxu0 %v2815
        %4118 = vmatprep.subr.bf16.mxu0 0
        %4119 = vmatpush1.bf16.msra.mxu0 %v2806
        %4120 = vmatprep.subr.bf16.mxu0 0
        %4121 = vmatpush2.bf16.msra.mxu0 0
        %4122 = vmatprep.subr.bf16.mxu0 0
        %4123 = vmatpush2.bf16.msra.mxu0 0
        %4124 = vmatprep.subr.bf16.mxu0 0
        %4125 = vmatpush2.bf16.msra.mxu0 0
        %4126 = vmatprep.subr.bf16.mxu0 0
        %4127 = vmatpush2.bf16.msra.mxu0 0
        %4128 = vmatprep.subr.bf16.mxu0 0
        %4129 = vmatpush2.bf16.msra.mxu0 0
        %4130 = vmatprep.subr.bf16.mxu0 0
        %4131 = vmatpush2.bf16.msra.mxu0 0
        %4132 = vmatprep.subr.bf16.mxu0 0
        %4133 = vmatpush2.bf16.msra.mxu0 0
        %4134 = vmatprep.subr.bf16.mxu0 0
        %4135 = vmatpush2.bf16.msra.mxu0 0
        %4136 = vmatprep.mubr.bf16.mxu0 0
        %4137 = vmatmul.mubr.bf16.gmra.mxu0 %v4096
        %v4138 = vpop.f32.mrf.mxu0
        %v4139 = vadd.f32 0.0, %v4138
        %v4140 = vpop.f32.mrf.mxu0
        %v4141 = vpop.f32.mrf.mxu0
        %v4142 = vadd.f32 0.0, %v4141
        %v4143 = vpop.f32.mrf.mxu0
        %4144 = vmatprep.mubr.bf16.mxu0 0
        %4145 = vmatmul.mubr.bf16.gmra.mxu0 %v4097
        %v4146 = vpop.f32.mrf.mxu0
        %v4147 = vadd.f32 0.0, %v4146
        %v4148 = vpop.f32.mrf.mxu0
        %v4149 = vpop.f32.mrf.mxu0
        %v4150 = vadd.f32 0.0, %v4149
        %v4151 = vpop.f32.mrf.mxu0
        %4152 = vmatprep.mubr.bf16.mxu0 0
        %4153 = vmatmul.mubr.bf16.gmra.mxu0 %v4098
        %v4154 = vpop.f32.mrf.mxu0
        %v4155 = vadd.f32 0.0, %v4154
        %v4156 = vpop.f32.mrf.mxu0
        %v4157 = vpop.f32.mrf.mxu0
        %v4158 = vadd.f32 0.0, %v4157
        %v4159 = vpop.f32.mrf.mxu0
        %4160 = vmatprep.mubr.bf16.mxu0 0
        %4161 = vmatmul.mubr.bf16.gmra.mxu0 %v4099
        %v4162 = vpop.f32.mrf.mxu0
        %v4163 = vadd.f32 0.0, %v4162
        %v4164 = vpop.f32.mrf.mxu0
        %v4165 = vpop.f32.mrf.mxu0
        %v4166 = vadd.f32 0.0, %v4165
        %v4167 = vpop.f32.mrf.mxu0
        %4168 = vmatprep.mubr.bf16.mxu0 0
        %4169 = vmatmul.mubr.bf16.gmra.mxu0 %v4100
        %v4170 = vpop.f32.mrf.mxu0
        %v4171 = vadd.f32 0.0, %v4170
        %v4172 = vpop.f32.mrf.mxu0
        %v4173 = vpop.f32.mrf.mxu0
        %v4174 = vadd.f32 0.0, %v4173
        %v4175 = vpop.f32.mrf.mxu0
        %4176 = vmatprep.mubr.bf16.mxu0 0
        %4177 = vmatmul.mubr.bf16.gmra.mxu0 %v4101
        %v4178 = vpop.f32.mrf.mxu0
        %v4179 = vadd.f32 0.0, %v4178
        %v4180 = vpop.f32.mrf.mxu0
        %v4181 = vpop.f32.mrf.mxu0
        %v4182 = vadd.f32 0.0, %v4181
        %v4183 = vpop.f32.mrf.mxu0
        %4184 = vmatprep.mubr.bf16.mxu0 0
        %4185 = vmatmul.mubr.bf16.gmra.mxu0 %v4102
        %v4186 = vpop.f32.mrf.mxu0
        %v4187 = vadd.f32 0.0, %v4186
        %v4188 = vpop.f32.mrf.mxu0
        %v4189 = vpop.f32.mrf.mxu0
        %v4190 = vadd.f32 0.0, %v4189
        %v4191 = vpop.f32.mrf.mxu0
        %4192 = vmatprep.mubr.bf16.mxu0 0
        %4193 = vmatmul.mubr.bf16.gmra.mxu0 %v4103
        %v4194 = vpop.f32.mrf.mxu0
        %v4195 = vadd.f32 0.0, %v4194
        %v4196 = vpop.f32.mrf.mxu0
        %v4197 = vpop.f32.mrf.mxu0
        %v4198 = vadd.f32 0.0, %v4197
        %v4199 = vpop.f32.mrf.mxu0
        %4200 = vdwg.mxu0
        %v4201 = vpack.c.bf16 %v4142, %v4139
        %v4202 = vpack.c.bf16 %v4150, %v4147
        %v4203 = vpack.c.bf16 %v4158, %v4155
        %v4204 = vpack.c.bf16 %v4166, %v4163
        %v4205 = vpack.c.bf16 %v4174, %v4171
        %v4206 = vpack.c.bf16 %v4182, %v4179
        %v4207 = vpack.c.bf16 %v4190, %v4187
        %v4208 = vpack.c.bf16 %v4198, %v4195
        %4217 = vrot.lane.b32.xlu0 %v2800, 64
        %v4218 = vpop.permute.xlu0 %4217
        %4219 = vrot.lane.b32.xlu0 %v2809, 64
        %v4220 = vpop.permute.xlu0 %4219
        %4221 = vrot.lane.b32.xlu0 %v2818, 64
        %v4222 = vpop.permute.xlu0 %4221
        %4223 = vrot.lane.b32.xlu0 %v2827, 64
        %v4224 = vpop.permute.xlu0 %4223
        %4225 = vrot.lane.b32.xlu0 %v2836, 64
        %v4226 = vpop.permute.xlu0 %4225
        %4227 = vrot.lane.b32.xlu0 %v2845, 64
        %v4228 = vpop.permute.xlu0 %4227
        %4229 = vrot.lane.b32.xlu0 %v2854, 64
        %v4230 = vpop.permute.xlu0 %4229
        %4231 = vrot.lane.b32.xlu0 %v2863, 64
        %v4232 = vpop.permute.xlu0 %4231
        %4241 = vrot.lane.b32.xlu0 %v2803, 64
        %v4242 = vpop.permute.xlu0 %4241
        %4243 = vrot.lane.b32.xlu0 %v2812, 64
        %v4244 = vpop.permute.xlu0 %4243
        %4245 = vrot.lane.b32.xlu0 %v2821, 64
        %v4246 = vpop.permute.xlu0 %4245
        %4247 = vrot.lane.b32.xlu0 %v2830, 64
        %v4248 = vpop.permute.xlu0 %4247
        %4249 = vrot.lane.b32.xlu0 %v2839, 64
        %v4250 = vpop.permute.xlu0 %4249
        %4251 = vrot.lane.b32.xlu0 %v2848, 64
        %v4252 = vpop.permute.xlu0 %4251
        %4253 = vrot.lane.b32.xlu0 %v2857, 64
        %v4254 = vpop.permute.xlu0 %4253
        %4255 = vrot.lane.b32.xlu0 %v2866, 64
        %v4256 = vpop.permute.xlu0 %4255
        %v4258 = vsel %vm2922, %v4218, 0
        %v4261 = vsel %vm2922, %v4220, 0
        %v4264 = vsel %vm2922, %v4222, 0
        %v4267 = vsel %vm2922, %v4224, 0
        %v4270 = vsel %vm2922, %v4226, 0
        %v4273 = vsel %vm2922, %v4228, 0
        %v4276 = vsel %vm2922, %v4230, 0
        %v4279 = vsel %vm2922, %v4232, 0
        %v4282 = vsel %vm2922, %v4242, 0
        %v4285 = vsel %vm2922, %v4244, 0
        %v4288 = vsel %vm2922, %v4246, 0
        %v4291 = vsel %vm2922, %v4248, 0
        %v4294 = vsel %vm2922, %v4250, 0
        %v4297 = vsel %vm2922, %v4252, 0
        %v4300 = vsel %vm2922, %v4254, 0
        %v4303 = vsel %vm2922, %v4256, 0
        %4305 = vmatprep.subr.bf16.mxu0 0
        %4306 = vmatpush1.bf16.xpose.msra.mxu0 %v4303
        %4307 = vmatprep.subr.bf16.mxu0 0
        %4308 = vmatpush1.bf16.xpose.msra.mxu0 %v4300
        %4309 = vmatprep.subr.bf16.mxu0 0
        %4310 = vmatpush1.bf16.xpose.msra.mxu0 %v4297
        %4311 = vmatprep.subr.bf16.mxu0 0
        %4312 = vmatpush1.bf16.xpose.msra.mxu0 %v4294
        %4313 = vmatprep.subr.bf16.mxu0 0
        %4314 = vmatpush1.bf16.xpose.msra.mxu0 %v4291
        %4315 = vmatprep.subr.bf16.mxu0 0
        %4316 = vmatpush1.bf16.xpose.msra.mxu0 %v4288
        %4317 = vmatprep.subr.bf16.mxu0 0
        %4318 = vmatpush1.bf16.xpose.msra.mxu0 %v4285
        %4319 = vmatprep.subr.bf16.mxu0 0
        %4320 = vmatpush1.bf16.xpose.msra.mxu0 %v4282
        %4321 = vmatprep.subr.bf16.mxu0 0
        %4322 = vmatpush2.bf16.xpose.msra.mxu0 0
        %4323 = vmatprep.subr.bf16.mxu0 0
        %4324 = vmatpush2.bf16.xpose.msra.mxu0 0
        %4325 = vmatprep.subr.bf16.mxu0 0
        %4326 = vmatpush2.bf16.xpose.msra.mxu0 0
        %4327 = vmatprep.subr.bf16.mxu0 0
        %4328 = vmatpush2.bf16.xpose.msra.mxu0 0
        %4329 = vmatprep.subr.bf16.mxu0 0
        %4330 = vmatpush2.bf16.xpose.msra.mxu0 0
        %4331 = vmatprep.subr.bf16.mxu0 0
        %4332 = vmatpush2.bf16.xpose.msra.mxu0 0
        %4333 = vmatprep.subr.bf16.mxu0 0
        %4334 = vmatpush2.bf16.xpose.msra.mxu0 0
        %4335 = vmatprep.subr.bf16.mxu0 0
        %4336 = vmatpush2.bf16.xpose.msra.mxu0 0
        %4337 = vmatprep.mubr.bf16.mxu0 0
        %4338 = vmatmul.mubr.bf16.gmra.mxu0 %v4258
        %v4339 = vpop.f32.mrf.mxu0
        %v4340 = vadd.f32 %v2906, %v4339
        %v4341 = vpop.f32.mrf.mxu0
        %v4342 = vpop.f32.mrf.mxu0
        %v4343 = vadd.f32 %v2907, %v4342
        %v4344 = vpop.f32.mrf.mxu0
        %4345 = vmatprep.mubr.bf16.mxu0 0
        %4346 = vmatmul.mubr.bf16.gmra.mxu0 %v4261
        %v4347 = vpop.f32.mrf.mxu0
        %v4348 = vadd.f32 %v2908, %v4347
        %v4349 = vpop.f32.mrf.mxu0
        %v4350 = vpop.f32.mrf.mxu0
        %v4351 = vadd.f32 %v2909, %v4350
        %v4352 = vpop.f32.mrf.mxu0
        %4353 = vmatprep.mubr.bf16.mxu0 0
        %4354 = vmatmul.mubr.bf16.gmra.mxu0 %v4264
        %v4355 = vpop.f32.mrf.mxu0
        %v4356 = vadd.f32 %v2910, %v4355
        %v4357 = vpop.f32.mrf.mxu0
        %v4358 = vpop.f32.mrf.mxu0
        %v4359 = vadd.f32 %v2911, %v4358
        %v4360 = vpop.f32.mrf.mxu0
        %4361 = vmatprep.mubr.bf16.mxu0 0
        %4362 = vmatmul.mubr.bf16.gmra.mxu0 %v4267
        %v4363 = vpop.f32.mrf.mxu0
        %v4364 = vadd.f32 %v2912, %v4363
        %v4365 = vpop.f32.mrf.mxu0
        %v4366 = vpop.f32.mrf.mxu0
        %v4367 = vadd.f32 %v2913, %v4366
        %v4368 = vpop.f32.mrf.mxu0
        %4369 = vmatprep.mubr.bf16.mxu0 0
        %4370 = vmatmul.mubr.bf16.gmra.mxu0 %v4270
        %v4371 = vpop.f32.mrf.mxu0
        %v4372 = vadd.f32 %v2914, %v4371
        %v4373 = vpop.f32.mrf.mxu0
        %v4374 = vpop.f32.mrf.mxu0
        %v4375 = vadd.f32 %v2915, %v4374
        %v4376 = vpop.f32.mrf.mxu0
        %4377 = vmatprep.mubr.bf16.mxu0 0
        %4378 = vmatmul.mubr.bf16.gmra.mxu0 %v4273
        %v4379 = vpop.f32.mrf.mxu0
        %v4380 = vadd.f32 %v2916, %v4379
        %v4381 = vpop.f32.mrf.mxu0
        %v4382 = vpop.f32.mrf.mxu0
        %v4383 = vadd.f32 %v2917, %v4382
        %v4384 = vpop.f32.mrf.mxu0
        %4385 = vmatprep.mubr.bf16.mxu0 0
        %4386 = vmatmul.mubr.bf16.gmra.mxu0 %v4276
        %v4387 = vpop.f32.mrf.mxu0
        %v4388 = vadd.f32 %v2918, %v4387
        %v4389 = vpop.f32.mrf.mxu0
        %v4390 = vpop.f32.mrf.mxu0
        %v4391 = vadd.f32 %v2919, %v4390
        %v4392 = vpop.f32.mrf.mxu0
        %4393 = vmatprep.mubr.bf16.mxu0 0
        %4394 = vmatmul.mubr.bf16.gmra.mxu0 %v4279
        %v4395 = vpop.f32.mrf.mxu0
        %v4396 = vadd.f32 %v2920, %v4395
        %v4397 = vpop.f32.mrf.mxu0
        %v4398 = vpop.f32.mrf.mxu0
        %v4399 = vadd.f32 %v2921, %v4398
        %v4400 = vpop.f32.mrf.mxu0
        %4401 = vdwg.mxu0
        %4402 = vmax.xlane.f32.xlu0 %v4340
        %v4403 = vpop.xlane.xlu0 %4402
        %4404 = vmax.xlane.f32.xlu0 %v4343
        %v4405 = vpop.xlane.xlu0 %4404
        %4406 = vmax.xlane.f32.xlu0 %v4348
        %v4407 = vpop.xlane.xlu0 %4406
        %4408 = vmax.xlane.f32.xlu0 %v4351
        %v4409 = vpop.xlane.xlu0 %4408
        %4410 = vmax.xlane.f32.xlu0 %v4356
        %v4411 = vpop.xlane.xlu0 %4410
        %4412 = vmax.xlane.f32.xlu0 %v4359
        %v4413 = vpop.xlane.xlu0 %4412
        %4414 = vmax.xlane.f32.xlu0 %v4364
        %v4415 = vpop.xlane.xlu0 %4414
        %4416 = vmax.xlane.f32.xlu0 %v4367
        %v4417 = vpop.xlane.xlu0 %4416
        %4418 = vmax.xlane.f32.xlu0 %v4372
        %v4419 = vpop.xlane.xlu0 %4418
        %4420 = vmax.xlane.f32.xlu0 %v4375
        %v4421 = vpop.xlane.xlu0 %4420
        %4422 = vmax.xlane.f32.xlu0 %v4380
        %v4423 = vpop.xlane.xlu0 %4422
        %4424 = vmax.xlane.f32.xlu0 %v4383
        %v4425 = vpop.xlane.xlu0 %4424
        %4426 = vmax.xlane.f32.xlu0 %v4388
        %v4427 = vpop.xlane.xlu0 %4426
        %4428 = vmax.xlane.f32.xlu0 %v4391
        %v4429 = vpop.xlane.xlu0 %4428
        %4430 = vmax.xlane.f32.xlu0 %v4396
        %v4431 = vpop.xlane.xlu0 %4430
        %4432 = vmax.xlane.f32.xlu0 %v4399
        %v4433 = vpop.xlane.xlu0 %4432
        %v4434 = vsub.f32 %v4340, %v4403
        %v4435 = vsub.f32 %v4343, %v4405
        %v4436 = vsub.f32 %v4348, %v4407
        %v4437 = vsub.f32 %v4351, %v4409
        %v4438 = vsub.f32 %v4356, %v4411
        %v4439 = vsub.f32 %v4359, %v4413
        %v4440 = vsub.f32 %v4364, %v4415
        %v4441 = vsub.f32 %v4367, %v4417
        %v4442 = vsub.f32 %v4372, %v4419
        %v4443 = vsub.f32 %v4375, %v4421
        %v4444 = vsub.f32 %v4380, %v4423
        %v4445 = vsub.f32 %v4383, %v4425
        %v4446 = vsub.f32 %v4388, %v4427
        %v4447 = vsub.f32 %v4391, %v4429
        %v4448 = vsub.f32 %v4396, %v4431
        %v4449 = vsub.f32 %v4399, %v4433
        %v4450 = vmul.f32 %v4434, 1.442695
        %v4451 = vpow.pop %v4450
        %v4452 = vmul.f32 %v4435, 1.442695
        %v4453 = vpow.pop %v4452
        %v4454 = vmul.f32 %v4436, 1.442695
        %v4455 = vpow.pop %v4454
        %v4456 = vmul.f32 %v4437, 1.442695
        %v4457 = vpow.pop %v4456
        %v4458 = vmul.f32 %v4438, 1.442695
        %v4459 = vpow.pop %v4458
        %v4460 = vmul.f32 %v4439, 1.442695
        %v4461 = vpow.pop %v4460
        %v4462 = vmul.f32 %v4440, 1.442695
        %v4463 = vpow.pop %v4462
        %v4464 = vmul.f32 %v4441, 1.442695
        %v4465 = vpow.pop %v4464
        %v4466 = vmul.f32 %v4442, 1.442695
        %v4467 = vpow.pop %v4466
        %v4468 = vmul.f32 %v4443, 1.442695
        %v4469 = vpow.pop %v4468
        %v4470 = vmul.f32 %v4444, 1.442695
        %v4471 = vpow.pop %v4470
        %v4472 = vmul.f32 %v4445, 1.442695
        %v4473 = vpow.pop %v4472
        %v4474 = vmul.f32 %v4446, 1.442695
        %v4475 = vpow.pop %v4474
        %v4476 = vmul.f32 %v4447, 1.442695
        %v4477 = vpow.pop %v4476
        %v4478 = vmul.f32 %v4448, 1.442695
        %v4479 = vpow.pop %v4478
        %v4480 = vmul.f32 %v4449, 1.442695
        %v4481 = vpow.pop %v4480
        %4482 = vadd.xlane.f32.xlu0 %v4451
        %v4483 = vpop.xlane.xlu0 %4482
        %4484 = vadd.xlane.f32.xlu0 %v4453
        %v4485 = vpop.xlane.xlu0 %4484
        %4486 = vadd.xlane.f32.xlu0 %v4455
        %v4487 = vpop.xlane.xlu0 %4486
        %4488 = vadd.xlane.f32.xlu0 %v4457
        %v4489 = vpop.xlane.xlu0 %4488
        %4490 = vadd.xlane.f32.xlu0 %v4459
        %v4491 = vpop.xlane.xlu0 %4490
        %4492 = vadd.xlane.f32.xlu0 %v4461
        %v4493 = vpop.xlane.xlu0 %4492
        %4494 = vadd.xlane.f32.xlu0 %v4463
        %v4495 = vpop.xlane.xlu0 %4494
        %4496 = vadd.xlane.f32.xlu0 %v4465
        %v4497 = vpop.xlane.xlu0 %4496
        %4498 = vadd.xlane.f32.xlu0 %v4467
        %v4499 = vpop.xlane.xlu0 %4498
        %4500 = vadd.xlane.f32.xlu0 %v4469
        %v4501 = vpop.xlane.xlu0 %4500
        %4502 = vadd.xlane.f32.xlu0 %v4471
        %v4503 = vpop.xlane.xlu0 %4502
        %4504 = vadd.xlane.f32.xlu0 %v4473
        %v4505 = vpop.xlane.xlu0 %4504
        %4506 = vadd.xlane.f32.xlu0 %v4475
        %v4507 = vpop.xlane.xlu0 %4506
        %4508 = vadd.xlane.f32.xlu0 %v4477
        %v4509 = vpop.xlane.xlu0 %4508
        %4510 = vadd.xlane.f32.xlu0 %v4479
        %v4511 = vpop.xlane.xlu0 %4510
        %4512 = vadd.xlane.f32.xlu0 %v4481
        %v4513 = vpop.xlane.xlu0 %4512
        %v4514 = vrcp.pop %v4483
        %v4515 = vrcp.pop %v4485
        %v4516 = vrcp.pop %v4487
        %v4517 = vrcp.pop %v4489
        %v4518 = vrcp.pop %v4491
        %v4519 = vrcp.pop %v4493
        %v4520 = vrcp.pop %v4495
        %v4521 = vrcp.pop %v4497
        %v4522 = vrcp.pop %v4499
        %v4523 = vrcp.pop %v4501
        %v4524 = vrcp.pop %v4503
        %v4525 = vrcp.pop %v4505
        %v4526 = vrcp.pop %v4507
        %v4527 = vrcp.pop %v4509
        %v4528 = vrcp.pop %v4511
        %v4529 = vrcp.pop %v4513
        %v4530 = vmul.f32 %v4451, %v4514
        %v4531 = vmul.f32 %v4453, %v4515
        %v4532 = vmul.f32 %v4455, %v4516
        %v4533 = vmul.f32 %v4457, %v4517
        %v4534 = vmul.f32 %v4459, %v4518
        %v4535 = vmul.f32 %v4461, %v4519
        %v4536 = vmul.f32 %v4463, %v4520
        %v4537 = vmul.f32 %v4465, %v4521
        %v4538 = vmul.f32 %v4467, %v4522
        %v4539 = vmul.f32 %v4469, %v4523
        %v4540 = vmul.f32 %v4471, %v4524
        %v4541 = vmul.f32 %v4473, %v4525
        %v4542 = vmul.f32 %v4475, %v4526
        %v4543 = vmul.f32 %v4477, %v4527
        %v4544 = vmul.f32 %v4479, %v4528
        %v4545 = vmul.f32 %v4481, %v4529
        %v4546 = vpack.c.bf16 %v4531, %v4530
        %v4547 = vpack.c.bf16 %v4533, %v4532
        %v4548 = vpack.c.bf16 %v4535, %v4534
        %v4549 = vpack.c.bf16 %v4537, %v4536
        %v4550 = vpack.c.bf16 %v4539, %v4538
        %v4551 = vpack.c.bf16 %v4541, %v4540
        %v4552 = vpack.c.bf16 %v4543, %v4542
        %v4553 = vpack.c.bf16 %v4545, %v4544
        %4562 = vrot.lane.b32.xlu0 %v2806, 64
        %v4563 = vpop.permute.xlu0 %4562
        %4564 = vrot.lane.b32.xlu0 %v2815, 64
        %v4565 = vpop.permute.xlu0 %4564
        %4566 = vrot.lane.b32.xlu0 %v2824, 64
        %v4567 = vpop.permute.xlu0 %4566
        %4568 = vrot.lane.b32.xlu0 %v2833, 64
        %v4569 = vpop.permute.xlu0 %4568
        %4570 = vrot.lane.b32.xlu0 %v2842, 64
        %v4571 = vpop.permute.xlu0 %4570
        %4572 = vrot.lane.b32.xlu0 %v2851, 64
        %v4573 = vpop.permute.xlu0 %4572
        %4574 = vrot.lane.b32.xlu0 %v2860, 64
        %v4575 = vpop.permute.xlu0 %4574
        %4576 = vrot.lane.b32.xlu0 %v2869, 64
        %v4577 = vpop.permute.xlu0 %4576
        %4586 = vmatprep.subr.bf16.mxu0 0
        %4587 = vmatpush1.bf16.msra.mxu0 %v4577
        %4588 = vmatprep.subr.bf16.mxu0 0
        %4589 = vmatpush1.bf16.msra.mxu0 %v4575
        %4590 = vmatprep.subr.bf16.mxu0 0
        %4591 = vmatpush1.bf16.msra.mxu0 %v4573
        %4592 = vmatprep.subr.bf16.mxu0 0
        %4593 = vmatpush1.bf16.msra.mxu0 %v4571
        %4594 = vmatprep.subr.bf16.mxu0 0
        %4595 = vmatpush1.bf16.msra.mxu0 %v4569
        %4596 = vmatprep.subr.bf16.mxu0 0
        %4597 = vmatpush1.bf16.msra.mxu0 %v4567
        %4598 = vmatprep.subr.bf16.mxu0 0
        %4599 = vmatpush1.bf16.msra.mxu0 %v4565
        %4600 = vmatprep.subr.bf16.mxu0 0
        %4601 = vmatpush1.bf16.msra.mxu0 %v4563
        %4602 = vmatprep.subr.bf16.mxu0 0
        %4603 = vmatpush2.bf16.msra.mxu0 0
        %4604 = vmatprep.subr.bf16.mxu0 0
        %4605 = vmatpush2.bf16.msra.mxu0 0
        %4606 = vmatprep.subr.bf16.mxu0 0
        %4607 = vmatpush2.bf16.msra.mxu0 0
        %4608 = vmatprep.subr.bf16.mxu0 0
        %4609 = vmatpush2.bf16.msra.mxu0 0
        %4610 = vmatprep.subr.bf16.mxu0 0
        %4611 = vmatpush2.bf16.msra.mxu0 0
        %4612 = vmatprep.subr.bf16.mxu0 0
        %4613 = vmatpush2.bf16.msra.mxu0 0
        %4614 = vmatprep.subr.bf16.mxu0 0
        %4615 = vmatpush2.bf16.msra.mxu0 0
        %4616 = vmatprep.subr.bf16.mxu0 0
        %4617 = vmatpush2.bf16.msra.mxu0 0
        %4618 = vmatprep.mubr.bf16.mxu0 0
        %4619 = vmatmul.mubr.bf16.gmra.mxu0 %v4546
        %v4620 = vpop.f32.mrf.mxu0
        %v4621 = vadd.f32 0.0, %v4620
        %v4622 = vpop.f32.mrf.mxu0
        %v4623 = vpop.f32.mrf.mxu0
        %v4624 = vadd.f32 0.0, %v4623
        %v4625 = vpop.f32.mrf.mxu0
        %4626 = vmatprep.mubr.bf16.mxu0 0
        %4627 = vmatmul.mubr.bf16.gmra.mxu0 %v4547
        %v4628 = vpop.f32.mrf.mxu0
        %v4629 = vadd.f32 0.0, %v4628
        %v4630 = vpop.f32.mrf.mxu0
        %v4631 = vpop.f32.mrf.mxu0
        %v4632 = vadd.f32 0.0, %v4631
        %v4633 = vpop.f32.mrf.mxu0
        %4634 = vmatprep.mubr.bf16.mxu0 0
        %4635 = vmatmul.mubr.bf16.gmra.mxu0 %v4548
        %v4636 = vpop.f32.mrf.mxu0
        %v4637 = vadd.f32 0.0, %v4636
        %v4638 = vpop.f32.mrf.mxu0
        %v4639 = vpop.f32.mrf.mxu0
        %v4640 = vadd.f32 0.0, %v4639
        %v4641 = vpop.f32.mrf.mxu0
        %4642 = vmatprep.mubr.bf16.mxu0 0
        %4643 = vmatmul.mubr.bf16.gmra.mxu0 %v4549
        %v4644 = vpop.f32.mrf.mxu0
        %v4645 = vadd.f32 0.0, %v4644
        %v4646 = vpop.f32.mrf.mxu0
        %v4647 = vpop.f32.mrf.mxu0
        %v4648 = vadd.f32 0.0, %v4647
        %v4649 = vpop.f32.mrf.mxu0
        %4650 = vmatprep.mubr.bf16.mxu0 0
        %4651 = vmatmul.mubr.bf16.gmra.mxu0 %v4550
        %v4652 = vpop.f32.mrf.mxu0
        %v4653 = vadd.f32 0.0, %v4652
        %v4654 = vpop.f32.mrf.mxu0
        %v4655 = vpop.f32.mrf.mxu0
        %v4656 = vadd.f32 0.0, %v4655
        %v4657 = vpop.f32.mrf.mxu0
        %4658 = vmatprep.mubr.bf16.mxu0 0
        %4659 = vmatmul.mubr.bf16.gmra.mxu0 %v4551
        %v4660 = vpop.f32.mrf.mxu0
        %v4661 = vadd.f32 0.0, %v4660
        %v4662 = vpop.f32.mrf.mxu0
        %v4663 = vpop.f32.mrf.mxu0
        %v4664 = vadd.f32 0.0, %v4663
        %v4665 = vpop.f32.mrf.mxu0
        %4666 = vmatprep.mubr.bf16.mxu0 0
        %4667 = vmatmul.mubr.bf16.gmra.mxu0 %v4552
        %v4668 = vpop.f32.mrf.mxu0
        %v4669 = vadd.f32 0.0, %v4668
        %v4670 = vpop.f32.mrf.mxu0
        %v4671 = vpop.f32.mrf.mxu0
        %v4672 = vadd.f32 0.0, %v4671
        %v4673 = vpop.f32.mrf.mxu0
        %4674 = vmatprep.mubr.bf16.mxu0 0
        %4675 = vmatmul.mubr.bf16.gmra.mxu0 %v4553
        %v4676 = vpop.f32.mrf.mxu0
        %v4677 = vadd.f32 0.0, %v4676
        %v4678 = vpop.f32.mrf.mxu0
        %v4679 = vpop.f32.mrf.mxu0
        %v4680 = vadd.f32 0.0, %v4679
        %v4681 = vpop.f32.mrf.mxu0
        %4682 = vdwg.mxu0
        %v4683 = vpack.c.bf16 %v4624, %v4621
        %v4684 = vpack.c.bf16 %v4632, %v4629
        %v4685 = vpack.c.bf16 %v4640, %v4637
        %v4686 = vpack.c.bf16 %v4648, %v4645
        %v4687 = vpack.c.bf16 %v4656, %v4653
        %v4688 = vpack.c.bf16 %v4664, %v4661
        %v4689 = vpack.c.bf16 %v4672, %v4669
        %v4690 = vpack.c.bf16 %v4680, %v4677
        %v4692 = vsel %vm2922, %v2801, 0
        %v4695 = vsel %vm2922, %v2810, 0
        %v4698 = vsel %vm2922, %v2819, 0
        %v4701 = vsel %vm2922, %v2828, 0
        %v4704 = vsel %vm2922, %v2837, 0
        %v4707 = vsel %vm2922, %v2846, 0
        %v4710 = vsel %vm2922, %v2855, 0
        %v4713 = vsel %vm2922, %v2864, 0
        %v4716 = vsel %vm2922, %v2804, 0
        %v4719 = vsel %vm2922, %v2813, 0
        %v4722 = vsel %vm2922, %v2822, 0
        %v4725 = vsel %vm2922, %v2831, 0
        %v4728 = vsel %vm2922, %v2840, 0
        %v4731 = vsel %vm2922, %v2849, 0
        %v4734 = vsel %vm2922, %v2858, 0
        %v4737 = vsel %vm2922, %v2867, 0
        %4739 = vmatprep.subr.bf16.mxu0 0
        %4740 = vmatpush1.bf16.xpose.msra.mxu0 %v4737
        %4741 = vmatprep.subr.bf16.mxu0 0
        %4742 = vmatpush1.bf16.xpose.msra.mxu0 %v4734
        %4743 = vmatprep.subr.bf16.mxu0 0
        %4744 = vmatpush1.bf16.xpose.msra.mxu0 %v4731
        %4745 = vmatprep.subr.bf16.mxu0 0
        %4746 = vmatpush1.bf16.xpose.msra.mxu0 %v4728
        %4747 = vmatprep.subr.bf16.mxu0 0
        %4748 = vmatpush1.bf16.xpose.msra.mxu0 %v4725
        %4749 = vmatprep.subr.bf16.mxu0 0
        %4750 = vmatpush1.bf16.xpose.msra.mxu0 %v4722
        %4751 = vmatprep.subr.bf16.mxu0 0
        %4752 = vmatpush1.bf16.xpose.msra.mxu0 %v4719
        %4753 = vmatprep.subr.bf16.mxu0 0
        %4754 = vmatpush1.bf16.xpose.msra.mxu0 %v4716
        %4755 = vmatprep.subr.bf16.mxu0 0
        %4756 = vmatpush2.bf16.xpose.msra.mxu0 0
        %4757 = vmatprep.subr.bf16.mxu0 0
        %4758 = vmatpush2.bf16.xpose.msra.mxu0 0
        %4759 = vmatprep.subr.bf16.mxu0 0
        %4760 = vmatpush2.bf16.xpose.msra.mxu0 0
        %4761 = vmatprep.subr.bf16.mxu0 0
        %4762 = vmatpush2.bf16.xpose.msra.mxu0 0
        %4763 = vmatprep.subr.bf16.mxu0 0
        %4764 = vmatpush2.bf16.xpose.msra.mxu0 0
        %4765 = vmatprep.subr.bf16.mxu0 0
        %4766 = vmatpush2.bf16.xpose.msra.mxu0 0
        %4767 = vmatprep.subr.bf16.mxu0 0
        %4768 = vmatpush2.bf16.xpose.msra.mxu0 0
        %4769 = vmatprep.subr.bf16.mxu0 0
        %4770 = vmatpush2.bf16.xpose.msra.mxu0 0
        %4771 = vmatprep.mubr.bf16.mxu0 0
        %4772 = vmatmul.mubr.bf16.gmra.mxu0 %v4692
        %v4773 = vpop.f32.mrf.mxu0
        %v4774 = vadd.f32 %v2906, %v4773
        %v4775 = vpop.f32.mrf.mxu0
        %v4776 = vpop.f32.mrf.mxu0
        %v4777 = vadd.f32 %v2907, %v4776
        %v4778 = vpop.f32.mrf.mxu0
        %4779 = vmatprep.mubr.bf16.mxu0 0
        %4780 = vmatmul.mubr.bf16.gmra.mxu0 %v4695
        %v4781 = vpop.f32.mrf.mxu0
        %v4782 = vadd.f32 %v2908, %v4781
        %v4783 = vpop.f32.mrf.mxu0
        %v4784 = vpop.f32.mrf.mxu0
        %v4785 = vadd.f32 %v2909, %v4784
        %v4786 = vpop.f32.mrf.mxu0
        %4787 = vmatprep.mubr.bf16.mxu0 0
        %4788 = vmatmul.mubr.bf16.gmra.mxu0 %v4698
        %v4789 = vpop.f32.mrf.mxu0
        %v4790 = vadd.f32 %v2910, %v4789
        %v4791 = vpop.f32.mrf.mxu0
        %v4792 = vpop.f32.mrf.mxu0
        %v4793 = vadd.f32 %v2911, %v4792
        %v4794 = vpop.f32.mrf.mxu0
        %4795 = vmatprep.mubr.bf16.mxu0 0
        %4796 = vmatmul.mubr.bf16.gmra.mxu0 %v4701
        %v4797 = vpop.f32.mrf.mxu0
        %v4798 = vadd.f32 %v2912, %v4797
        %v4799 = vpop.f32.mrf.mxu0
        %v4800 = vpop.f32.mrf.mxu0
        %v4801 = vadd.f32 %v2913, %v4800
        %v4802 = vpop.f32.mrf.mxu0
        %4803 = vmatprep.mubr.bf16.mxu0 0
        %4804 = vmatmul.mubr.bf16.gmra.mxu0 %v4704
        %v4805 = vpop.f32.mrf.mxu0
        %v4806 = vadd.f32 %v2914, %v4805
        %v4807 = vpop.f32.mrf.mxu0
        %v4808 = vpop.f32.mrf.mxu0
        %v4809 = vadd.f32 %v2915, %v4808
        %v4810 = vpop.f32.mrf.mxu0
        %4811 = vmatprep.mubr.bf16.mxu0 0
        %4812 = vmatmul.mubr.bf16.gmra.mxu0 %v4707
        %v4813 = vpop.f32.mrf.mxu0
        %v4814 = vadd.f32 %v2916, %v4813
        %v4815 = vpop.f32.mrf.mxu0
        %v4816 = vpop.f32.mrf.mxu0
        %v4817 = vadd.f32 %v2917, %v4816
        %v4818 = vpop.f32.mrf.mxu0
        %4819 = vmatprep.mubr.bf16.mxu0 0
        %4820 = vmatmul.mubr.bf16.gmra.mxu0 %v4710
        %v4821 = vpop.f32.mrf.mxu0
        %v4822 = vadd.f32 %v2918, %v4821
        %v4823 = vpop.f32.mrf.mxu0
        %v4824 = vpop.f32.mrf.mxu0
        %v4825 = vadd.f32 %v2919, %v4824
        %v4826 = vpop.f32.mrf.mxu0
        %4827 = vmatprep.mubr.bf16.mxu0 0
        %4828 = vmatmul.mubr.bf16.gmra.mxu0 %v4713
        %v4829 = vpop.f32.mrf.mxu0
        %v4830 = vadd.f32 %v2920, %v4829
        %v4831 = vpop.f32.mrf.mxu0
        %v4832 = vpop.f32.mrf.mxu0
        %v4833 = vadd.f32 %v2921, %v4832
        %v4834 = vpop.f32.mrf.mxu0
        %4835 = vdwg.mxu0
        %4836 = vmax.xlane.f32.xlu0 %v4774
        %v4837 = vpop.xlane.xlu0 %4836
        %4838 = vmax.xlane.f32.xlu0 %v4777
        %v4839 = vpop.xlane.xlu0 %4838
        %4840 = vmax.xlane.f32.xlu0 %v4782
        %v4841 = vpop.xlane.xlu0 %4840
        %4842 = vmax.xlane.f32.xlu0 %v4785
        %v4843 = vpop.xlane.xlu0 %4842
        %4844 = vmax.xlane.f32.xlu0 %v4790
        %v4845 = vpop.xlane.xlu0 %4844
        %4846 = vmax.xlane.f32.xlu0 %v4793
        %v4847 = vpop.xlane.xlu0 %4846
        %4848 = vmax.xlane.f32.xlu0 %v4798
        %v4849 = vpop.xlane.xlu0 %4848
        %4850 = vmax.xlane.f32.xlu0 %v4801
        %v4851 = vpop.xlane.xlu0 %4850
        %4852 = vmax.xlane.f32.xlu0 %v4806
        %v4853 = vpop.xlane.xlu0 %4852
        %4854 = vmax.xlane.f32.xlu0 %v4809
        %v4855 = vpop.xlane.xlu0 %4854
        %4856 = vmax.xlane.f32.xlu0 %v4814
        %v4857 = vpop.xlane.xlu0 %4856
        %4858 = vmax.xlane.f32.xlu0 %v4817
        %v4859 = vpop.xlane.xlu0 %4858
        %4860 = vmax.xlane.f32.xlu0 %v4822
        %v4861 = vpop.xlane.xlu0 %4860
        %4862 = vmax.xlane.f32.xlu0 %v4825
        %v4863 = vpop.xlane.xlu0 %4862
        %4864 = vmax.xlane.f32.xlu0 %v4830
        %v4865 = vpop.xlane.xlu0 %4864
        %4866 = vmax.xlane.f32.xlu0 %v4833
        %v4867 = vpop.xlane.xlu0 %4866
        %v4868 = vsub.f32 %v4774, %v4837
        %v4869 = vsub.f32 %v4777, %v4839
        %v4870 = vsub.f32 %v4782, %v4841
        %v4871 = vsub.f32 %v4785, %v4843
        %v4872 = vsub.f32 %v4790, %v4845
        %v4873 = vsub.f32 %v4793, %v4847
        %v4874 = vsub.f32 %v4798, %v4849
        %v4875 = vsub.f32 %v4801, %v4851
        %v4876 = vsub.f32 %v4806, %v4853
        %v4877 = vsub.f32 %v4809, %v4855
        %v4878 = vsub.f32 %v4814, %v4857
        %v4879 = vsub.f32 %v4817, %v4859
        %v4880 = vsub.f32 %v4822, %v4861
        %v4881 = vsub.f32 %v4825, %v4863
        %v4882 = vsub.f32 %v4830, %v4865
        %v4883 = vsub.f32 %v4833, %v4867
        %v4884 = vmul.f32 %v4868, 1.442695
        %v4885 = vpow.pop %v4884
        %v4886 = vmul.f32 %v4869, 1.442695
        %v4887 = vpow.pop %v4886
        %v4888 = vmul.f32 %v4870, 1.442695
        %v4889 = vpow.pop %v4888
        %v4890 = vmul.f32 %v4871, 1.442695
        %v4891 = vpow.pop %v4890
        %v4892 = vmul.f32 %v4872, 1.442695
        %v4893 = vpow.pop %v4892
        %v4894 = vmul.f32 %v4873, 1.442695
        %v4895 = vpow.pop %v4894
        %v4896 = vmul.f32 %v4874, 1.442695
        %v4897 = vpow.pop %v4896
        %v4898 = vmul.f32 %v4875, 1.442695
        %v4899 = vpow.pop %v4898
        %v4900 = vmul.f32 %v4876, 1.442695
        %v4901 = vpow.pop %v4900
        %v4902 = vmul.f32 %v4877, 1.442695
        %v4903 = vpow.pop %v4902
        %v4904 = vmul.f32 %v4878, 1.442695
        %v4905 = vpow.pop %v4904
        %v4906 = vmul.f32 %v4879, 1.442695
        %v4907 = vpow.pop %v4906
        %v4908 = vmul.f32 %v4880, 1.442695
        %v4909 = vpow.pop %v4908
        %v4910 = vmul.f32 %v4881, 1.442695
        %v4911 = vpow.pop %v4910
        %v4912 = vmul.f32 %v4882, 1.442695
        %v4913 = vpow.pop %v4912
        %v4914 = vmul.f32 %v4883, 1.442695
        %v4915 = vpow.pop %v4914
        %4916 = vadd.xlane.f32.xlu0 %v4885
        %v4917 = vpop.xlane.xlu0 %4916
        %4918 = vadd.xlane.f32.xlu0 %v4887
        %v4919 = vpop.xlane.xlu0 %4918
        %4920 = vadd.xlane.f32.xlu0 %v4889
        %v4921 = vpop.xlane.xlu0 %4920
        %4922 = vadd.xlane.f32.xlu0 %v4891
        %v4923 = vpop.xlane.xlu0 %4922
        %4924 = vadd.xlane.f32.xlu0 %v4893
        %v4925 = vpop.xlane.xlu0 %4924
        %4926 = vadd.xlane.f32.xlu0 %v4895
        %v4927 = vpop.xlane.xlu0 %4926
        %4928 = vadd.xlane.f32.xlu0 %v4897
        %v4929 = vpop.xlane.xlu0 %4928
        %4930 = vadd.xlane.f32.xlu0 %v4899
        %v4931 = vpop.xlane.xlu0 %4930
        %4932 = vadd.xlane.f32.xlu0 %v4901
        %v4933 = vpop.xlane.xlu0 %4932
        %4934 = vadd.xlane.f32.xlu0 %v4903
        %v4935 = vpop.xlane.xlu0 %4934
        %4936 = vadd.xlane.f32.xlu0 %v4905
        %v4937 = vpop.xlane.xlu0 %4936
        %4938 = vadd.xlane.f32.xlu0 %v4907
        %v4939 = vpop.xlane.xlu0 %4938
        %4940 = vadd.xlane.f32.xlu0 %v4909
        %v4941 = vpop.xlane.xlu0 %4940
        %4942 = vadd.xlane.f32.xlu0 %v4911
        %v4943 = vpop.xlane.xlu0 %4942
        %4944 = vadd.xlane.f32.xlu0 %v4913
        %v4945 = vpop.xlane.xlu0 %4944
        %4946 = vadd.xlane.f32.xlu0 %v4915
        %v4947 = vpop.xlane.xlu0 %4946
        %v4948 = vrcp.pop %v4917
        %v4949 = vrcp.pop %v4919
        %v4950 = vrcp.pop %v4921
        %v4951 = vrcp.pop %v4923
        %v4952 = vrcp.pop %v4925
        %v4953 = vrcp.pop %v4927
        %v4954 = vrcp.pop %v4929
        %v4955 = vrcp.pop %v4931
        %v4956 = vrcp.pop %v4933
        %v4957 = vrcp.pop %v4935
        %v4958 = vrcp.pop %v4937
        %v4959 = vrcp.pop %v4939
        %v4960 = vrcp.pop %v4941
        %v4961 = vrcp.pop %v4943
        %v4962 = vrcp.pop %v4945
        %v4963 = vrcp.pop %v4947
        %v4964 = vmul.f32 %v4885, %v4948
        %v4965 = vmul.f32 %v4887, %v4949
        %v4966 = vmul.f32 %v4889, %v4950
        %v4967 = vmul.f32 %v4891, %v4951
        %v4968 = vmul.f32 %v4893, %v4952
        %v4969 = vmul.f32 %v4895, %v4953
        %v4970 = vmul.f32 %v4897, %v4954
        %v4971 = vmul.f32 %v4899, %v4955
        %v4972 = vmul.f32 %v4901, %v4956
        %v4973 = vmul.f32 %v4903, %v4957
        %v4974 = vmul.f32 %v4905, %v4958
        %v4975 = vmul.f32 %v4907, %v4959
        %v4976 = vmul.f32 %v4909, %v4960
        %v4977 = vmul.f32 %v4911, %v4961
        %v4978 = vmul.f32 %v4913, %v4962
        %v4979 = vmul.f32 %v4915, %v4963
        %v4980 = vpack.c.bf16 %v4965, %v4964
        %v4981 = vpack.c.bf16 %v4967, %v4966
        %v4982 = vpack.c.bf16 %v4969, %v4968
        %v4983 = vpack.c.bf16 %v4971, %v4970
        %v4984 = vpack.c.bf16 %v4973, %v4972
        %v4985 = vpack.c.bf16 %v4975, %v4974
        %v4986 = vpack.c.bf16 %v4977, %v4976
        %v4987 = vpack.c.bf16 %v4979, %v4978
        %4988 = vmatprep.subr.bf16.mxu0 0
        %4989 = vmatpush1.bf16.msra.mxu0 %v2870
        %4990 = vmatprep.subr.bf16.mxu0 0
        %4991 = vmatpush1.bf16.msra.mxu0 %v2861
        %4992 = vmatprep.subr.bf16.mxu0 0
        %4993 = vmatpush1.bf16.msra.mxu0 %v2852
        %4994 = vmatprep.subr.bf16.mxu0 0
        %4995 = vmatpush1.bf16.msra.mxu0 %v2843
        %4996 = vmatprep.subr.bf16.mxu0 0
        %4997 = vmatpush1.bf16.msra.mxu0 %v2834
        %4998 = vmatprep.subr.bf16.mxu0 0
        %4999 = vmatpush1.bf16.msra.mxu0 %v2825
        %5000 = vmatprep.subr.bf16.mxu0 0
        %5001 = vmatpush1.bf16.msra.mxu0 %v2816
        %5002 = vmatprep.subr.bf16.mxu0 0
        %5003 = vmatpush1.bf16.msra.mxu0 %v2807
        %5004 = vmatprep.subr.bf16.mxu0 0
        %5005 = vmatpush2.bf16.msra.mxu0 0
        %5006 = vmatprep.subr.bf16.mxu0 0
        %5007 = vmatpush2.bf16.msra.mxu0 0
        %5008 = vmatprep.subr.bf16.mxu0 0
        %5009 = vmatpush2.bf16.msra.mxu0 0
        %5010 = vmatprep.subr.bf16.mxu0 0
        %5011 = vmatpush2.bf16.msra.mxu0 0
        %5012 = vmatprep.subr.bf16.mxu0 0
        %5013 = vmatpush2.bf16.msra.mxu0 0
        %5014 = vmatprep.subr.bf16.mxu0 0
        %5015 = vmatpush2.bf16.msra.mxu0 0
        %5016 = vmatprep.subr.bf16.mxu0 0
        %5017 = vmatpush2.bf16.msra.mxu0 0
        %5018 = vmatprep.subr.bf16.mxu0 0
        %5019 = vmatpush2.bf16.msra.mxu0 0
        %5020 = vmatprep.mubr.bf16.mxu0 0
        %5021 = vmatmul.mubr.bf16.gmra.mxu0 %v4980
        %v5022 = vpop.f32.mrf.mxu0
        %v5023 = vadd.f32 0.0, %v5022
        %v5024 = vpop.f32.mrf.mxu0
        %v5025 = vpop.f32.mrf.mxu0
        %v5026 = vadd.f32 0.0, %v5025
        %v5027 = vpop.f32.mrf.mxu0
        %5028 = vmatprep.mubr.bf16.mxu0 0
        %5029 = vmatmul.mubr.bf16.gmra.mxu0 %v4981
        %v5030 = vpop.f32.mrf.mxu0
        %v5031 = vadd.f32 0.0, %v5030
        %v5032 = vpop.f32.mrf.mxu0
        %v5033 = vpop.f32.mrf.mxu0
        %v5034 = vadd.f32 0.0, %v5033
        %v5035 = vpop.f32.mrf.mxu0
        %5036 = vmatprep.mubr.bf16.mxu0 0
        %5037 = vmatmul.mubr.bf16.gmra.mxu0 %v4982
        %v5038 = vpop.f32.mrf.mxu0
        %v5039 = vadd.f32 0.0, %v5038
        %v5040 = vpop.f32.mrf.mxu0
        %v5041 = vpop.f32.mrf.mxu0
        %v5042 = vadd.f32 0.0, %v5041
        %v5043 = vpop.f32.mrf.mxu0
        %5044 = vmatprep.mubr.bf16.mxu0 0
        %5045 = vmatmul.mubr.bf16.gmra.mxu0 %v4983
        %v5046 = vpop.f32.mrf.mxu0
        %v5047 = vadd.f32 0.0, %v5046
        %v5048 = vpop.f32.mrf.mxu0
        %v5049 = vpop.f32.mrf.mxu0
        %v5050 = vadd.f32 0.0, %v5049
        %v5051 = vpop.f32.mrf.mxu0
        %5052 = vmatprep.mubr.bf16.mxu0 0
        %5053 = vmatmul.mubr.bf16.gmra.mxu0 %v4984
        %v5054 = vpop.f32.mrf.mxu0
        %v5055 = vadd.f32 0.0, %v5054
        %v5056 = vpop.f32.mrf.mxu0
        %v5057 = vpop.f32.mrf.mxu0
        %v5058 = vadd.f32 0.0, %v5057
        %v5059 = vpop.f32.mrf.mxu0
        %5060 = vmatprep.mubr.bf16.mxu0 0
        %5061 = vmatmul.mubr.bf16.gmra.mxu0 %v4985
        %v5062 = vpop.f32.mrf.mxu0
        %v5063 = vadd.f32 0.0, %v5062
        %v5064 = vpop.f32.mrf.mxu0
        %v5065 = vpop.f32.mrf.mxu0
        %v5066 = vadd.f32 0.0, %v5065
        %v5067 = vpop.f32.mrf.mxu0
        %5068 = vmatprep.mubr.bf16.mxu0 0
        %5069 = vmatmul.mubr.bf16.gmra.mxu0 %v4986
        %v5070 = vpop.f32.mrf.mxu0
        %v5071 = vadd.f32 0.0, %v5070
        %v5072 = vpop.f32.mrf.mxu0
        %v5073 = vpop.f32.mrf.mxu0
        %v5074 = vadd.f32 0.0, %v5073
        %v5075 = vpop.f32.mrf.mxu0
        %5076 = vmatprep.mubr.bf16.mxu0 0
        %5077 = vmatmul.mubr.bf16.gmra.mxu0 %v4987
        %v5078 = vpop.f32.mrf.mxu0
        %v5079 = vadd.f32 0.0, %v5078
        %v5080 = vpop.f32.mrf.mxu0
        %v5081 = vpop.f32.mrf.mxu0
        %v5082 = vadd.f32 0.0, %v5081
        %v5083 = vpop.f32.mrf.mxu0
        %5084 = vdwg.mxu0
        %v5085 = vpack.c.bf16 %v5026, %v5023
        %v5086 = vpack.c.bf16 %v5034, %v5031
        %v5087 = vpack.c.bf16 %v5042, %v5039
        %v5088 = vpack.c.bf16 %v5050, %v5047
        %v5089 = vpack.c.bf16 %v5058, %v5055
        %v5090 = vpack.c.bf16 %v5066, %v5063
        %v5091 = vpack.c.bf16 %v5074, %v5071
        %v5092 = vpack.c.bf16 %v5082, %v5079
        %5101 = vrot.lane.b32.xlu0 %v2801, 64
        %v5102 = vpop.permute.xlu0 %5101
        %5103 = vrot.lane.b32.xlu0 %v2810, 64
        %v5104 = vpop.permute.xlu0 %5103
        %5105 = vrot.lane.b32.xlu0 %v2819, 64
        %v5106 = vpop.permute.xlu0 %5105
        %5107 = vrot.lane.b32.xlu0 %v2828, 64
        %v5108 = vpop.permute.xlu0 %5107
        %5109 = vrot.lane.b32.xlu0 %v2837, 64
        %v5110 = vpop.permute.xlu0 %5109
        %5111 = vrot.lane.b32.xlu0 %v2846, 64
        %v5112 = vpop.permute.xlu0 %5111
        %5113 = vrot.lane.b32.xlu0 %v2855, 64
        %v5114 = vpop.permute.xlu0 %5113
        %5115 = vrot.lane.b32.xlu0 %v2864, 64
        %v5116 = vpop.permute.xlu0 %5115
        %5125 = vrot.lane.b32.xlu0 %v2804, 64
        %v5126 = vpop.permute.xlu0 %5125
        %5127 = vrot.lane.b32.xlu0 %v2813, 64
        %v5128 = vpop.permute.xlu0 %5127
        %5129 = vrot.lane.b32.xlu0 %v2822, 64
        %v5130 = vpop.permute.xlu0 %5129
        %5131 = vrot.lane.b32.xlu0 %v2831, 64
        %v5132 = vpop.permute.xlu0 %5131
        %5133 = vrot.lane.b32.xlu0 %v2840, 64
        %v5134 = vpop.permute.xlu0 %5133
        %5135 = vrot.lane.b32.xlu0 %v2849, 64
        %v5136 = vpop.permute.xlu0 %5135
        %5137 = vrot.lane.b32.xlu0 %v2858, 64
        %v5138 = vpop.permute.xlu0 %5137
        %5139 = vrot.lane.b32.xlu0 %v2867, 64
        %v5140 = vpop.permute.xlu0 %5139
        %v5142 = vsel %vm2922, %v5102, 0
        %v5145 = vsel %vm2922, %v5104, 0
        %v5148 = vsel %vm2922, %v5106, 0
        %v5151 = vsel %vm2922, %v5108, 0
        %v5154 = vsel %vm2922, %v5110, 0
        %v5157 = vsel %vm2922, %v5112, 0
        %v5160 = vsel %vm2922, %v5114, 0
        %v5163 = vsel %vm2922, %v5116, 0
        %v5166 = vsel %vm2922, %v5126, 0
        %v5169 = vsel %vm2922, %v5128, 0
        %v5172 = vsel %vm2922, %v5130, 0
        %v5175 = vsel %vm2922, %v5132, 0
        %v5178 = vsel %vm2922, %v5134, 0
        %v5181 = vsel %vm2922, %v5136, 0
        %v5184 = vsel %vm2922, %v5138, 0
        %v5187 = vsel %vm2922, %v5140, 0
        %5189 = vmatprep.subr.bf16.mxu0 0
        %5190 = vmatpush1.bf16.xpose.msra.mxu0 %v5187
        %5191 = vmatprep.subr.bf16.mxu0 0
        %5192 = vmatpush1.bf16.xpose.msra.mxu0 %v5184
        %5193 = vmatprep.subr.bf16.mxu0 0
        %5194 = vmatpush1.bf16.xpose.msra.mxu0 %v5181
        %5195 = vmatprep.subr.bf16.mxu0 0
        %5196 = vmatpush1.bf16.xpose.msra.mxu0 %v5178
        %5197 = vmatprep.subr.bf16.mxu0 0
        %5198 = vmatpush1.bf16.xpose.msra.mxu0 %v5175
        %5199 = vmatprep.subr.bf16.mxu0 0
        %5200 = vmatpush1.bf16.xpose.msra.mxu0 %v5172
        %5201 = vmatprep.subr.bf16.mxu0 0
        %5202 = vmatpush1.bf16.xpose.msra.mxu0 %v5169
        %5203 = vmatprep.subr.bf16.mxu0 0
        %5204 = vmatpush1.bf16.xpose.msra.mxu0 %v5166
        %5205 = vmatprep.subr.bf16.mxu0 0
        %5206 = vmatpush2.bf16.xpose.msra.mxu0 0
        %5207 = vmatprep.subr.bf16.mxu0 0
        %5208 = vmatpush2.bf16.xpose.msra.mxu0 0
        %5209 = vmatprep.subr.bf16.mxu0 0
        %5210 = vmatpush2.bf16.xpose.msra.mxu0 0
        %5211 = vmatprep.subr.bf16.mxu0 0
        %5212 = vmatpush2.bf16.xpose.msra.mxu0 0
        %5213 = vmatprep.subr.bf16.mxu0 0
        %5214 = vmatpush2.bf16.xpose.msra.mxu0 0
        %5215 = vmatprep.subr.bf16.mxu0 0
        %5216 = vmatpush2.bf16.xpose.msra.mxu0 0
        %5217 = vmatprep.subr.bf16.mxu0 0
        %5218 = vmatpush2.bf16.xpose.msra.mxu0 0
        %5219 = vmatprep.subr.bf16.mxu0 0
        %5220 = vmatpush2.bf16.xpose.msra.mxu0 0
        %5221 = vmatprep.mubr.bf16.mxu0 0
        %5222 = vmatmul.mubr.bf16.gmra.mxu0 %v5142
        %v5223 = vpop.f32.mrf.mxu0
        %v5224 = vadd.f32 %v2906, %v5223
        %v5225 = vpop.f32.mrf.mxu0
        %v5226 = vpop.f32.mrf.mxu0
        %v5227 = vadd.f32 %v2907, %v5226
        %v5228 = vpop.f32.mrf.mxu0
        %5229 = vmatprep.mubr.bf16.mxu0 0
        %5230 = vmatmul.mubr.bf16.gmra.mxu0 %v5145
        %v5231 = vpop.f32.mrf.mxu0
        %v5232 = vadd.f32 %v2908, %v5231
        %v5233 = vpop.f32.mrf.mxu0
        %v5234 = vpop.f32.mrf.mxu0
        %v5235 = vadd.f32 %v2909, %v5234
        %v5236 = vpop.f32.mrf.mxu0
        %5237 = vmatprep.mubr.bf16.mxu0 0
        %5238 = vmatmul.mubr.bf16.gmra.mxu0 %v5148
        %v5239 = vpop.f32.mrf.mxu0
        %v5240 = vadd.f32 %v2910, %v5239
        %v5241 = vpop.f32.mrf.mxu0
        %v5242 = vpop.f32.mrf.mxu0
        %v5243 = vadd.f32 %v2911, %v5242
        %v5244 = vpop.f32.mrf.mxu0
        %5245 = vmatprep.mubr.bf16.mxu0 0
        %5246 = vmatmul.mubr.bf16.gmra.mxu0 %v5151
        %v5247 = vpop.f32.mrf.mxu0
        %v5248 = vadd.f32 %v2912, %v5247
        %v5249 = vpop.f32.mrf.mxu0
        %v5250 = vpop.f32.mrf.mxu0
        %v5251 = vadd.f32 %v2913, %v5250
        %v5252 = vpop.f32.mrf.mxu0
        %5253 = vmatprep.mubr.bf16.mxu0 0
        %5254 = vmatmul.mubr.bf16.gmra.mxu0 %v5154
        %v5255 = vpop.f32.mrf.mxu0
        %v5256 = vadd.f32 %v2914, %v5255
        %v5257 = vpop.f32.mrf.mxu0
        %v5258 = vpop.f32.mrf.mxu0
        %v5259 = vadd.f32 %v2915, %v5258
        %v5260 = vpop.f32.mrf.mxu0
        %5261 = vmatprep.mubr.bf16.mxu0 0
        %5262 = vmatmul.mubr.bf16.gmra.mxu0 %v5157
        %v5263 = vpop.f32.mrf.mxu0
        %v5264 = vadd.f32 %v2916, %v5263
        %v5265 = vpop.f32.mrf.mxu0
        %v5266 = vpop.f32.mrf.mxu0
        %v5267 = vadd.f32 %v2917, %v5266
        %v5268 = vpop.f32.mrf.mxu0
        %5269 = vmatprep.mubr.bf16.mxu0 0
        %5270 = vmatmul.mubr.bf16.gmra.mxu0 %v5160
        %v5271 = vpop.f32.mrf.mxu0
        %v5272 = vadd.f32 %v2918, %v5271
        %v5273 = vpop.f32.mrf.mxu0
        %v5274 = vpop.f32.mrf.mxu0
        %v5275 = vadd.f32 %v2919, %v5274
        %v5276 = vpop.f32.mrf.mxu0
        %5277 = vmatprep.mubr.bf16.mxu0 0
        %5278 = vmatmul.mubr.bf16.gmra.mxu0 %v5163
        %v5279 = vpop.f32.mrf.mxu0
        %v5280 = vadd.f32 %v2920, %v5279
        %v5281 = vpop.f32.mrf.mxu0
        %v5282 = vpop.f32.mrf.mxu0
        %v5283 = vadd.f32 %v2921, %v5282
        %v5284 = vpop.f32.mrf.mxu0
        %5285 = vdwg.mxu0
        %5286 = vmax.xlane.f32.xlu0 %v5224
        %v5287 = vpop.xlane.xlu0 %5286
        %5288 = vmax.xlane.f32.xlu0 %v5227
        %v5289 = vpop.xlane.xlu0 %5288
        %5290 = vmax.xlane.f32.xlu0 %v5232
        %v5291 = vpop.xlane.xlu0 %5290
        %5292 = vmax.xlane.f32.xlu0 %v5235
        %v5293 = vpop.xlane.xlu0 %5292
        %5294 = vmax.xlane.f32.xlu0 %v5240
        %v5295 = vpop.xlane.xlu0 %5294
        %5296 = vmax.xlane.f32.xlu0 %v5243
        %v5297 = vpop.xlane.xlu0 %5296
        %5298 = vmax.xlane.f32.xlu0 %v5248
        %v5299 = vpop.xlane.xlu0 %5298
        %5300 = vmax.xlane.f32.xlu0 %v5251
        %v5301 = vpop.xlane.xlu0 %5300
        %5302 = vmax.xlane.f32.xlu0 %v5256
        %v5303 = vpop.xlane.xlu0 %5302
        %5304 = vmax.xlane.f32.xlu0 %v5259
        %v5305 = vpop.xlane.xlu0 %5304
        %5306 = vmax.xlane.f32.xlu0 %v5264
        %v5307 = vpop.xlane.xlu0 %5306
        %5308 = vmax.xlane.f32.xlu0 %v5267
        %v5309 = vpop.xlane.xlu0 %5308
        %5310 = vmax.xlane.f32.xlu0 %v5272
        %v5311 = vpop.xlane.xlu0 %5310
        %5312 = vmax.xlane.f32.xlu0 %v5275
        %v5313 = vpop.xlane.xlu0 %5312
        %5314 = vmax.xlane.f32.xlu0 %v5280
        %v5315 = vpop.xlane.xlu0 %5314
        %5316 = vmax.xlane.f32.xlu0 %v5283
        %v5317 = vpop.xlane.xlu0 %5316
        %v5318 = vsub.f32 %v5224, %v5287
        %v5319 = vsub.f32 %v5227, %v5289
        %v5320 = vsub.f32 %v5232, %v5291
        %v5321 = vsub.f32 %v5235, %v5293
        %v5322 = vsub.f32 %v5240, %v5295
        %v5323 = vsub.f32 %v5243, %v5297
        %v5324 = vsub.f32 %v5248, %v5299
        %v5325 = vsub.f32 %v5251, %v5301
        %v5326 = vsub.f32 %v5256, %v5303
        %v5327 = vsub.f32 %v5259, %v5305
        %v5328 = vsub.f32 %v5264, %v5307
        %v5329 = vsub.f32 %v5267, %v5309
        %v5330 = vsub.f32 %v5272, %v5311
        %v5331 = vsub.f32 %v5275, %v5313
        %v5332 = vsub.f32 %v5280, %v5315
        %v5333 = vsub.f32 %v5283, %v5317
        %v5334 = vmul.f32 %v5318, 1.442695
        %v5335 = vpow.pop %v5334
        %v5336 = vmul.f32 %v5319, 1.442695
        %v5337 = vpow.pop %v5336
        %v5338 = vmul.f32 %v5320, 1.442695
        %v5339 = vpow.pop %v5338
        %v5340 = vmul.f32 %v5321, 1.442695
        %v5341 = vpow.pop %v5340
        %v5342 = vmul.f32 %v5322, 1.442695
        %v5343 = vpow.pop %v5342
        %v5344 = vmul.f32 %v5323, 1.442695
        %v5345 = vpow.pop %v5344
        %v5346 = vmul.f32 %v5324, 1.442695
        %v5347 = vpow.pop %v5346
        %v5348 = vmul.f32 %v5325, 1.442695
        %v5349 = vpow.pop %v5348
        %v5350 = vmul.f32 %v5326, 1.442695
        %v5351 = vpow.pop %v5350
        %v5352 = vmul.f32 %v5327, 1.442695
        %v5353 = vpow.pop %v5352
        %v5354 = vmul.f32 %v5328, 1.442695
        %v5355 = vpow.pop %v5354
        %v5356 = vmul.f32 %v5329, 1.442695
        %v5357 = vpow.pop %v5356
        %v5358 = vmul.f32 %v5330, 1.442695
        %v5359 = vpow.pop %v5358
        %v5360 = vmul.f32 %v5331, 1.442695
        %v5361 = vpow.pop %v5360
        %v5362 = vmul.f32 %v5332, 1.442695
        %v5363 = vpow.pop %v5362
        %v5364 = vmul.f32 %v5333, 1.442695
        %v5365 = vpow.pop %v5364
        %5366 = vadd.xlane.f32.xlu0 %v5335
        %v5367 = vpop.xlane.xlu0 %5366
        %5368 = vadd.xlane.f32.xlu0 %v5337
        %v5369 = vpop.xlane.xlu0 %5368
        %5370 = vadd.xlane.f32.xlu0 %v5339
        %v5371 = vpop.xlane.xlu0 %5370
        %5372 = vadd.xlane.f32.xlu0 %v5341
        %v5373 = vpop.xlane.xlu0 %5372
        %5374 = vadd.xlane.f32.xlu0 %v5343
        %v5375 = vpop.xlane.xlu0 %5374
        %5376 = vadd.xlane.f32.xlu0 %v5345
        %v5377 = vpop.xlane.xlu0 %5376
        %5378 = vadd.xlane.f32.xlu0 %v5347
        %v5379 = vpop.xlane.xlu0 %5378
        %5380 = vadd.xlane.f32.xlu0 %v5349
        %v5381 = vpop.xlane.xlu0 %5380
        %5382 = vadd.xlane.f32.xlu0 %v5351
        %v5383 = vpop.xlane.xlu0 %5382
        %5384 = vadd.xlane.f32.xlu0 %v5353
        %v5385 = vpop.xlane.xlu0 %5384
        %5386 = vadd.xlane.f32.xlu0 %v5355
        %v5387 = vpop.xlane.xlu0 %5386
        %5388 = vadd.xlane.f32.xlu0 %v5357
        %v5389 = vpop.xlane.xlu0 %5388
        %5390 = vadd.xlane.f32.xlu0 %v5359
        %v5391 = vpop.xlane.xlu0 %5390
        %5392 = vadd.xlane.f32.xlu0 %v5361
        %v5393 = vpop.xlane.xlu0 %5392
        %5394 = vadd.xlane.f32.xlu0 %v5363
        %v5395 = vpop.xlane.xlu0 %5394
        %5396 = vadd.xlane.f32.xlu0 %v5365
        %v5397 = vpop.xlane.xlu0 %5396
        %v5398 = vrcp.pop %v5367
        %v5399 = vrcp.pop %v5369
        %v5400 = vrcp.pop %v5371
        %v5401 = vrcp.pop %v5373
        %v5402 = vrcp.pop %v5375
        %v5403 = vrcp.pop %v5377
        %v5404 = vrcp.pop %v5379
        %v5405 = vrcp.pop %v5381
        %v5406 = vrcp.pop %v5383
        %v5407 = vrcp.pop %v5385
        %v5408 = vrcp.pop %v5387
        %v5409 = vrcp.pop %v5389
        %v5410 = vrcp.pop %v5391
        %v5411 = vrcp.pop %v5393
        %v5412 = vrcp.pop %v5395
        %v5413 = vrcp.pop %v5397
        %v5414 = vmul.f32 %v5335, %v5398
        %v5415 = vmul.f32 %v5337, %v5399
        %v5416 = vmul.f32 %v5339, %v5400
        %v5417 = vmul.f32 %v5341, %v5401
        %v5418 = vmul.f32 %v5343, %v5402
        %v5419 = vmul.f32 %v5345, %v5403
        %v5420 = vmul.f32 %v5347, %v5404
        %v5421 = vmul.f32 %v5349, %v5405
        %v5422 = vmul.f32 %v5351, %v5406
        %v5423 = vmul.f32 %v5353, %v5407
        %v5424 = vmul.f32 %v5355, %v5408
        %v5425 = vmul.f32 %v5357, %v5409
        %v5426 = vmul.f32 %v5359, %v5410
        %v5427 = vmul.f32 %v5361, %v5411
        %v5428 = vmul.f32 %v5363, %v5412
        %v5429 = vmul.f32 %v5365, %v5413
        %v5430 = vpack.c.bf16 %v5415, %v5414
        %v5431 = vpack.c.bf16 %v5417, %v5416
        %v5432 = vpack.c.bf16 %v5419, %v5418
        %v5433 = vpack.c.bf16 %v5421, %v5420
        %v5434 = vpack.c.bf16 %v5423, %v5422
        %v5435 = vpack.c.bf16 %v5425, %v5424
        %v5436 = vpack.c.bf16 %v5427, %v5426
        %v5437 = vpack.c.bf16 %v5429, %v5428
        %5446 = vrot.lane.b32.xlu0 %v2807, 64
        %v5447 = vpop.permute.xlu0 %5446
        %5448 = vrot.lane.b32.xlu0 %v2816, 64
        %v5449 = vpop.permute.xlu0 %5448
        %5450 = vrot.lane.b32.xlu0 %v2825, 64
        %v5451 = vpop.permute.xlu0 %5450
        %5452 = vrot.lane.b32.xlu0 %v2834, 64
        %v5453 = vpop.permute.xlu0 %5452
        %5454 = vrot.lane.b32.xlu0 %v2843, 64
        %v5455 = vpop.permute.xlu0 %5454
        %5456 = vrot.lane.b32.xlu0 %v2852, 64
        %v5457 = vpop.permute.xlu0 %5456
        %5458 = vrot.lane.b32.xlu0 %v2861, 64
        %v5459 = vpop.permute.xlu0 %5458
        %5460 = vrot.lane.b32.xlu0 %v2870, 64
        %v5461 = vpop.permute.xlu0 %5460
        %5470 = vmatprep.subr.bf16.mxu0 0
        %5471 = vmatpush1.bf16.msra.mxu0 %v5461
        %5472 = vmatprep.subr.bf16.mxu0 0
        %5473 = vmatpush1.bf16.msra.mxu0 %v5459
        %5474 = vmatprep.subr.bf16.mxu0 0
        %5475 = vmatpush1.bf16.msra.mxu0 %v5457
        %5476 = vmatprep.subr.bf16.mxu0 0
        %5477 = vmatpush1.bf16.msra.mxu0 %v5455
        %5478 = vmatprep.subr.bf16.mxu0 0
        %5479 = vmatpush1.bf16.msra.mxu0 %v5453
        %5480 = vmatprep.subr.bf16.mxu0 0
        %5481 = vmatpush1.bf16.msra.mxu0 %v5451
        %5482 = vmatprep.subr.bf16.mxu0 0
        %5483 = vmatpush1.bf16.msra.mxu0 %v5449
        %5484 = vmatprep.subr.bf16.mxu0 0
        %5485 = vmatpush1.bf16.msra.mxu0 %v5447
        %5486 = vmatprep.subr.bf16.mxu0 0
        %5487 = vmatpush2.bf16.msra.mxu0 0
        %5488 = vmatprep.subr.bf16.mxu0 0
        %5489 = vmatpush2.bf16.msra.mxu0 0
        %5490 = vmatprep.subr.bf16.mxu0 0
        %5491 = vmatpush2.bf16.msra.mxu0 0
        %5492 = vmatprep.subr.bf16.mxu0 0
        %5493 = vmatpush2.bf16.msra.mxu0 0
        %5494 = vmatprep.subr.bf16.mxu0 0
        %5495 = vmatpush2.bf16.msra.mxu0 0
        %5496 = vmatprep.subr.bf16.mxu0 0
        %5497 = vmatpush2.bf16.msra.mxu0 0
        %5498 = vmatprep.subr.bf16.mxu0 0
        %5499 = vmatpush2.bf16.msra.mxu0 0
        %5500 = vmatprep.subr.bf16.mxu0 0
        %5501 = vmatpush2.bf16.msra.mxu0 0
        %5502 = vmatprep.mubr.bf16.mxu0 0
        %5503 = vmatmul.mubr.bf16.gmra.mxu0 %v5430
        %v5504 = vpop.f32.mrf.mxu0
        %v5505 = vadd.f32 0.0, %v5504
        %v5506 = vpop.f32.mrf.mxu0
        %v5507 = vpop.f32.mrf.mxu0
        %v5508 = vadd.f32 0.0, %v5507
        %v5509 = vpop.f32.mrf.mxu0
        %5510 = vmatprep.mubr.bf16.mxu0 0
        %5511 = vmatmul.mubr.bf16.gmra.mxu0 %v5431
        %v5512 = vpop.f32.mrf.mxu0
        %v5513 = vadd.f32 0.0, %v5512
        %v5514 = vpop.f32.mrf.mxu0
        %v5515 = vpop.f32.mrf.mxu0
        %v5516 = vadd.f32 0.0, %v5515
        %v5517 = vpop.f32.mrf.mxu0
        %5518 = vmatprep.mubr.bf16.mxu0 0
        %5519 = vmatmul.mubr.bf16.gmra.mxu0 %v5432
        %v5520 = vpop.f32.mrf.mxu0
        %v5521 = vadd.f32 0.0, %v5520
        %v5522 = vpop.f32.mrf.mxu0
        %v5523 = vpop.f32.mrf.mxu0
        %v5524 = vadd.f32 0.0, %v5523
        %v5525 = vpop.f32.mrf.mxu0
        %5526 = vmatprep.mubr.bf16.mxu0 0
        %5527 = vmatmul.mubr.bf16.gmra.mxu0 %v5433
        %v5528 = vpop.f32.mrf.mxu0
        %v5529 = vadd.f32 0.0, %v5528
        %v5530 = vpop.f32.mrf.mxu0
        %v5531 = vpop.f32.mrf.mxu0
        %v5532 = vadd.f32 0.0, %v5531
        %v5533 = vpop.f32.mrf.mxu0
        %5534 = vmatprep.mubr.bf16.mxu0 0
        %5535 = vmatmul.mubr.bf16.gmra.mxu0 %v5434
        %v5536 = vpop.f32.mrf.mxu0
        %v5537 = vadd.f32 0.0, %v5536
        %v5538 = vpop.f32.mrf.mxu0
        %v5539 = vpop.f32.mrf.mxu0
        %v5540 = vadd.f32 0.0, %v5539
        %v5541 = vpop.f32.mrf.mxu0
        %5542 = vmatprep.mubr.bf16.mxu0 0
        %5543 = vmatmul.mubr.bf16.gmra.mxu0 %v5435
        %v5544 = vpop.f32.mrf.mxu0
        %v5545 = vadd.f32 0.0, %v5544
        %v5546 = vpop.f32.mrf.mxu0
        %v5547 = vpop.f32.mrf.mxu0
        %v5548 = vadd.f32 0.0, %v5547
        %v5549 = vpop.f32.mrf.mxu0
        %5550 = vmatprep.mubr.bf16.mxu0 0
        %5551 = vmatmul.mubr.bf16.gmra.mxu0 %v5436
        %v5552 = vpop.f32.mrf.mxu0
        %v5553 = vadd.f32 0.0, %v5552
        %v5554 = vpop.f32.mrf.mxu0
        %v5555 = vpop.f32.mrf.mxu0
        %v5556 = vadd.f32 0.0, %v5555
        %v5557 = vpop.f32.mrf.mxu0
        %5558 = vmatprep.mubr.bf16.mxu0 0
        %5559 = vmatmul.mubr.bf16.gmra.mxu0 %v5437
        %v5560 = vpop.f32.mrf.mxu0
        %v5561 = vadd.f32 0.0, %v5560
        %v5562 = vpop.f32.mrf.mxu0
        %v5563 = vpop.f32.mrf.mxu0
        %v5564 = vadd.f32 0.0, %v5563
        %v5565 = vpop.f32.mrf.mxu0
        %5566 = vdwg.mxu0
        %v5567 = vpack.c.bf16 %v5508, %v5505
        %v5568 = vpack.c.bf16 %v5516, %v5513
        %v5569 = vpack.c.bf16 %v5524, %v5521
        %v5570 = vpack.c.bf16 %v5532, %v5529
        %v5571 = vpack.c.bf16 %v5540, %v5537
        %v5572 = vpack.c.bf16 %v5548, %v5545
        %v5573 = vpack.c.bf16 %v5556, %v5553
        %v5574 = vpack.c.bf16 %v5564, %v5561
        %5583 = vrot.lane.b32.xlu0 %v3799, 64
        %v5584 = vpop.permute.xlu0 %5583
        %5585 = vrot.lane.b32.xlu0 %v3800, 64
        %v5586 = vpop.permute.xlu0 %5585
        %5587 = vrot.lane.b32.xlu0 %v3801, 64
        %v5588 = vpop.permute.xlu0 %5587
        %5589 = vrot.lane.b32.xlu0 %v3802, 64
        %v5590 = vpop.permute.xlu0 %5589
        %5591 = vrot.lane.b32.xlu0 %v3803, 64
        %v5592 = vpop.permute.xlu0 %5591
        %5593 = vrot.lane.b32.xlu0 %v3804, 64
        %v5594 = vpop.permute.xlu0 %5593
        %5595 = vrot.lane.b32.xlu0 %v3805, 64
        %v5596 = vpop.permute.xlu0 %5595
        %5597 = vrot.lane.b32.xlu0 %v3806, 64
        %v5598 = vpop.permute.xlu0 %5597
        %5607 = vrot.lane.b32.xlu0 %v4683, 64
        %v5608 = vpop.permute.xlu0 %5607
        %5609 = vrot.lane.b32.xlu0 %v4684, 64
        %v5610 = vpop.permute.xlu0 %5609
        %5611 = vrot.lane.b32.xlu0 %v4685, 64
        %v5612 = vpop.permute.xlu0 %5611
        %5613 = vrot.lane.b32.xlu0 %v4686, 64
        %v5614 = vpop.permute.xlu0 %5613
        %5615 = vrot.lane.b32.xlu0 %v4687, 64
        %v5616 = vpop.permute.xlu0 %5615
        %5617 = vrot.lane.b32.xlu0 %v4688, 64
        %v5618 = vpop.permute.xlu0 %5617
        %5619 = vrot.lane.b32.xlu0 %v4689, 64
        %v5620 = vpop.permute.xlu0 %5619
        %5621 = vrot.lane.b32.xlu0 %v4690, 64
        %v5622 = vpop.permute.xlu0 %5621
        %5631 = vrot.lane.b32.xlu0 %v5567, 64
        %v5632 = vpop.permute.xlu0 %5631
        %5633 = vrot.lane.b32.xlu0 %v5568, 64
        %v5634 = vpop.permute.xlu0 %5633
        %5635 = vrot.lane.b32.xlu0 %v5569, 64
        %v5636 = vpop.permute.xlu0 %5635
        %5637 = vrot.lane.b32.xlu0 %v5570, 64
        %v5638 = vpop.permute.xlu0 %5637
        %5639 = vrot.lane.b32.xlu0 %v5571, 64
        %v5640 = vpop.permute.xlu0 %5639
        %5641 = vrot.lane.b32.xlu0 %v5572, 64
        %v5642 = vpop.permute.xlu0 %5641
        %5643 = vrot.lane.b32.xlu0 %v5573, 64
        %v5644 = vpop.permute.xlu0 %5643
        %5645 = vrot.lane.b32.xlu0 %v5574, 64
        %v5646 = vpop.permute.xlu0 %5645
        %v5649 = vsel %vm2922, %v3317, %v5584
        %v5653 = vsel %vm2922, %v3318, %v5586
        %v5657 = vsel %vm2922, %v3319, %v5588
        %v5661 = vsel %vm2922, %v3320, %v5590
        %v5665 = vsel %vm2922, %v3321, %v5592
        %v5669 = vsel %vm2922, %v3322, %v5594
        %v5673 = vsel %vm2922, %v3323, %v5596
        %v5677 = vsel %vm2922, %v3324, %v5598
        %v5681 = vsel %vm2922, %v4201, %v5608
        %v5685 = vsel %vm2922, %v4202, %v5610
        %v5689 = vsel %vm2922, %v4203, %v5612
        %v5693 = vsel %vm2922, %v4204, %v5614
        %v5697 = vsel %vm2922, %v4205, %v5616
        %v5701 = vsel %vm2922, %v4206, %v5618
        %v5705 = vsel %vm2922, %v4207, %v5620
        %v5709 = vsel %vm2922, %v4208, %v5622
        %v5713 = vsel %vm2922, %v5085, %v5632
        %v5717 = vsel %vm2922, %v5086, %v5634
        %v5721 = vsel %vm2922, %v5087, %v5636
        %v5725 = vsel %vm2922, %v5088, %v5638
        %v5729 = vsel %vm2922, %v5089, %v5640
        %v5733 = vsel %vm2922, %v5090, %v5642
        %v5737 = vsel %vm2922, %v5091, %v5644
        %v5741 = vsel %vm2922, %v5092, %v5646
        %v5743 = vld [vmem:[%s2] sm:$0xff]
        %v5744 = vld [vmem:[%s2 + $0x8] sm:$0xf]
        %v5745 = vld [vmem:[%s2 + $0xc] sm:$0xff]
        %v5746 = vld [vmem:[%s2 + $0x14] sm:$0xf]
        %v5747 = vld [vmem:[%s2 + $0x18] sm:$0xff]
        %v5748 = vld [vmem:[%s2 + $0x20] sm:$0xf]
        %v5749 = vld [vmem:[%s2 + $0x24] sm:$0xff]
        %v5750 = vld [vmem:[%s2 + $0x2c] sm:$0xf]
        %v5751 = vld [vmem:[%s2 + $0x30] sm:$0xff]
        %v5752 = vld [vmem:[%s2 + $0x38] sm:$0xf]
        %v5753 = vld [vmem:[%s2 + $0x3c] sm:$0xff]
        %v5754 = vld [vmem:[%s2 + $0x44] sm:$0xf]
        %v5755 = vld [vmem:[%s2 + $0x48] sm:$0xff]
        %v5756 = vld [vmem:[%s2 + $0x50] sm:$0xf]
        %v5757 = vld [vmem:[%s2 + $0x54] sm:$0xff]
        %v5758 = vld [vmem:[%s2 + $0x5c] sm:$0xf]
        %v5759 = vld [vmem:[%s2 + $0x60] sm:$0xff]
        %v5760 = vld [vmem:[%s2 + $0x68] sm:$0xf]
        %v5761 = vld [vmem:[%s2 + $0x6c] sm:$0xff]
        %v5762 = vld [vmem:[%s2 + $0x74] sm:$0xf]
        %v5763 = vld [vmem:[%s2 + $0x78] sm:$0xff]
        %v5764 = vld [vmem:[%s2 + $0x80] sm:$0xf]
        %v5765 = vld [vmem:[%s2 + $0x84] sm:$0xff]
        %v5766 = vld [vmem:[%s2 + $0x8c] sm:$0xf]
        %v5767 = vld [vmem:[%s2 + $0x90] sm:$0xff]
        %v5768 = vld [vmem:[%s2 + $0x98] sm:$0xf]
        %v5769 = vld [vmem:[%s2 + $0x9c] sm:$0xff]
        %v5770 = vld [vmem:[%s2 + $0xa4] sm:$0xf]
        %v5771 = vld [vmem:[%s2 + $0xa8] sm:$0xff]
        %v5772 = vld [vmem:[%s2 + $0xb0] sm:$0xf]
        %v5773 = vld [vmem:[%s2 + $0xb4] sm:$0xff]
        %v5774 = vld [vmem:[%s2 + $0xbc] sm:$0xf]
        %v5775 = vld [vmem:[%s2 + $0xc0] sm:$0xff]
        %v5776 = vld [vmem:[%s2 + $0xc8] sm:$0xf]
        %v5777 = vld [vmem:[%s2 + $0xcc] sm:$0xff]
        %v5778 = vld [vmem:[%s2 + $0xd4] sm:$0xf]
        %v5779 = vld [vmem:[%s2 + $0xd8] sm:$0xff]
        %v5780 = vld [vmem:[%s2 + $0xe0] sm:$0xf]
        %v5781 = vld [vmem:[%s2 + $0xe4] sm:$0xff]
        %v5782 = vld [vmem:[%s2 + $0xec] sm:$0xf]
        %v5783 = vld [vmem:[%s2 + $0xf0] sm:$0xff]
        %v5784 = vld [vmem:[%s2 + $0xf8] sm:$0xf]
        %v5785 = vld [vmem:[%s2 + $0xfc] sm:$0xff]
        %v5786 = vld [vmem:[%s2 + $0x104] sm:$0xf]
        %v5787 = vld [vmem:[%s2 + $0x108] sm:$0xff]
        %v5788 = vld [vmem:[%s2 + $0x110] sm:$0xf]
        %v5789 = vld [vmem:[%s2 + $0x114] sm:$0xff]
        %v5790 = vld [vmem:[%s2 + $0x11c] sm:$0xf]
        %v5791 = vld [vmem:[%s2 + $0x120] sm:$0xff]
        %v5792 = vld [vmem:[%s2 + $0x128] sm:$0xf]
        %v5793 = vld [vmem:[%s2 + $0x12c] sm:$0xff]
        %v5794 = vld [vmem:[%s2 + $0x134] sm:$0xf]
        %v5795 = vld [vmem:[%s2 + $0x138] sm:$0xff]
        %v5796 = vld [vmem:[%s2 + $0x140] sm:$0xf]
        %v5797 = vld [vmem:[%s2 + $0x144] sm:$0xff]
        %v5798 = vld [vmem:[%s2 + $0x14c] sm:$0xf]
        %v5799 = vld [vmem:[%s2 + $0x150] sm:$0xff]
        %v5800 = vld [vmem:[%s2 + $0x158] sm:$0xf]
        %v5801 = vld [vmem:[%s2 + $0x15c] sm:$0xff]
        %v5802 = vld [vmem:[%s2 + $0x164] sm:$0xf]
        %v5803 = vld [vmem:[%s2 + $0x168] sm:$0xff]
        %v5804 = vld [vmem:[%s2 + $0x170] sm:$0xf]
        %v5805 = vld [vmem:[%s2 + $0x174] sm:$0xff]
        %v5806 = vld [vmem:[%s2 + $0x17c] sm:$0xf]
        %v5807 = vld [vmem:[%s2 + $0x180] sm:$0xff]
        %v5808 = vld [vmem:[%s2 + $0x188] sm:$0xf]
        %v5809 = vld [vmem:[%s2 + $0x18c] sm:$0xff]
        %v5810 = vld [vmem:[%s2 + $0x194] sm:$0xf]
        %v5811 = vld [vmem:[%s2 + $0x198] sm:$0xff]
        %v5812 = vld [vmem:[%s2 + $0x1a0] sm:$0xf]
        %v5813 = vld [vmem:[%s2 + $0x1a4] sm:$0xff]
        %v5814 = vld [vmem:[%s2 + $0x1ac] sm:$0xf]
        %v5815 = vld [vmem:[%s2 + $0x1b0] sm:$0xff]
        %v5816 = vld [vmem:[%s2 + $0x1b8] sm:$0xf]
        %v5817 = vld [vmem:[%s2 + $0x1bc] sm:$0xff]
        %v5818 = vld [vmem:[%s2 + $0x1c4] sm:$0xf]
        %v5819 = vld [vmem:[%s2 + $0x1c8] sm:$0xff]
        %v5820 = vld [vmem:[%s2 + $0x1d0] sm:$0xf]
        %v5821 = vld [vmem:[%s2 + $0x1d4] sm:$0xff]
        %v5822 = vld [vmem:[%s2 + $0x1dc] sm:$0xf]
        %v5823 = vld [vmem:[%s2 + $0x1e0] sm:$0xff]
        %v5824 = vld [vmem:[%s2 + $0x1e8] sm:$0xf]
        %v5825 = vld [vmem:[%s2 + $0x1ec] sm:$0xff]
        %v5826 = vld [vmem:[%s2 + $0x1f4] sm:$0xf]
        %v5827 = vld [vmem:[%s2 + $0x1f8] sm:$0xff]
        %v5828 = vld [vmem:[%s2 + $0x200] sm:$0xf]
        %v5829 = vld [vmem:[%s2 + $0x204] sm:$0xff]
        %v5830 = vld [vmem:[%s2 + $0x20c] sm:$0xf]
        %v5831 = vld [vmem:[%s2 + $0x210] sm:$0xff]
        %v5832 = vld [vmem:[%s2 + $0x218] sm:$0xf]
        %v5833 = vld [vmem:[%s2 + $0x21c] sm:$0xff]
        %v5834 = vld [vmem:[%s2 + $0x224] sm:$0xf]
        %v5835 = vld [vmem:[%s2 + $0x228] sm:$0xff]
        %v5836 = vld [vmem:[%s2 + $0x230] sm:$0xf]
        %v5837 = vld [vmem:[%s2 + $0x234] sm:$0xff]
        %v5838 = vld [vmem:[%s2 + $0x23c] sm:$0xf]
        %v5839 = vld [vmem:[%s3] sm:$0x7]
        %v5841 = vlaneseq
        %v5842 = vshrl.u32 %v5841, 7
        %v5843 = vsub.s32 0, %v5842
        %v5844 = vrot.slane %v5839, %v5843
        %v5845 = vlaneseq
        %v5846 = vshrl.u32 %v5845, 7
        %v5847 = vsub.s32 1, %v5846
        %v5848 = vrot.slane %v5839, %v5847
        %v5849 = vlaneseq
        %v5850 = vshrl.u32 %v5849, 7
        %v5851 = vsub.s32 2, %v5850
        %v5852 = vrot.slane %v5839, %v5851
        %v5952 = vunpack.c.l.b16 %v5743
        %v5953 = vunpack.c.h.b16 %v5743
        %v5954 = vunpack.c.l.b16 %v5744
        %v5955 = vunpack.c.l.b16 %v5745
        %v5956 = vunpack.c.h.b16 %v5745
        %v5957 = vunpack.c.l.b16 %v5746
        %v5958 = vunpack.c.l.b16 %v5747
        %v5959 = vunpack.c.h.b16 %v5747
        %v5960 = vunpack.c.l.b16 %v5748
        %v5961 = vunpack.c.l.b16 %v5749
        %v5962 = vunpack.c.h.b16 %v5749
        %v5963 = vunpack.c.l.b16 %v5750
        %v5964 = vunpack.c.l.b16 %v5751
        %v5965 = vunpack.c.h.b16 %v5751
        %v5966 = vunpack.c.l.b16 %v5752
        %v5967 = vunpack.c.l.b16 %v5753
        %v5968 = vunpack.c.h.b16 %v5753
        %v5969 = vunpack.c.l.b16 %v5754
        %v5970 = vunpack.c.l.b16 %v5755
        %v5971 = vunpack.c.h.b16 %v5755
        %v5972 = vunpack.c.l.b16 %v5756
        %v5973 = vunpack.c.l.b16 %v5757
        %v5974 = vunpack.c.h.b16 %v5757
        %v5975 = vunpack.c.l.b16 %v5758
        %v5976 = vunpack.c.l.b16 %v5759
        %v5977 = vunpack.c.h.b16 %v5759
        %v5978 = vunpack.c.l.b16 %v5760
        %v5979 = vunpack.c.l.b16 %v5761
        %v5980 = vunpack.c.h.b16 %v5761
        %v5981 = vunpack.c.l.b16 %v5762
        %v5982 = vunpack.c.l.b16 %v5763
        %v5983 = vunpack.c.h.b16 %v5763
        %v5984 = vunpack.c.l.b16 %v5764
        %v5985 = vunpack.c.l.b16 %v5765
        %v5986 = vunpack.c.h.b16 %v5765
        %v5987 = vunpack.c.l.b16 %v5766
        %v5988 = vunpack.c.l.b16 %v5767
        %v5989 = vunpack.c.h.b16 %v5767
        %v5990 = vunpack.c.l.b16 %v5768
        %v5991 = vunpack.c.l.b16 %v5769
        %v5992 = vunpack.c.h.b16 %v5769
        %v5993 = vunpack.c.l.b16 %v5770
        %v5994 = vunpack.c.l.b16 %v5771
        %v5995 = vunpack.c.h.b16 %v5771
        %v5996 = vunpack.c.l.b16 %v5772
        %v5997 = vunpack.c.l.b16 %v5773
        %v5998 = vunpack.c.h.b16 %v5773
        %v5999 = vunpack.c.l.b16 %v5774
        %v6000 = vunpack.c.l.b16 %v5775
        %v6001 = vunpack.c.h.b16 %v5775
        %v6002 = vunpack.c.l.b16 %v5776
        %v6003 = vunpack.c.l.b16 %v5777
        %v6004 = vunpack.c.h.b16 %v5777
        %v6005 = vunpack.c.l.b16 %v5778
        %v6006 = vunpack.c.l.b16 %v5779
        %v6007 = vunpack.c.h.b16 %v5779
        %v6008 = vunpack.c.l.b16 %v5780
        %v6009 = vunpack.c.l.b16 %v5781
        %v6010 = vunpack.c.h.b16 %v5781
        %v6011 = vunpack.c.l.b16 %v5782
        %v6012 = vunpack.c.l.b16 %v5783
        %v6013 = vunpack.c.h.b16 %v5783
        %v6014 = vunpack.c.l.b16 %v5784
        %v6015 = vunpack.c.l.b16 %v5785
        %v6016 = vunpack.c.h.b16 %v5785
        %v6017 = vunpack.c.l.b16 %v5786
        %v6018 = vunpack.c.l.b16 %v5787
        %v6019 = vunpack.c.h.b16 %v5787
        %v6020 = vunpack.c.l.b16 %v5788
        %v6021 = vunpack.c.l.b16 %v5789
        %v6022 = vunpack.c.h.b16 %v5789
        %v6023 = vunpack.c.l.b16 %v5790
        %v6024 = vunpack.c.l.b16 %v5791
        %v6025 = vunpack.c.h.b16 %v5791
        %v6026 = vunpack.c.l.b16 %v5792
        %v6027 = vunpack.c.l.b16 %v5793
        %v6028 = vunpack.c.h.b16 %v5793
        %v6029 = vunpack.c.l.b16 %v5794
        %v6030 = vunpack.c.l.b16 %v5795
        %v6031 = vunpack.c.h.b16 %v5795
        %v6032 = vunpack.c.l.b16 %v5796
        %v6033 = vunpack.c.l.b16 %v5797
        %v6034 = vunpack.c.h.b16 %v5797
        %v6035 = vunpack.c.l.b16 %v5798
        %v6036 = vunpack.c.l.b16 %v5799
        %v6037 = vunpack.c.h.b16 %v5799
        %v6038 = vunpack.c.l.b16 %v5800
        %v6039 = vunpack.c.l.b16 %v5801
        %v6040 = vunpack.c.h.b16 %v5801
        %v6041 = vunpack.c.l.b16 %v5802
        %v6042 = vunpack.c.l.b16 %v5803
        %v6043 = vunpack.c.h.b16 %v5803
        %v6044 = vunpack.c.l.b16 %v5804
        %v6045 = vunpack.c.l.b16 %v5805
        %v6046 = vunpack.c.h.b16 %v5805
        %v6047 = vunpack.c.l.b16 %v5806
        %v6048 = vunpack.c.l.b16 %v5807
        %v6049 = vunpack.c.h.b16 %v5807
        %v6050 = vunpack.c.l.b16 %v5808
        %v6051 = vunpack.c.l.b16 %v5809
        %v6052 = vunpack.c.h.b16 %v5809
        %v6053 = vunpack.c.l.b16 %v5810
        %v6054 = vunpack.c.l.b16 %v5811
        %v6055 = vunpack.c.h.b16 %v5811
        %v6056 = vunpack.c.l.b16 %v5812
        %v6057 = vunpack.c.l.b16 %v5813
        %v6058 = vunpack.c.h.b16 %v5813
        %v6059 = vunpack.c.l.b16 %v5814
        %v6060 = vunpack.c.l.b16 %v5815
        %v6061 = vunpack.c.h.b16 %v5815
        %v6062 = vunpack.c.l.b16 %v5816
        %v6063 = vunpack.c.l.b16 %v5817
        %v6064 = vunpack.c.h.b16 %v5817
        %v6065 = vunpack.c.l.b16 %v5818
        %v6066 = vunpack.c.l.b16 %v5819
        %v6067 = vunpack.c.h.b16 %v5819
        %v6068 = vunpack.c.l.b16 %v5820
        %v6069 = vunpack.c.l.b16 %v5821
        %v6070 = vunpack.c.h.b16 %v5821
        %v6071 = vunpack.c.l.b16 %v5822
        %v6072 = vunpack.c.l.b16 %v5823
        %v6073 = vunpack.c.h.b16 %v5823
        %v6074 = vunpack.c.l.b16 %v5824
        %v6075 = vunpack.c.l.b16 %v5825
        %v6076 = vunpack.c.h.b16 %v5825
        %v6077 = vunpack.c.l.b16 %v5826
        %v6078 = vunpack.c.l.b16 %v5827
        %v6079 = vunpack.c.h.b16 %v5827
        %v6080 = vunpack.c.l.b16 %v5828
        %v6081 = vunpack.c.l.b16 %v5829
        %v6082 = vunpack.c.h.b16 %v5829
        %v6083 = vunpack.c.l.b16 %v5830
        %v6084 = vunpack.c.l.b16 %v5831
        %v6085 = vunpack.c.h.b16 %v5831
        %v6086 = vunpack.c.l.b16 %v5832
        %v6087 = vunpack.c.l.b16 %v5833
        %v6088 = vunpack.c.h.b16 %v5833
        %v6089 = vunpack.c.l.b16 %v5834
        %v6090 = vunpack.c.l.b16 %v5835
        %v6091 = vunpack.c.h.b16 %v5835
        %v6092 = vunpack.c.l.b16 %v5836
        %v6093 = vunpack.c.l.b16 %v5837
        %v6094 = vunpack.c.h.b16 %v5837
        %v6095 = vunpack.c.l.b16 %v5838
        %v6096 = vpack.c.b16 %v5955, %v5952
        %v6097 = vpack.c.b16 %v5956, %v5953
        %v6098 = vpack.c.b16 %v5957, %v5954
        %v6099 = vpack.c.b16 %v5961, %v5958
        %v6100 = vpack.c.b16 %v5962, %v5959
        %v6101 = vpack.c.b16 %v5963, %v5960
        %v6102 = vpack.c.b16 %v5967, %v5964
        %v6103 = vpack.c.b16 %v5968, %v5965
        %v6104 = vpack.c.b16 %v5969, %v5966
        %v6105 = vpack.c.b16 %v5973, %v5970
        %v6106 = vpack.c.b16 %v5974, %v5971
        %v6107 = vpack.c.b16 %v5975, %v5972
        %v6108 = vpack.c.b16 %v5979, %v5976
        %v6109 = vpack.c.b16 %v5980, %v5977
        %v6110 = vpack.c.b16 %v5981, %v5978
        %v6111 = vpack.c.b16 %v5985, %v5982
        %v6112 = vpack.c.b16 %v5986, %v5983
        %v6113 = vpack.c.b16 %v5987, %v5984
        %v6114 = vpack.c.b16 %v5991, %v5988
        %v6115 = vpack.c.b16 %v5992, %v5989
        %v6116 = vpack.c.b16 %v5993, %v5990
        %v6117 = vpack.c.b16 %v5997, %v5994
        %v6118 = vpack.c.b16 %v5998, %v5995
        %v6119 = vpack.c.b16 %v5999, %v5996
        %v6120 = vpack.c.b16 %v6003, %v6000
        %v6121 = vpack.c.b16 %v6004, %v6001
        %v6122 = vpack.c.b16 %v6005, %v6002
        %v6123 = vpack.c.b16 %v6009, %v6006
        %v6124 = vpack.c.b16 %v6010, %v6007
        %v6125 = vpack.c.b16 %v6011, %v6008
        %v6126 = vpack.c.b16 %v6015, %v6012
        %v6127 = vpack.c.b16 %v6016, %v6013
        %v6128 = vpack.c.b16 %v6017, %v6014
        %v6129 = vpack.c.b16 %v6021, %v6018
        %v6130 = vpack.c.b16 %v6022, %v6019
        %v6131 = vpack.c.b16 %v6023, %v6020
        %v6132 = vpack.c.b16 %v6027, %v6024
        %v6133 = vpack.c.b16 %v6028, %v6025
        %v6134 = vpack.c.b16 %v6029, %v6026
        %v6135 = vpack.c.b16 %v6033, %v6030
        %v6136 = vpack.c.b16 %v6034, %v6031
        %v6137 = vpack.c.b16 %v6035, %v6032
        %v6138 = vpack.c.b16 %v6039, %v6036
        %v6139 = vpack.c.b16 %v6040, %v6037
        %v6140 = vpack.c.b16 %v6041, %v6038
        %v6141 = vpack.c.b16 %v6045, %v6042
        %v6142 = vpack.c.b16 %v6046, %v6043
        %v6143 = vpack.c.b16 %v6047, %v6044
        %v6144 = vpack.c.b16 %v6051, %v6048
        %v6145 = vpack.c.b16 %v6052, %v6049
        %v6146 = vpack.c.b16 %v6053, %v6050
        %v6147 = vpack.c.b16 %v6057, %v6054
        %v6148 = vpack.c.b16 %v6058, %v6055
        %v6149 = vpack.c.b16 %v6059, %v6056
        %v6150 = vpack.c.b16 %v6063, %v6060
        %v6151 = vpack.c.b16 %v6064, %v6061
        %v6152 = vpack.c.b16 %v6065, %v6062
        %v6153 = vpack.c.b16 %v6069, %v6066
        %v6154 = vpack.c.b16 %v6070, %v6067
        %v6155 = vpack.c.b16 %v6071, %v6068
        %v6156 = vpack.c.b16 %v6075, %v6072
        %v6157 = vpack.c.b16 %v6076, %v6073
        %v6158 = vpack.c.b16 %v6077, %v6074
        %v6159 = vpack.c.b16 %v6081, %v6078
        %v6160 = vpack.c.b16 %v6082, %v6079
        %v6161 = vpack.c.b16 %v6083, %v6080
        %v6162 = vpack.c.b16 %v6087, %v6084
        %v6163 = vpack.c.b16 %v6088, %v6085
        %v6164 = vpack.c.b16 %v6089, %v6086
        %v6165 = vpack.c.b16 %v6093, %v6090
        %v6166 = vpack.c.b16 %v6094, %v6091
        %v6167 = vpack.c.b16 %v6095, %v6092
        %6240 = vmatprep.subr.bf16.mxu0 %v6118
        %6241 = vmatpush1.bf16.msra.mxu0 %v6117
        %6242 = vmatprep.subr.bf16.mxu0 %v6115
        %6243 = vmatpush1.bf16.msra.mxu0 %v6114
        %6244 = vmatprep.subr.bf16.mxu0 %v6112
        %6245 = vmatpush1.bf16.msra.mxu0 %v6111
        %6246 = vmatprep.subr.bf16.mxu0 %v6109
        %6247 = vmatpush1.bf16.msra.mxu0 %v6108
        %6248 = vmatprep.subr.bf16.mxu0 %v6106
        %6249 = vmatpush1.bf16.msra.mxu0 %v6105
        %6250 = vmatprep.subr.bf16.mxu0 %v6103
        %6251 = vmatpush1.bf16.msra.mxu0 %v6102
        %6252 = vmatprep.subr.bf16.mxu0 %v6100
        %6253 = vmatpush1.bf16.msra.mxu0 %v6099
        %6254 = vmatprep.subr.bf16.mxu0 %v6097
        %6255 = vmatpush1.bf16.msra.mxu0 %v6096
        %6256 = vmatprep.subr.bf16.mxu0 %v6142
        %6257 = vmatpush2.bf16.msra.mxu0 %v6141
        %6258 = vmatprep.subr.bf16.mxu0 %v6139
        %6259 = vmatpush2.bf16.msra.mxu0 %v6138
        %6260 = vmatprep.subr.bf16.mxu0 %v6136
        %6261 = vmatpush2.bf16.msra.mxu0 %v6135
        %6262 = vmatprep.subr.bf16.mxu0 %v6133
        %6263 = vmatpush2.bf16.msra.mxu0 %v6132
        %6264 = vmatprep.subr.bf16.mxu0 %v6130
        %6265 = vmatpush2.bf16.msra.mxu0 %v6129
        %6266 = vmatprep.subr.bf16.mxu0 %v6127
        %6267 = vmatpush2.bf16.msra.mxu0 %v6126
        %6268 = vmatprep.subr.bf16.mxu0 %v6124
        %6269 = vmatpush2.bf16.msra.mxu0 %v6123
        %6270 = vmatprep.subr.bf16.mxu0 %v6121
        %6271 = vmatpush2.bf16.msra.mxu0 %v6120
        %6272 = vmatprep.mubr.bf16.mxu0 %v5681
        %6273 = vmatmul.mubr.bf16.gmra.mxu0 %v5649
        %v6274 = vpop.f32.mrf.mxu0
        %v6275 = vadd.f32 %v5844, %v6274
        %v6276 = vpop.f32.mrf.mxu0
        %v6277 = vadd.f32 %v5848, %v6276
        %v6278 = vpop.f32.mrf.mxu0
        %v6279 = vadd.f32 %v5844, %v6278
        %v6280 = vpop.f32.mrf.mxu0
        %v6281 = vadd.f32 %v5848, %v6280
        %6282 = vmatprep.mubr.bf16.mxu0 %v5685
        %6283 = vmatmul.mubr.bf16.gmra.mxu0 %v5653
        %v6284 = vpop.f32.mrf.mxu0
        %v6285 = vadd.f32 %v5844, %v6284
        %v6286 = vpop.f32.mrf.mxu0
        %v6287 = vadd.f32 %v5848, %v6286
        %v6288 = vpop.f32.mrf.mxu0
        %v6289 = vadd.f32 %v5844, %v6288
        %v6290 = vpop.f32.mrf.mxu0
        %v6291 = vadd.f32 %v5848, %v6290
        %6292 = vmatprep.mubr.bf16.mxu0 %v5689
        %6293 = vmatmul.mubr.bf16.gmra.mxu0 %v5657
        %v6294 = vpop.f32.mrf.mxu0
        %v6295 = vadd.f32 %v5844, %v6294
        %v6296 = vpop.f32.mrf.mxu0
        %v6297 = vadd.f32 %v5848, %v6296
        %v6298 = vpop.f32.mrf.mxu0
        %v6299 = vadd.f32 %v5844, %v6298
        %v6300 = vpop.f32.mrf.mxu0
        %v6301 = vadd.f32 %v5848, %v6300
        %6302 = vmatprep.mubr.bf16.mxu0 %v5693
        %6303 = vmatmul.mubr.bf16.gmra.mxu0 %v5661
        %v6304 = vpop.f32.mrf.mxu0
        %v6305 = vadd.f32 %v5844, %v6304
        %v6306 = vpop.f32.mrf.mxu0
        %v6307 = vadd.f32 %v5848, %v6306
        %v6308 = vpop.f32.mrf.mxu0
        %v6309 = vadd.f32 %v5844, %v6308
        %v6310 = vpop.f32.mrf.mxu0
        %v6311 = vadd.f32 %v5848, %v6310
        %6312 = vmatprep.mubr.bf16.mxu0 %v5697
        %6313 = vmatmul.mubr.bf16.gmra.mxu0 %v5665
        %v6314 = vpop.f32.mrf.mxu0
        %v6315 = vadd.f32 %v5844, %v6314
        %v6316 = vpop.f32.mrf.mxu0
        %v6317 = vadd.f32 %v5848, %v6316
        %v6318 = vpop.f32.mrf.mxu0
        %v6319 = vadd.f32 %v5844, %v6318
        %v6320 = vpop.f32.mrf.mxu0
        %v6321 = vadd.f32 %v5848, %v6320
        %6322 = vmatprep.mubr.bf16.mxu0 %v5701
        %6323 = vmatmul.mubr.bf16.gmra.mxu0 %v5669
        %v6324 = vpop.f32.mrf.mxu0
        %v6325 = vadd.f32 %v5844, %v6324
        %v6326 = vpop.f32.mrf.mxu0
        %v6327 = vadd.f32 %v5848, %v6326
        %v6328 = vpop.f32.mrf.mxu0
        %v6329 = vadd.f32 %v5844, %v6328
        %v6330 = vpop.f32.mrf.mxu0
        %v6331 = vadd.f32 %v5848, %v6330
        %6332 = vmatprep.mubr.bf16.mxu0 %v5705
        %6333 = vmatmul.mubr.bf16.gmra.mxu0 %v5673
        %v6334 = vpop.f32.mrf.mxu0
        %v6335 = vadd.f32 %v5844, %v6334
        %v6336 = vpop.f32.mrf.mxu0
        %v6337 = vadd.f32 %v5848, %v6336
        %v6338 = vpop.f32.mrf.mxu0
        %v6339 = vadd.f32 %v5844, %v6338
        %v6340 = vpop.f32.mrf.mxu0
        %v6341 = vadd.f32 %v5848, %v6340
        %6342 = vmatprep.mubr.bf16.mxu0 %v5709
        %6343 = vmatmul.mubr.bf16.gmra.mxu0 %v5677
        %v6344 = vpop.f32.mrf.mxu0
        %v6345 = vadd.f32 %v5844, %v6344
        %v6346 = vpop.f32.mrf.mxu0
        %v6347 = vadd.f32 %v5848, %v6346
        %v6348 = vpop.f32.mrf.mxu0
        %v6349 = vadd.f32 %v5844, %v6348
        %v6350 = vpop.f32.mrf.mxu0
        %v6351 = vadd.f32 %v5848, %v6350
        %6352 = vdwg.mxu0
        %6353 = vmatprep.subr.bf16.mxu0 %v6166
        %6354 = vmatpush1.bf16.msra.mxu0 %v6165
        %6355 = vmatprep.subr.bf16.mxu0 %v6163
        %6356 = vmatpush1.bf16.msra.mxu0 %v6162
        %6357 = vmatprep.subr.bf16.mxu0 %v6160
        %6358 = vmatpush1.bf16.msra.mxu0 %v6159
        %6359 = vmatprep.subr.bf16.mxu0 %v6157
        %6360 = vmatpush1.bf16.msra.mxu0 %v6156
        %6361 = vmatprep.subr.bf16.mxu0 %v6154
        %6362 = vmatpush1.bf16.msra.mxu0 %v6153
        %6363 = vmatprep.subr.bf16.mxu0 %v6151
        %6364 = vmatpush1.bf16.msra.mxu0 %v6150
        %6365 = vmatprep.subr.bf16.mxu0 %v6148
        %6366 = vmatpush1.bf16.msra.mxu0 %v6147
        %6367 = vmatprep.subr.bf16.mxu0 %v6145
        %6368 = vmatpush1.bf16.msra.mxu0 %v6144
        %6369 = vmatprep.subr.bf16.mxu0 0
        %6370 = vmatpush2.bf16.msra.mxu0 0
        %6371 = vmatprep.subr.bf16.mxu0 0
        %6372 = vmatpush2.bf16.msra.mxu0 0
        %6373 = vmatprep.subr.bf16.mxu0 0
        %6374 = vmatpush2.bf16.msra.mxu0 0
        %6375 = vmatprep.subr.bf16.mxu0 0
        %6376 = vmatpush2.bf16.msra.mxu0 0
        %6377 = vmatprep.subr.bf16.mxu0 0
        %6378 = vmatpush2.bf16.msra.mxu0 0
        %6379 = vmatprep.subr.bf16.mxu0 0
        %6380 = vmatpush2.bf16.msra.mxu0 0
        %6381 = vmatprep.subr.bf16.mxu0 0
        %6382 = vmatpush2.bf16.msra.mxu0 0
        %6383 = vmatprep.subr.bf16.mxu0 0
        %6384 = vmatpush2.bf16.msra.mxu0 0
        %6385 = vmatprep.mubr.bf16.mxu0 0
        %6386 = vmatmul.mubr.bf16.gmra.mxu0 %v5713
        %v6387 = vpop.f32.mrf.mxu0
        %v6388 = vadd.f32 %v6275, %v6387
        %v6389 = vpop.f32.mrf.mxu0
        %v6390 = vadd.f32 %v6277, %v6389
        %v6391 = vpop.f32.mrf.mxu0
        %v6392 = vadd.f32 %v6279, %v6391
        %v6393 = vpop.f32.mrf.mxu0
        %v6394 = vadd.f32 %v6281, %v6393
        %6395 = vmatprep.mubr.bf16.mxu0 0
        %6396 = vmatmul.mubr.bf16.gmra.mxu0 %v5717
        %v6397 = vpop.f32.mrf.mxu0
        %v6398 = vadd.f32 %v6285, %v6397
        %v6399 = vpop.f32.mrf.mxu0
        %v6400 = vadd.f32 %v6287, %v6399
        %v6401 = vpop.f32.mrf.mxu0
        %v6402 = vadd.f32 %v6289, %v6401
        %v6403 = vpop.f32.mrf.mxu0
        %v6404 = vadd.f32 %v6291, %v6403
        %6405 = vmatprep.mubr.bf16.mxu0 0
        %6406 = vmatmul.mubr.bf16.gmra.mxu0 %v5721
        %v6407 = vpop.f32.mrf.mxu0
        %v6408 = vadd.f32 %v6295, %v6407
        %v6409 = vpop.f32.mrf.mxu0
        %v6410 = vadd.f32 %v6297, %v6409
        %v6411 = vpop.f32.mrf.mxu0
        %v6412 = vadd.f32 %v6299, %v6411
        %v6413 = vpop.f32.mrf.mxu0
        %v6414 = vadd.f32 %v6301, %v6413
        %6415 = vmatprep.mubr.bf16.mxu0 0
        %6416 = vmatmul.mubr.bf16.gmra.mxu0 %v5725
        %v6417 = vpop.f32.mrf.mxu0
        %v6418 = vadd.f32 %v6305, %v6417
        %v6419 = vpop.f32.mrf.mxu0
        %v6420 = vadd.f32 %v6307, %v6419
        %v6421 = vpop.f32.mrf.mxu0
        %v6422 = vadd.f32 %v6309, %v6421
        %v6423 = vpop.f32.mrf.mxu0
        %v6424 = vadd.f32 %v6311, %v6423
        %6425 = vmatprep.mubr.bf16.mxu0 0
        %6426 = vmatmul.mubr.bf16.gmra.mxu0 %v5729
        %v6427 = vpop.f32.mrf.mxu0
        %v6428 = vadd.f32 %v6315, %v6427
        %v6429 = vpop.f32.mrf.mxu0
        %v6430 = vadd.f32 %v6317, %v6429
        %v6431 = vpop.f32.mrf.mxu0
        %v6432 = vadd.f32 %v6319, %v6431
        %v6433 = vpop.f32.mrf.mxu0
        %v6434 = vadd.f32 %v6321, %v6433
        %6435 = vmatprep.mubr.bf16.mxu0 0
        %6436 = vmatmul.mubr.bf16.gmra.mxu0 %v5733
        %v6437 = vpop.f32.mrf.mxu0
        %v6438 = vadd.f32 %v6325, %v6437
        %v6439 = vpop.f32.mrf.mxu0
        %v6440 = vadd.f32 %v6327, %v6439
        %v6441 = vpop.f32.mrf.mxu0
        %v6442 = vadd.f32 %v6329, %v6441
        %v6443 = vpop.f32.mrf.mxu0
        %v6444 = vadd.f32 %v6331, %v6443
        %6445 = vmatprep.mubr.bf16.mxu0 0
        %6446 = vmatmul.mubr.bf16.gmra.mxu0 %v5737
        %v6447 = vpop.f32.mrf.mxu0
        %v6448 = vadd.f32 %v6335, %v6447
        %v6449 = vpop.f32.mrf.mxu0
        %v6450 = vadd.f32 %v6337, %v6449
        %v6451 = vpop.f32.mrf.mxu0
        %v6452 = vadd.f32 %v6339, %v6451
        %v6453 = vpop.f32.mrf.mxu0
        %v6454 = vadd.f32 %v6341, %v6453
        %6455 = vmatprep.mubr.bf16.mxu0 0
        %6456 = vmatmul.mubr.bf16.gmra.mxu0 %v5741
        %v6457 = vpop.f32.mrf.mxu0
        %v6458 = vadd.f32 %v6345, %v6457
        %v6459 = vpop.f32.mrf.mxu0
        %v6460 = vadd.f32 %v6347, %v6459
        %v6461 = vpop.f32.mrf.mxu0
        %v6462 = vadd.f32 %v6349, %v6461
        %v6463 = vpop.f32.mrf.mxu0
        %v6464 = vadd.f32 %v6351, %v6463
        %6465 = vdwg.mxu0
        %6466 = vmatprep.subr.bf16.mxu0 0
        %6467 = vmatpush1.bf16.msra.mxu0 %v6119
        %6468 = vmatprep.subr.bf16.mxu0 0
        %6469 = vmatpush1.bf16.msra.mxu0 %v6116
        %6470 = vmatprep.subr.bf16.mxu0 0
        %6471 = vmatpush1.bf16.msra.mxu0 %v6113
        %6472 = vmatprep.subr.bf16.mxu0 0
        %6473 = vmatpush1.bf16.msra.mxu0 %v6110
        %6474 = vmatprep.subr.bf16.mxu0 0
        %6475 = vmatpush1.bf16.msra.mxu0 %v6107
        %6476 = vmatprep.subr.bf16.mxu0 0
        %6477 = vmatpush1.bf16.msra.mxu0 %v6104
        %6478 = vmatprep.subr.bf16.mxu0 0
        %6479 = vmatpush1.bf16.msra.mxu0 %v6101
        %6480 = vmatprep.subr.bf16.mxu0 0
        %6481 = vmatpush1.bf16.msra.mxu0 %v6098
        %6482 = vmatprep.subr.bf16.mxu0 0
        %6483 = vmatpush2.bf16.msra.mxu0 %v6143
        %6484 = vmatprep.subr.bf16.mxu0 0
        %6485 = vmatpush2.bf16.msra.mxu0 %v6140
        %6486 = vmatprep.subr.bf16.mxu0 0
        %6487 = vmatpush2.bf16.msra.mxu0 %v6137
        %6488 = vmatprep.subr.bf16.mxu0 0
        %6489 = vmatpush2.bf16.msra.mxu0 %v6134
        %6490 = vmatprep.subr.bf16.mxu0 0
        %6491 = vmatpush2.bf16.msra.mxu0 %v6131
        %6492 = vmatprep.subr.bf16.mxu0 0
        %6493 = vmatpush2.bf16.msra.mxu0 %v6128
        %6494 = vmatprep.subr.bf16.mxu0 0
        %6495 = vmatpush2.bf16.msra.mxu0 %v6125
        %6496 = vmatprep.subr.bf16.mxu0 0
        %6497 = vmatpush2.bf16.msra.mxu0 %v6122
        %6498 = vmatprep.mubr.bf16.mxu0 %v5681
        %6499 = vmatmul.mubr.bf16.gmra.mxu0 %v5649
        %v6500 = vpop.f32.mrf.mxu0
        %v6501 = vadd.f32 %v5852, %v6500
        %v6502 = vpop.f32.mrf.mxu0
        %v6503 = vpop.f32.mrf.mxu0
        %v6504 = vadd.f32 %v5852, %v6503
        %v6505 = vpop.f32.mrf.mxu0
        %6506 = vmatprep.mubr.bf16.mxu0 %v5685
        %6507 = vmatmul.mubr.bf16.gmra.mxu0 %v5653
        %v6508 = vpop.f32.mrf.mxu0
        %v6509 = vadd.f32 %v5852, %v6508
        %v6510 = vpop.f32.mrf.mxu0
        %v6511 = vpop.f32.mrf.mxu0
        %v6512 = vadd.f32 %v5852, %v6511
        %v6513 = vpop.f32.mrf.mxu0
        %6514 = vmatprep.mubr.bf16.mxu0 %v5689
        %6515 = vmatmul.mubr.bf16.gmra.mxu0 %v5657
        %v6516 = vpop.f32.mrf.mxu0
        %v6517 = vadd.f32 %v5852, %v6516
        %v6518 = vpop.f32.mrf.mxu0
        %v6519 = vpop.f32.mrf.mxu0
        %v6520 = vadd.f32 %v5852, %v6519
        %v6521 = vpop.f32.mrf.mxu0
        %6522 = vmatprep.mubr.bf16.mxu0 %v5693
        %6523 = vmatmul.mubr.bf16.gmra.mxu0 %v5661
        %v6524 = vpop.f32.mrf.mxu0
        %v6525 = vadd.f32 %v5852, %v6524
        %v6526 = vpop.f32.mrf.mxu0
        %v6527 = vpop.f32.mrf.mxu0
        %v6528 = vadd.f32 %v5852, %v6527
        %v6529 = vpop.f32.mrf.mxu0
        %6530 = vmatprep.mubr.bf16.mxu0 %v5697
        %6531 = vmatmul.mubr.bf16.gmra.mxu0 %v5665
        %v6532 = vpop.f32.mrf.mxu0
        %v6533 = vadd.f32 %v5852, %v6532
        %v6534 = vpop.f32.mrf.mxu0
        %v6535 = vpop.f32.mrf.mxu0
        %v6536 = vadd.f32 %v5852, %v6535
        %v6537 = vpop.f32.mrf.mxu0
        %6538 = vmatprep.mubr.bf16.mxu0 %v5701
        %6539 = vmatmul.mubr.bf16.gmra.mxu0 %v5669
        %v6540 = vpop.f32.mrf.mxu0
        %v6541 = vadd.f32 %v5852, %v6540
        %v6542 = vpop.f32.mrf.mxu0
        %v6543 = vpop.f32.mrf.mxu0
        %v6544 = vadd.f32 %v5852, %v6543
        %v6545 = vpop.f32.mrf.mxu0
        %6546 = vmatprep.mubr.bf16.mxu0 %v5705
        %6547 = vmatmul.mubr.bf16.gmra.mxu0 %v5673
        %v6548 = vpop.f32.mrf.mxu0
        %v6549 = vadd.f32 %v5852, %v6548
        %v6550 = vpop.f32.mrf.mxu0
        %v6551 = vpop.f32.mrf.mxu0
        %v6552 = vadd.f32 %v5852, %v6551
        %v6553 = vpop.f32.mrf.mxu0
        %6554 = vmatprep.mubr.bf16.mxu0 %v5709
        %6555 = vmatmul.mubr.bf16.gmra.mxu0 %v5677
        %v6556 = vpop.f32.mrf.mxu0
        %v6557 = vadd.f32 %v5852, %v6556
        %v6558 = vpop.f32.mrf.mxu0
        %v6559 = vpop.f32.mrf.mxu0
        %v6560 = vadd.f32 %v5852, %v6559
        %v6561 = vpop.f32.mrf.mxu0
        %6562 = vdwg.mxu0
        %6563 = vmatprep.subr.bf16.mxu0 0
        %6564 = vmatpush1.bf16.msra.mxu0 %v6167
        %6565 = vmatprep.subr.bf16.mxu0 0
        %6566 = vmatpush1.bf16.msra.mxu0 %v6164
        %6567 = vmatprep.subr.bf16.mxu0 0
        %6568 = vmatpush1.bf16.msra.mxu0 %v6161
        %6569 = vmatprep.subr.bf16.mxu0 0
        %6570 = vmatpush1.bf16.msra.mxu0 %v6158
        %6571 = vmatprep.subr.bf16.mxu0 0
        %6572 = vmatpush1.bf16.msra.mxu0 %v6155
        %6573 = vmatprep.subr.bf16.mxu0 0
        %6574 = vmatpush1.bf16.msra.mxu0 %v6152
        %6575 = vmatprep.subr.bf16.mxu0 0
        %6576 = vmatpush1.bf16.msra.mxu0 %v6149
        %6577 = vmatprep.subr.bf16.mxu0 0
        %6578 = vmatpush1.bf16.msra.mxu0 %v6146
        %6579 = vmatprep.subr.bf16.mxu0 0
        %6580 = vmatpush2.bf16.msra.mxu0 0
        %6581 = vmatprep.subr.bf16.mxu0 0
        %6582 = vmatpush2.bf16.msra.mxu0 0
        %6583 = vmatprep.subr.bf16.mxu0 0
        %6584 = vmatpush2.bf16.msra.mxu0 0
        %6585 = vmatprep.subr.bf16.mxu0 0
        %6586 = vmatpush2.bf16.msra.mxu0 0
        %6587 = vmatprep.subr.bf16.mxu0 0
        %6588 = vmatpush2.bf16.msra.mxu0 0
        %6589 = vmatprep.subr.bf16.mxu0 0
        %6590 = vmatpush2.bf16.msra.mxu0 0
        %6591 = vmatprep.subr.bf16.mxu0 0
        %6592 = vmatpush2.bf16.msra.mxu0 0
        %6593 = vmatprep.subr.bf16.mxu0 0
        %6594 = vmatpush2.bf16.msra.mxu0 0
        %6595 = vmatprep.mubr.bf16.mxu0 0
        %6596 = vmatmul.mubr.bf16.gmra.mxu0 %v5713
        %v6597 = vpop.f32.mrf.mxu0
        %v6598 = vadd.f32 %v6501, %v6597
        %v6599 = vpop.f32.mrf.mxu0
        %v6600 = vpop.f32.mrf.mxu0
        %v6601 = vadd.f32 %v6504, %v6600
        %v6602 = vpop.f32.mrf.mxu0
        %6603 = vmatprep.mubr.bf16.mxu0 0
        %6604 = vmatmul.mubr.bf16.gmra.mxu0 %v5717
        %v6605 = vpop.f32.mrf.mxu0
        %v6606 = vadd.f32 %v6509, %v6605
        %v6607 = vpop.f32.mrf.mxu0
        %v6608 = vpop.f32.mrf.mxu0
        %v6609 = vadd.f32 %v6512, %v6608
        %v6610 = vpop.f32.mrf.mxu0
        %6611 = vmatprep.mubr.bf16.mxu0 0
        %6612 = vmatmul.mubr.bf16.gmra.mxu0 %v5721
        %v6613 = vpop.f32.mrf.mxu0
        %v6614 = vadd.f32 %v6517, %v6613
        %v6615 = vpop.f32.mrf.mxu0
        %v6616 = vpop.f32.mrf.mxu0
        %v6617 = vadd.f32 %v6520, %v6616
        %v6618 = vpop.f32.mrf.mxu0
        %6619 = vmatprep.mubr.bf16.mxu0 0
        %6620 = vmatmul.mubr.bf16.gmra.mxu0 %v5725
        %v6621 = vpop.f32.mrf.mxu0
        %v6622 = vadd.f32 %v6525, %v6621
        %v6623 = vpop.f32.mrf.mxu0
        %v6624 = vpop.f32.mrf.mxu0
        %v6625 = vadd.f32 %v6528, %v6624
        %v6626 = vpop.f32.mrf.mxu0
        %6627 = vmatprep.mubr.bf16.mxu0 0
        %6628 = vmatmul.mubr.bf16.gmra.mxu0 %v5729
        %v6629 = vpop.f32.mrf.mxu0
        %v6630 = vadd.f32 %v6533, %v6629
        %v6631 = vpop.f32.mrf.mxu0
        %v6632 = vpop.f32.mrf.mxu0
        %v6633 = vadd.f32 %v6536, %v6632
        %v6634 = vpop.f32.mrf.mxu0
        %6635 = vmatprep.mubr.bf16.mxu0 0
        %6636 = vmatmul.mubr.bf16.gmra.mxu0 %v5733
        %v6637 = vpop.f32.mrf.mxu0
        %v6638 = vadd.f32 %v6541, %v6637
        %v6639 = vpop.f32.mrf.mxu0
        %v6640 = vpop.f32.mrf.mxu0
        %v6641 = vadd.f32 %v6544, %v6640
        %v6642 = vpop.f32.mrf.mxu0
        %6643 = vmatprep.mubr.bf16.mxu0 0
        %6644 = vmatmul.mubr.bf16.gmra.mxu0 %v5737
        %v6645 = vpop.f32.mrf.mxu0
        %v6646 = vadd.f32 %v6549, %v6645
        %v6647 = vpop.f32.mrf.mxu0
        %v6648 = vpop.f32.mrf.mxu0
        %v6649 = vadd.f32 %v6552, %v6648
        %v6650 = vpop.f32.mrf.mxu0
        %6651 = vmatprep.mubr.bf16.mxu0 0
        %6652 = vmatmul.mubr.bf16.gmra.mxu0 %v5741
        %v6653 = vpop.f32.mrf.mxu0
        %v6654 = vadd.f32 %v6557, %v6653
        %v6655 = vpop.f32.mrf.mxu0
        %v6656 = vpop.f32.mrf.mxu0
        %v6657 = vadd.f32 %v6560, %v6656
        %v6658 = vpop.f32.mrf.mxu0
        %6659 = vdwg.mxu0
        %6660 = vst [vmem:[%s190] sm:$0xff] %v6388
        %6661 = vst [vmem:[%s190 + $0x8] sm:$0xff] %v6390
        %6662 = vst [vmem:[%s190 + $0x10] sm:$0xff] %v6598
        %6663 = vst [vmem:[%s190 + $0x18] sm:$0xff] %v6392
        %6664 = vst [vmem:[%s190 + $0x20] sm:$0xff] %v6394
        %6665 = vst [vmem:[%s190 + $0x28] sm:$0xff] %v6601
        %6666 = vst [vmem:[%s190 + $0x30] sm:$0xff] %v6398
        %6667 = vst [vmem:[%s190 + $0x38] sm:$0xff] %v6400
        %6668 = vst [vmem:[%s190 + $0x40] sm:$0xff] %v6606
        %6669 = vst [vmem:[%s190 + $0x48] sm:$0xff] %v6402
        %6670 = vst [vmem:[%s190 + $0x50] sm:$0xff] %v6404
        %6671 = vst [vmem:[%s190 + $0x58] sm:$0xff] %v6609
        %6672 = vst [vmem:[%s190 + $0x60] sm:$0xff] %v6408
        %6673 = vst [vmem:[%s190 + $0x68] sm:$0xff] %v6410
        %6674 = vst [vmem:[%s190 + $0x70] sm:$0xff] %v6614
        %6675 = vst [vmem:[%s190 + $0x78] sm:$0xff] %v6412
        %6676 = vst [vmem:[%s190 + $0x80] sm:$0xff] %v6414
        %6677 = vst [vmem:[%s190 + $0x88] sm:$0xff] %v6617
        %6678 = vst [vmem:[%s190 + $0x90] sm:$0xff] %v6418
        %6679 = vst [vmem:[%s190 + $0x98] sm:$0xff] %v6420
        %6680 = vst [vmem:[%s190 + $0xa0] sm:$0xff] %v6622
        %6681 = vst [vmem:[%s190 + $0xa8] sm:$0xff] %v6422
        %6682 = vst [vmem:[%s190 + $0xb0] sm:$0xff] %v6424
        %6683 = vst [vmem:[%s190 + $0xb8] sm:$0xff] %v6625
        %6684 = vst [vmem:[%s190 + $0xc0] sm:$0xff] %v6428
        %6685 = vst [vmem:[%s190 + $0xc8] sm:$0xff] %v6430
        %6686 = vst [vmem:[%s190 + $0xd0] sm:$0xff] %v6630
        %6687 = vst [vmem:[%s190 + $0xd8] sm:$0xff] %v6432
        %6688 = vst [vmem:[%s190 + $0xe0] sm:$0xff] %v6434
        %6689 = vst [vmem:[%s190 + $0xe8] sm:$0xff] %v6633
        %6690 = vst [vmem:[%s190 + $0xf0] sm:$0xff] %v6438
        %6691 = vst [vmem:[%s190 + $0xf8] sm:$0xff] %v6440
        %6692 = vst [vmem:[%s190 + $0x100] sm:$0xff] %v6638
        %6693 = vst [vmem:[%s190 + $0x108] sm:$0xff] %v6442
        %6694 = vst [vmem:[%s190 + $0x110] sm:$0xff] %v6444
        %6695 = vst [vmem:[%s190 + $0x118] sm:$0xff] %v6641
        %6696 = vst [vmem:[%s190 + $0x120] sm:$0xff] %v6448
        %6697 = vst [vmem:[%s190 + $0x128] sm:$0xff] %v6450
        %6698 = vst [vmem:[%s190 + $0x130] sm:$0xff] %v6646
        %6699 = vst [vmem:[%s190 + $0x138] sm:$0xff] %v6452
        %6700 = vst [vmem:[%s190 + $0x140] sm:$0xff] %v6454
        %6701 = vst [vmem:[%s190 + $0x148] sm:$0xff] %v6649
        %6702 = vst [vmem:[%s190 + $0x150] sm:$0xff] %v6458
        %6703 = vst [vmem:[%s190 + $0x158] sm:$0xff] %v6460
        %6704 = vst [vmem:[%s190 + $0x160] sm:$0xff] %v6654
        %6705 = vst [vmem:[%s190 + $0x168] sm:$0xff] %v6462
        %6706 = vst [vmem:[%s190 + $0x170] sm:$0xff] %v6464
        %6707 = vst [vmem:[%s190 + $0x178] sm:$0xff] %v6657
        %s6708 = sand.u32 %s115, 1
        %s6709 = scalar_lea.sflag [#allocation3], %s6708
        %s6710 = sand.u32 %s115, 1
        %s6711 = smul.addr %s6710, 384
        %s6712 = scalar_lea.vmem [#allocation2], %s6711
        // Predicated region
        $region37: #{multihead_attention_forward.1} parent=35 // pred_check
          %p6713 = pneg %p125
        $region38: #{multihead_attention_forward.1} parent=35 // pred_check_branch
          %6715 = sbr.rel (%p6713) target = $region40
        $region39: #{multihead_attention_forward.1} parent=35 // pred_region
          %s6717 = ssub.s32 6144, 6144
          %6718 = vsyncadd %s6709, %s6717
          %s6719 = smul.addr %s18, 48
          %s6720 = smul.addr %s6719, 128
          %s6721 = scalar_lea.hbm %s4, %s6720
          %s6722 = sshll.u32 %s6712, 4
          %s6723 = int_to_ptr.vmem [resolvable:$true] %s6722
          %6728 = dma.vmem_to_hbm [thread:$0]  %s6723, 6144, %s6721, %s6709, 384, 384, 24
        $region40: #{multihead_attention_forward.1} parent=35 // pred_fallthru
          _
      $region36: #{multihead_attention_forward.1} parent=5 // pred_fallthru
        _
      %p6729 = scmp.le.s32.totalorder 2, %s13
      // Predicated region
      $region41: #{multihead_attention_forward.1} parent=5 // pred_check
        %p6730 = pneg %p6729
      $region42: #{multihead_attention_forward.1} parent=5 // pred_check_branch
        %6732 = sbr.rel (%p6730) target = $region44
      $region43: #{multihead_attention_forward.1} parent=5 // pred_region
        %s6733 = ssub.s32 %s13, 2
        // Predicated region
        $region45: #{multihead_attention_forward.1} parent=43 // pred_check
          %p6734 = pneg %p131
        $region46: #{multihead_attention_forward.1} parent=43 // pred_check_branch
          %6736 = sbr.rel (%p6734) target = $region48
        $region47: #{multihead_attention_forward.1} parent=43 // pred_region
          %s6737 = sand.u32 %s116, 1
          %s6738 = scalar_lea.sflag [#allocation3], %s6737
          %s6739 = sand.u32 %s116, 1
          %s6740 = smul.addr %s6739, 384
          %s6741 = scalar_lea.vmem [#allocation2], %s6740
          %6742 = dma.done %s6738, 6144
        $region48: #{multihead_attention_forward.1} parent=43 // pred_fallthru
          _
      $region44: #{multihead_attention_forward.1} parent=5 // pred_fallthru
        _
    $region6: #{multihead_attention_forward.1} parent=1 // loop_footer
      %s17 = sadd.s32 1, %s13
    $region7: #{multihead_attention_forward.1} parent=1 // loop_footer_branch
      %12 = sbr.rel target = $region3
    $region8: #{multihead_attention_forward.1} parent=1 // loop_exit
      _
    %6743 = vsyncpa [#allocation3], 1
    %s6744 = scalar_lea.sflag [#allocation3], 1
    %6745 = vsyncpa %s6744, 1

</llo_original>
